<compile_context>
chip_gen: v5e
topology: v5e:2x2
jax: 0.10.0
libtpu: 0.0.40
codegen_flags: <defaults>
</compile_context>

<pallas_src>
import jax
import jax.numpy as jnp
from jax.experimental import pallas as pl
from jax.experimental.pallas import tpu as pltpu


def bigru_kernel(x2_ref, len_ref,
                 wif_ref, whf_ref, bf_ref,
                 wib_ref, whb_ref, bb_ref,
                 out_ref, hid_ref):
    """Fused bidirectional GRU recurrence.

    x2_ref : (T*B, Hp)  embedded tokens, time-major rows (row = t*B + b)
    len_ref: (B, 1)     int32 sequence lengths
    w*_ref : (3, Hp, Hp) per-gate weights (r, z, n), laid out (in, out)
    b*_ref : (4, 1, Hp) biases: [b_r(ih+hh), b_z(ih+hh), b_ih_n, b_hh_n]
    out_ref: (T, B, Hp) summed fwd+bwd outputs
    hid_ref: (2, B, Hp) final hidden states (fwd, bwd)
    """
    T, B, Hp = out_ref.shape
    f32 = jnp.float32

    x2 = x2_ref[...]                       # (T*B, Hp)
    lens = len_ref[...]                    # (B, 1) int32, hoisted out of loop

    # ---- hoisted input-side projections: one large matmul per gate/direction
    # (removes 2*T tiny matmuls from the serial dependency chain).
    def in_proj(wi_ref, b_ref):
        gi_r = jnp.dot(x2, wi_ref[0], preferred_element_type=f32) + b_ref[0]
        gi_z = jnp.dot(x2, wi_ref[1], preferred_element_type=f32) + b_ref[1]
        gi_n = jnp.dot(x2, wi_ref[2], preferred_element_type=f32) + b_ref[2]
        return gi_r, gi_z, gi_n

    gif_r, gif_z, gif_n = in_proj(wif_ref, bf_ref)
    gib_r, gib_z, gib_n = in_proj(wib_ref, bb_ref)

    # ---- hoisted recurrent weights / n-gate recurrent bias (constant over T)
    whf_r, whf_z, whf_n, bhf_n = whf_ref[0], whf_ref[1], whf_ref[2], bf_ref[3]
    whb_r, whb_z, whb_n, bhb_n = whb_ref[0], whb_ref[1], whb_ref[2], bb_ref[3]

    def step(h, gi_r, gi_z, gi_n, wh_r, wh_z, wh_n, bh_n, m):
        gh_r = jnp.dot(h, wh_r, preferred_element_type=f32)
        gh_z = jnp.dot(h, wh_z, preferred_element_type=f32)
        gh_n = jnp.dot(h, wh_n, preferred_element_type=f32) + bh_n
        r = jax.nn.sigmoid(gi_r + gh_r)
        z = jax.nn.sigmoid(gi_z + gh_z)
        n = jnp.tanh(gi_n + r * gh_n)
        h_new = n + z * (h - n)            # == (1-z)*n + z*h
        h_next = jnp.where(m, h_new, h)    # freeze hidden past sequence end
        y = jnp.where(m, h_new, 0.0)       # padded positions emit zeros
        return h_next, y

    h_f = jnp.zeros((B, Hp), f32)
    h_b = jnp.zeros((B, Hp), f32)
    ys_f = [None] * T
    ys_b = [None] * T

    # Fused fwd+bwd recurrence, fully unrolled (T is small & static); the two
    # independent h-chains give the MXU interleavable work each iteration.
    # TODO(synk): for large T switch to lax.fori_loop(unroll=k) with in-loop
    #             out_ref accumulation to bound live ranges / compile time.
    for i in range(T):
        tf, tb = i, T - 1 - i
        m_f = tf < lens                    # (B, 1) bool
        m_b = tb < lens
        h_f, y_f = step(h_f,
                        gif_r[tf * B:(tf + 1) * B],
                        gif_z[tf * B:(tf + 1) * B],
                        gif_n[tf * B:(tf + 1) * B],
                        whf_r, whf_z, whf_n, bhf_n, m_f)
        h_b, y_b = step(h_b,
                        gib_r[tb * B:(tb + 1) * B],
                        gib_z[tb * B:(tb + 1) * B],
                        gib_n[tb * B:(tb + 1) * B],
                        whb_r, whb_z, whb_n, bhb_n, m_b)
        ys_f[tf] = y_f
        ys_b[tb] = y_b

    # Lane-dense epilogue stores (Hp is a multiple of 128 -> unmasked lanes).
    for t in range(T):
        out_ref[t] = ys_f[t] + ys_b[t]
    hid_ref[0] = h_f
    hid_ref[1] = h_b


def _pack_direction(wi, wh, bi, bh, H, Hp):
    """torch layout (3H, H)/(3H,), gate order r,z,n -> stacked, transposed, lane-padded."""
    padw = ((0, 0), (0, Hp - H), (0, Hp - H))
    wi_t = jnp.pad(jnp.transpose(wi.reshape(3, H, H), (0, 2, 1)), padw)   # (3, Hp, Hp)
    wh_t = jnp.pad(jnp.transpose(wh.reshape(3, H, H), (0, 2, 1)), padw)   # (3, Hp, Hp)
    bi_g = bi.reshape(3, H)
    bh_g = bh.reshape(3, H)
    b = jnp.stack([bi_g[0] + bh_g[0],      # r-gate bias (pre-combined)
                   bi_g[1] + bh_g[1],      # z-gate bias (pre-combined)
                   bi_g[2],                # n-gate input bias
                   bh_g[2]])               # n-gate recurrent bias (scaled by r)
    b = jnp.pad(b, ((0, 0), (0, Hp - H)))[:, None, :]                      # (4, 1, Hp)
    return wi_t, wh_t, b


def encoder_rnn_forward(params, input_seqs, input_lengths):
    """input_seqs: (T, B) int32 token ids; input_lengths: (B,) int32 (sorted desc)."""
    emb = params["embedding"]                      # (V, H)
    T, B = input_seqs.shape
    H = emb.shape[1]
    Hp = ((H + 127) // 128) * 128                  # lane-pad hidden dim

    # Embedding gather stays in XLA (data-dependent gather; no clean BlockSpec
    # expression — would need manual DMA gather for no benefit at this size).
    embedded = jnp.take(emb, input_seqs, axis=0).astype(jnp.float32)       # (T, B, H)
    x2 = jnp.pad(embedded.reshape(T * B, H), ((0, 0), (0, Hp - H)))        # (T*B, Hp)
    lens = input_lengths.astype(jnp.int32).reshape(B, 1)

    wi_f, wh_f, b_f = _pack_direction(params["w_ih_f"], params["w_hh_f"],
                                      params["b_ih_f"], params["b_hh_f"], H, Hp)
    wi_b, wh_b, b_b = _pack_direction(params["w_ih_b"], params["w_hh_b"],
                                      params["b_ih_b"], params["b_hh_b"], H, Hp)

    vmem = pl.BlockSpec(memory_space=pltpu.MemorySpace.VMEM)
    out_p, hid_p = pl.pallas_call(
        bigru_kernel,
        out_shape=(jax.ShapeDtypeStruct((T, B, Hp), jnp.float32),
                   jax.ShapeDtypeStruct((2, B, Hp), jnp.float32)),
        in_specs=[vmem] * 8,
        out_specs=(vmem, vmem),
        compiler_params=pltpu.CompilerParams(vmem_limit_bytes=48 * 1024 * 1024),
    )(x2, lens, wi_f, wh_f, b_f, wi_b, wh_b, b_b)

    # TODO(synk): for production sizes, tile the batch over a parallel grid
    #             (v7x megacore) and feed bf16 activations/weights to the MXU.
    return out_p[..., :H], hid_p[..., :H]


def init_params(key, vocab_size, hidden_size):
    H = hidden_size
    kE, *ks = jax.random.split(key, 9)
    emb = jax.random.normal(kE, (vocab_size, H), jnp.float32)
    emb = emb.at[1].set(0.0)                               # padding_idx=1
    bound = 1.0 / float(jnp.sqrt(H))

    def u(kk, shape):
        return jax.random.uniform(kk, shape, jnp.float32, -bound, bound)

    return dict(
        embedding=emb,
        w_ih_f=u(ks[0], (3 * H, H)), w_hh_f=u(ks[1], (3 * H, H)),
        b_ih_f=u(ks[2], (3 * H,)),   b_hh_f=u(ks[3], (3 * H,)),
        w_ih_b=u(ks[4], (3 * H, H)), w_hh_b=u(ks[5], (3 * H, H)),
        b_ih_b=u(ks[6], (3 * H,)),   b_hh_b=u(ks[7], (3 * H,)),
    )


def reference_forward(params, input_seqs, input_lengths):
    """Pure-JAX reference mirroring torch packed bidirectional GRU."""
    emb = params["embedding"]
    T, B = input_seqs.shape
    H = emb.shape[1]
    x = jnp.take(emb, input_seqs, axis=0)
    mask = (jnp.arange(T)[:, None] < input_lengths[None, :]
            ).astype(jnp.float32)[..., None]

    def cell(x_t, h, wi, wh, bi, bh):
        gi = x_t @ wi.T + bi
        gh = h @ wh.T + bh
        r = jax.nn.sigmoid(gi[:, :H] + gh[:, :H])
        z = jax.nn.sigmoid(gi[:, H:2 * H] + gh[:, H:2 * H])
        n = jnp.tanh(gi[:, 2 * H:] + r * gh[:, 2 * H:])
        return (1 - z) * n + z * h

    def run(ts, wi, wh, bi, bh):
        h = jnp.zeros((B, H), jnp.float32)
        ys = {}
        for t in ts:
            h_new = cell(x[t], h, wi, wh, bi, bh)
            m = mask[t]
            h = m * h_new + (1 - m) * h
            ys[t] = m * h_new
        return h, ys

    h_f, ys_f = run(range(T), params["w_ih_f"], params["w_hh_f"],
                    params["b_ih_f"], params["b_hh_f"])
    h_b, ys_b = run(range(T - 1, -1, -1), params["w_ih_b"], params["w_hh_b"],
                    params["b_ih_b"], params["b_hh_b"])
    out = jnp.stack([ys_f[t] + ys_b[t] for t in range(T)])
    hid = jnp.stack([h_f, h_b])
    return out, hid


if __name__ == "__main__":
    vocab, H, T, B = 20, 32, 8, 2
    key = jax.random.PRNGKey(0)
    pkey, skey = jax.random.split(key)
    params = init_params(pkey, vocab, H)

    # lengths sorted descending (pack_padded_sequence enforce_sorted=True)
    input_lengths = jnp.array([8, 5], dtype=jnp.int32)
    seqs = jax.random.randint(skey, (T, B), 0, vocab, dtype=jnp.int32)
    pad = jnp.arange(T)[:, None] >= input_lengths[None, :]
    input_seqs = jnp.where(pad, 1, seqs)                   # pad token id = 1

    run = jax.jit(encoder_rnn_forward)
    outputs, hidden = jax.block_until_ready(run(params, input_seqs, input_lengths))

    ref_out, ref_hid = reference_forward(params, input_seqs, input_lengths)
    assert outputs.shape == (T, B, H) and hidden.shape == (2, B, H)
    assert jnp.allclose(outputs, ref_out, atol=1e-5, rtol=1e-5)
    assert jnp.allclose(hidden, ref_hid, atol=1e-5, rtol=1e-5)
    print("KERNEL_OK")
</pallas_src>

<mosaic_0001>
module attributes {stable_mosaic.version = 11 : i64} {
  func.func @bigru_kernel(%arg0: memref<16x128xf32, #tpu.memory_space<vmem>>, %arg1: memref<2x1xi32, #tpu.memory_space<vmem>>, %arg2: memref<3x128x128xf32, #tpu.memory_space<vmem>>, %arg3: memref<3x128x128xf32, #tpu.memory_space<vmem>>, %arg4: memref<4x1x128xf32, #tpu.memory_space<vmem>>, %arg5: memref<3x128x128xf32, #tpu.memory_space<vmem>>, %arg6: memref<3x128x128xf32, #tpu.memory_space<vmem>>, %arg7: memref<4x1x128xf32, #tpu.memory_space<vmem>>, %arg8: memref<8x2x128xf32, #tpu.memory_space<vmem>>, %arg9: memref<2x2x128xf32, #tpu.memory_space<vmem>>) attributes {dimension_semantics = [], scalar_prefetch = 0 : i64, scratch_operands = 0 : i64, tpu.core_type = #tpu.core_type<tc>} {
    %c0 = arith.constant 0 : index
    %c0_0 = arith.constant 0 : index
    %0 = vector.load %arg0[%c0, %c0_0] : memref<16x128xf32, #tpu.memory_space<vmem>>, vector<16x128xf32>
    %c0_1 = arith.constant 0 : index
    %c0_2 = arith.constant 0 : index
    %1 = vector.load %arg1[%c0_1, %c0_2] : memref<2x1xi32, #tpu.memory_space<vmem>>, vector<2x1xi32>
    %c0_3 = arith.constant 0 : index
    %c0_4 = arith.constant 0 : index
    %c0_5 = arith.constant 0 : index
    %2 = vector.load %arg2[%c0_3, %c0_4, %c0_5] : memref<3x128x128xf32, #tpu.memory_space<vmem>>, vector<1x128x128xf32>
    %3 = vector.shape_cast %2 : vector<1x128x128xf32> to vector<128x128xf32>
    %cst = arith.constant dense<0.000000e+00> : vector<16x128xf32>
    %4 = tpu.matmul %0, %3, %cst {dimension_numbers = #tpu.dot_dimension_numbers<[1], [0], [0], [1], [0, 0, 1, 1], [], []>} : vector<16x128xf32>, vector<128x128xf32>, vector<16x128xf32> -> vector<16x128xf32>
    %c0_6 = arith.constant 0 : index
    %c0_7 = arith.constant 0 : index
    %c0_8 = arith.constant 0 : index
    %5 = vector.load %arg4[%c0_6, %c0_7, %c0_8] : memref<4x1x128xf32, #tpu.memory_space<vmem>>, vector<1x1x128xf32>
    %6 = vector.shape_cast %5 : vector<1x1x128xf32> to vector<1x128xf32>
    %7 = vector.broadcast %6 : vector<1x128xf32> to vector<16x128xf32>
    %8 = arith.addf %4, %7 : vector<16x128xf32>
    %c1 = arith.constant 1 : index
    %c0_9 = arith.constant 0 : index
    %c0_10 = arith.constant 0 : index
    %9 = vector.load %arg2[%c1, %c0_9, %c0_10] : memref<3x128x128xf32, #tpu.memory_space<vmem>>, vector<1x128x128xf32>
    %10 = vector.shape_cast %9 : vector<1x128x128xf32> to vector<128x128xf32>
    %cst_11 = arith.constant dense<0.000000e+00> : vector<16x128xf32>
    %11 = tpu.matmul %0, %10, %cst_11 {dimension_numbers = #tpu.dot_dimension_numbers<[1], [0], [0], [1], [0, 0, 1, 1], [], []>} : vector<16x128xf32>, vector<128x128xf32>, vector<16x128xf32> -> vector<16x128xf32>
    %c1_12 = arith.constant 1 : index
    %c0_13 = arith.constant 0 : index
    %c0_14 = arith.constant 0 : index
    %12 = vector.load %arg4[%c1_12, %c0_13, %c0_14] : memref<4x1x128xf32, #tpu.memory_space<vmem>>, vector<1x1x128xf32>
    %13 = vector.shape_cast %12 : vector<1x1x128xf32> to vector<1x128xf32>
    %14 = vector.broadcast %13 : vector<1x128xf32> to vector<16x128xf32>
    %15 = arith.addf %11, %14 : vector<16x128xf32>
    %c2 = arith.constant 2 : index
    %c0_15 = arith.constant 0 : index
    %c0_16 = arith.constant 0 : index
    %16 = vector.load %arg2[%c2, %c0_15, %c0_16] : memref<3x128x128xf32, #tpu.memory_space<vmem>>, vector<1x128x128xf32>
    %17 = vector.shape_cast %16 : vector<1x128x128xf32> to vector<128x128xf32>
    %cst_17 = arith.constant dense<0.000000e+00> : vector<16x128xf32>
    %18 = tpu.matmul %0, %17, %cst_17 {dimension_numbers = #tpu.dot_dimension_numbers<[1], [0], [0], [1], [0, 0, 1, 1], [], []>} : vector<16x128xf32>, vector<128x128xf32>, vector<16x128xf32> -> vector<16x128xf32>
    %c2_18 = arith.constant 2 : index
    %c0_19 = arith.constant 0 : index
    %c0_20 = arith.constant 0 : index
    %19 = vector.load %arg4[%c2_18, %c0_19, %c0_20] : memref<4x1x128xf32, #tpu.memory_space<vmem>>, vector<1x1x128xf32>
    %20 = vector.shape_cast %19 : vector<1x1x128xf32> to vector<1x128xf32>
    %21 = vector.broadcast %20 : vector<1x128xf32> to vector<16x128xf32>
    %22 = arith.addf %18, %21 : vector<16x128xf32>
    %c0_21 = arith.constant 0 : index
    %c0_22 = arith.constant 0 : index
    %c0_23 = arith.constant 0 : index
    %23 = vector.load %arg5[%c0_21, %c0_22, %c0_23] : memref<3x128x128xf32, #tpu.memory_space<vmem>>, vector<1x128x128xf32>
    %24 = vector.shape_cast %23 : vector<1x128x128xf32> to vector<128x128xf32>
    %cst_24 = arith.constant dense<0.000000e+00> : vector<16x128xf32>
    %25 = tpu.matmul %0, %24, %cst_24 {dimension_numbers = #tpu.dot_dimension_numbers<[1], [0], [0], [1], [0, 0, 1, 1], [], []>} : vector<16x128xf32>, vector<128x128xf32>, vector<16x128xf32> -> vector<16x128xf32>
    %c0_25 = arith.constant 0 : index
    %c0_26 = arith.constant 0 : index
    %c0_27 = arith.constant 0 : index
    %26 = vector.load %arg7[%c0_25, %c0_26, %c0_27] : memref<4x1x128xf32, #tpu.memory_space<vmem>>, vector<1x1x128xf32>
    %27 = vector.shape_cast %26 : vector<1x1x128xf32> to vector<1x128xf32>
    %28 = vector.broadcast %27 : vector<1x128xf32> to vector<16x128xf32>
    %29 = arith.addf %25, %28 : vector<16x128xf32>
    %c1_28 = arith.constant 1 : index
    %c0_29 = arith.constant 0 : index
    %c0_30 = arith.constant 0 : index
    %30 = vector.load %arg5[%c1_28, %c0_29, %c0_30] : memref<3x128x128xf32, #tpu.memory_space<vmem>>, vector<1x128x128xf32>
    %31 = vector.shape_cast %30 : vector<1x128x128xf32> to vector<128x128xf32>
    %cst_31 = arith.constant dense<0.000000e+00> : vector<16x128xf32>
    %32 = tpu.matmul %0, %31, %cst_31 {dimension_numbers = #tpu.dot_dimension_numbers<[1], [0], [0], [1], [0, 0, 1, 1], [], []>} : vector<16x128xf32>, vector<128x128xf32>, vector<16x128xf32> -> vector<16x128xf32>
    %c1_32 = arith.constant 1 : index
    %c0_33 = arith.constant 0 : index
    %c0_34 = arith.constant 0 : index
    %33 = vector.load %arg7[%c1_32, %c0_33, %c0_34] : memref<4x1x128xf32, #tpu.memory_space<vmem>>, vector<1x1x128xf32>
    %34 = vector.shape_cast %33 : vector<1x1x128xf32> to vector<1x128xf32>
    %35 = vector.broadcast %34 : vector<1x128xf32> to vector<16x128xf32>
    %36 = arith.addf %32, %35 : vector<16x128xf32>
    %c2_35 = arith.constant 2 : index
    %c0_36 = arith.constant 0 : index
    %c0_37 = arith.constant 0 : index
    %37 = vector.load %arg5[%c2_35, %c0_36, %c0_37] : memref<3x128x128xf32, #tpu.memory_space<vmem>>, vector<1x128x128xf32>
    %38 = vector.shape_cast %37 : vector<1x128x128xf32> to vector<128x128xf32>
    %cst_38 = arith.constant dense<0.000000e+00> : vector<16x128xf32>
    %39 = tpu.matmul %0, %38, %cst_38 {dimension_numbers = #tpu.dot_dimension_numbers<[1], [0], [0], [1], [0, 0, 1, 1], [], []>} : vector<16x128xf32>, vector<128x128xf32>, vector<16x128xf32> -> vector<16x128xf32>
    %c2_39 = arith.constant 2 : index
    %c0_40 = arith.constant 0 : index
    %c0_41 = arith.constant 0 : index
    %40 = vector.load %arg7[%c2_39, %c0_40, %c0_41] : memref<4x1x128xf32, #tpu.memory_space<vmem>>, vector<1x1x128xf32>
    %41 = vector.shape_cast %40 : vector<1x1x128xf32> to vector<1x128xf32>
    %42 = vector.broadcast %41 : vector<1x128xf32> to vector<16x128xf32>
    %43 = arith.addf %39, %42 : vector<16x128xf32>
    %c0_42 = arith.constant 0 : index
    %c0_43 = arith.constant 0 : index
    %c0_44 = arith.constant 0 : index
    %44 = vector.load %arg3[%c0_42, %c0_43, %c0_44] : memref<3x128x128xf32, #tpu.memory_space<vmem>>, vector<1x128x128xf32>
    %45 = vector.shape_cast %44 : vector<1x128x128xf32> to vector<128x128xf32>
    %c1_45 = arith.constant 1 : index
    %c0_46 = arith.constant 0 : index
    %c0_47 = arith.constant 0 : index
    %46 = vector.load %arg3[%c1_45, %c0_46, %c0_47] : memref<3x128x128xf32, #tpu.memory_space<vmem>>, vector<1x128x128xf32>
    %47 = vector.shape_cast %46 : vector<1x128x128xf32> to vector<128x128xf32>
    %c2_48 = arith.constant 2 : index
    %c0_49 = arith.constant 0 : index
    %c0_50 = arith.constant 0 : index
    %48 = vector.load %arg3[%c2_48, %c0_49, %c0_50] : memref<3x128x128xf32, #tpu.memory_space<vmem>>, vector<1x128x128xf32>
    %49 = vector.shape_cast %48 : vector<1x128x128xf32> to vector<128x128xf32>
    %c3 = arith.constant 3 : index
    %c0_51 = arith.constant 0 : index
    %c0_52 = arith.constant 0 : index
    %50 = vector.load %arg4[%c3, %c0_51, %c0_52] : memref<4x1x128xf32, #tpu.memory_space<vmem>>, vector<1x1x128xf32>
    %51 = vector.shape_cast %50 : vector<1x1x128xf32> to vector<1x128xf32>
    %c0_53 = arith.constant 0 : index
    %c0_54 = arith.constant 0 : index
    %c0_55 = arith.constant 0 : index
    %52 = vector.load %arg6[%c0_53, %c0_54, %c0_55] : memref<3x128x128xf32, #tpu.memory_space<vmem>>, vector<1x128x128xf32>
    %53 = vector.shape_cast %52 : vector<1x128x128xf32> to vector<128x128xf32>
    %c1_56 = arith.constant 1 : index
    %c0_57 = arith.constant 0 : index
    %c0_58 = arith.constant 0 : index
    %54 = vector.load %arg6[%c1_56, %c0_57, %c0_58] : memref<3x128x128xf32, #tpu.memory_space<vmem>>, vector<1x128x128xf32>
    %55 = vector.shape_cast %54 : vector<1x128x128xf32> to vector<128x128xf32>
    %c2_59 = arith.constant 2 : index
    %c0_60 = arith.constant 0 : index
    %c0_61 = arith.constant 0 : index
    %56 = vector.load %arg6[%c2_59, %c0_60, %c0_61] : memref<3x128x128xf32, #tpu.memory_space<vmem>>, vector<1x128x128xf32>
    %57 = vector.shape_cast %56 : vector<1x128x128xf32> to vector<128x128xf32>
    %c3_62 = arith.constant 3 : index
    %c0_63 = arith.constant 0 : index
    %c0_64 = arith.constant 0 : index
    %58 = vector.load %arg7[%c3_62, %c0_63, %c0_64] : memref<4x1x128xf32, #tpu.memory_space<vmem>>, vector<1x1x128xf32>
    %59 = vector.shape_cast %58 : vector<1x1x128xf32> to vector<1x128xf32>
    %cst_65 = arith.constant 0.000000e+00 : f32
    %60 = vector.broadcast %cst_65 : f32 to vector<2x128xf32>
    %cst_66 = arith.constant 0.000000e+00 : f32
    %61 = vector.broadcast %cst_66 : f32 to vector<2x128xf32>
    %c0_i32 = arith.constant 0 : i32
    %62 = vector.broadcast %c0_i32 : i32 to vector<2x1xi32>
    %63 = arith.cmpi sgt, %1, %62 : vector<2x1xi32>
    %c7_i32 = arith.constant 7 : i32
    %64 = vector.broadcast %c7_i32 : i32 to vector<2x1xi32>
    %65 = arith.cmpi sgt, %1, %64 : vector<2x1xi32>
    %66 = vector.extract_strided_slice %8 {offsets = [0, 0], sizes = [2, 128], strides = [1, 1]} : vector<16x128xf32> to vector<2x128xf32>
    %67 = vector.extract_strided_slice %15 {offsets = [0, 0], sizes = [2, 128], strides = [1, 1]} : vector<16x128xf32> to vector<2x128xf32>
    %68 = vector.extract_strided_slice %22 {offsets = [0, 0], sizes = [2, 128], strides = [1, 1]} : vector<16x128xf32> to vector<2x128xf32>
    %cst_67 = arith.constant dense<0.000000e+00> : vector<2x128xf32>
    %69 = tpu.matmul %60, %45, %cst_67 {dimension_numbers = #tpu.dot_dimension_numbers<[1], [0], [0], [1], [0, 0, 1, 1], [], []>} : vector<2x128xf32>, vector<128x128xf32>, vector<2x128xf32> -> vector<2x128xf32>
    %cst_68 = arith.constant dense<0.000000e+00> : vector<2x128xf32>
    %70 = tpu.matmul %60, %47, %cst_68 {dimension_numbers = #tpu.dot_dimension_numbers<[1], [0], [0], [1], [0, 0, 1, 1], [], []>} : vector<2x128xf32>, vector<128x128xf32>, vector<2x128xf32> -> vector<2x128xf32>
    %cst_69 = arith.constant dense<0.000000e+00> : vector<2x128xf32>
    %71 = tpu.matmul %60, %49, %cst_69 {dimension_numbers = #tpu.dot_dimension_numbers<[1], [0], [0], [1], [0, 0, 1, 1], [], []>} : vector<2x128xf32>, vector<128x128xf32>, vector<2x128xf32> -> vector<2x128xf32>
    %72 = vector.broadcast %51 : vector<1x128xf32> to vector<2x128xf32>
    %73 = arith.addf %71, %72 : vector<2x128xf32>
    %74 = arith.addf %66, %69 : vector<2x128xf32>
    %75 = arith.negf %74 : vector<2x128xf32>
    %76 = math.exp %75 : vector<2x128xf32>
    %cst_70 = arith.constant 1.000000e+00 : f32
    %77 = vector.broadcast %cst_70 : f32 to vector<2x128xf32>
    %78 = arith.addf %77, %76 : vector<2x128xf32>
    %79 = arith.divf %77, %78 : vector<2x128xf32>
    %80 = arith.addf %67, %70 : vector<2x128xf32>
    %81 = arith.negf %80 : vector<2x128xf32>
    %82 = math.exp %81 : vector<2x128xf32>
    %cst_71 = arith.constant 1.000000e+00 : f32
    %83 = vector.broadcast %cst_71 : f32 to vector<2x128xf32>
    %84 = arith.addf %83, %82 : vector<2x128xf32>
    %85 = arith.divf %83, %84 : vector<2x128xf32>
    %86 = arith.mulf %79, %73 : vector<2x128xf32>
    %87 = arith.addf %68, %86 : vector<2x128xf32>
    %88 = math.tanh %87 : vector<2x128xf32>
    %89 = arith.subf %60, %88 : vector<2x128xf32>
    %90 = arith.mulf %85, %89 : vector<2x128xf32>
    %91 = arith.addf %88, %90 : vector<2x128xf32>
    %92 = vector.shape_cast %63 : vector<2x1xi1> to vector<2x1xi1>
    %93 = vector.broadcast %92 : vector<2x1xi1> to vector<2x128xi1>
    %94 = arith.select %93, %91, %60 : vector<2x128xi1>, vector<2x128xf32>
    %cst_72 = arith.constant 0.000000e+00 : f32
    %95 = vector.shape_cast %63 : vector<2x1xi1> to vector<2x1xi1>
    %96 = vector.broadcast %95 : vector<2x1xi1> to vector<2x128xi1>
    %97 = vector.broadcast %cst_72 : f32 to vector<2x128xf32>
    %98 = arith.select %96, %91, %97 : vector<2x128xi1>, vector<2x128xf32>
    %99 = vector.extract_strided_slice %29 {offsets = [14, 0], sizes = [2, 128], strides = [1, 1]} : vector<16x128xf32> to vector<2x128xf32>
    %100 = vector.extract_strided_slice %36 {offsets = [14, 0], sizes = [2, 128], strides = [1, 1]} : vector<16x128xf32> to vector<2x128xf32>
    %101 = vector.extract_strided_slice %43 {offsets = [14, 0], sizes = [2, 128], strides = [1, 1]} : vector<16x128xf32> to vector<2x128xf32>
    %cst_73 = arith.constant dense<0.000000e+00> : vector<2x128xf32>
    %102 = tpu.matmul %61, %53, %cst_73 {dimension_numbers = #tpu.dot_dimension_numbers<[1], [0], [0], [1], [0, 0, 1, 1], [], []>} : vector<2x128xf32>, vector<128x128xf32>, vector<2x128xf32> -> vector<2x128xf32>
    %cst_74 = arith.constant dense<0.000000e+00> : vector<2x128xf32>
    %103 = tpu.matmul %61, %55, %cst_74 {dimension_numbers = #tpu.dot_dimension_numbers<[1], [0], [0], [1], [0, 0, 1, 1], [], []>} : vector<2x128xf32>, vector<128x128xf32>, vector<2x128xf32> -> vector<2x128xf32>
    %cst_75 = arith.constant dense<0.000000e+00> : vector<2x128xf32>
    %104 = tpu.matmul %61, %57, %cst_75 {dimension_numbers = #tpu.dot_dimension_numbers<[1], [0], [0], [1], [0, 0, 1, 1], [], []>} : vector<2x128xf32>, vector<128x128xf32>, vector<2x128xf32> -> vector<2x128xf32>
    %105 = vector.broadcast %59 : vector<1x128xf32> to vector<2x128xf32>
    %106 = arith.addf %104, %105 : vector<2x128xf32>
    %107 = arith.addf %99, %102 : vector<2x128xf32>
    %108 = arith.negf %107 : vector<2x128xf32>
    %109 = math.exp %108 : vector<2x128xf32>
    %cst_76 = arith.constant 1.000000e+00 : f32
    %110 = vector.broadcast %cst_76 : f32 to vector<2x128xf32>
    %111 = arith.addf %110, %109 : vector<2x128xf32>
    %112 = arith.divf %110, %111 : vector<2x128xf32>
    %113 = arith.addf %100, %103 : vector<2x128xf32>
    %114 = arith.negf %113 : vector<2x128xf32>
    %115 = math.exp %114 : vector<2x128xf32>
    %cst_77 = arith.constant 1.000000e+00 : f32
    %116 = vector.broadcast %cst_77 : f32 to vector<2x128xf32>
    %117 = arith.addf %116, %115 : vector<2x128xf32>
    %118 = arith.divf %116, %117 : vector<2x128xf32>
    %119 = arith.mulf %112, %106 : vector<2x128xf32>
    %120 = arith.addf %101, %119 : vector<2x128xf32>
    %121 = math.tanh %120 : vector<2x128xf32>
    %122 = arith.subf %61, %121 : vector<2x128xf32>
    %123 = arith.mulf %118, %122 : vector<2x128xf32>
    %124 = arith.addf %121, %123 : vector<2x128xf32>
    %125 = vector.shape_cast %65 : vector<2x1xi1> to vector<2x1xi1>
    %126 = vector.broadcast %125 : vector<2x1xi1> to vector<2x128xi1>
    %127 = arith.select %126, %124, %61 : vector<2x128xi1>, vector<2x128xf32>
    %cst_78 = arith.constant 0.000000e+00 : f32
    %128 = vector.shape_cast %65 : vector<2x1xi1> to vector<2x1xi1>
    %129 = vector.broadcast %128 : vector<2x1xi1> to vector<2x128xi1>
    %130 = vector.broadcast %cst_78 : f32 to vector<2x128xf32>
    %131 = arith.select %129, %124, %130 : vector<2x128xi1>, vector<2x128xf32>
    %c1_i32 = arith.constant 1 : i32
    %132 = vector.broadcast %c1_i32 : i32 to vector<2x1xi32>
    %133 = arith.cmpi sgt, %1, %132 : vector<2x1xi32>
    %c6_i32 = arith.constant 6 : i32
    %134 = vector.broadcast %c6_i32 : i32 to vector<2x1xi32>
    %135 = arith.cmpi sgt, %1, %134 : vector<2x1xi32>
    %136 = vector.extract_strided_slice %8 {offsets = [2, 0], sizes = [2, 128], strides = [1, 1]} : vector<16x128xf32> to vector<2x128xf32>
    %137 = vector.extract_strided_slice %15 {offsets = [2, 0], sizes = [2, 128], strides = [1, 1]} : vector<16x128xf32> to vector<2x128xf32>
    %138 = vector.extract_strided_slice %22 {offsets = [2, 0], sizes = [2, 128], strides = [1, 1]} : vector<16x128xf32> to vector<2x128xf32>
    %cst_79 = arith.constant dense<0.000000e+00> : vector<2x128xf32>
    %139 = tpu.matmul %94, %45, %cst_79 {dimension_numbers = #tpu.dot_dimension_numbers<[1], [0], [0], [1], [0, 0, 1, 1], [], []>} : vector<2x128xf32>, vector<128x128xf32>, vector<2x128xf32> -> vector<2x128xf32>
    %cst_80 = arith.constant dense<0.000000e+00> : vector<2x128xf32>
    %140 = tpu.matmul %94, %47, %cst_80 {dimension_numbers = #tpu.dot_dimension_numbers<[1], [0], [0], [1], [0, 0, 1, 1], [], []>} : vector<2x128xf32>, vector<128x128xf32>, vector<2x128xf32> -> vector<2x128xf32>
    %cst_81 = arith.constant dense<0.000000e+00> : vector<2x128xf32>
    %141 = tpu.matmul %94, %49, %cst_81 {dimension_numbers = #tpu.dot_dimension_numbers<[1], [0], [0], [1], [0, 0, 1, 1], [], []>} : vector<2x128xf32>, vector<128x128xf32>, vector<2x128xf32> -> vector<2x128xf32>
    %142 = vector.broadcast %51 : vector<1x128xf32> to vector<2x128xf32>
    %143 = arith.addf %141, %142 : vector<2x128xf32>
    %144 = arith.addf %136, %139 : vector<2x128xf32>
    %145 = arith.negf %144 : vector<2x128xf32>
    %146 = math.exp %145 : vector<2x128xf32>
    %cst_82 = arith.constant 1.000000e+00 : f32
    %147 = vector.broadcast %cst_82 : f32 to vector<2x128xf32>
    %148 = arith.addf %147, %146 : vector<2x128xf32>
    %149 = arith.divf %147, %148 : vector<2x128xf32>
    %150 = arith.addf %137, %140 : vector<2x128xf32>
    %151 = arith.negf %150 : vector<2x128xf32>
    %152 = math.exp %151 : vector<2x128xf32>
    %cst_83 = arith.constant 1.000000e+00 : f32
    %153 = vector.broadcast %cst_83 : f32 to vector<2x128xf32>
    %154 = arith.addf %153, %152 : vector<2x128xf32>
    %155 = arith.divf %153, %154 : vector<2x128xf32>
    %156 = arith.mulf %149, %143 : vector<2x128xf32>
    %157 = arith.addf %138, %156 : vector<2x128xf32>
    %158 = math.tanh %157 : vector<2x128xf32>
    %159 = arith.subf %94, %158 : vector<2x128xf32>
    %160 = arith.mulf %155, %159 : vector<2x128xf32>
    %161 = arith.addf %158, %160 : vector<2x128xf32>
    %162 = vector.shape_cast %133 : vector<2x1xi1> to vector<2x1xi1>
    %163 = vector.broadcast %162 : vector<2x1xi1> to vector<2x128xi1>
    %164 = arith.select %163, %161, %94 : vector<2x128xi1>, vector<2x128xf32>
    %cst_84 = arith.constant 0.000000e+00 : f32
    %165 = vector.shape_cast %133 : vector<2x1xi1> to vector<2x1xi1>
    %166 = vector.broadcast %165 : vector<2x1xi1> to vector<2x128xi1>
    %167 = vector.broadcast %cst_84 : f32 to vector<2x128xf32>
    %168 = arith.select %166, %161, %167 : vector<2x128xi1>, vector<2x128xf32>
    %169 = vector.extract_strided_slice %29 {offsets = [12, 0], sizes = [2, 128], strides = [1, 1]} : vector<16x128xf32> to vector<2x128xf32>
    %170 = vector.extract_strided_slice %36 {offsets = [12, 0], sizes = [2, 128], strides = [1, 1]} : vector<16x128xf32> to vector<2x128xf32>
    %171 = vector.extract_strided_slice %43 {offsets = [12, 0], sizes = [2, 128], strides = [1, 1]} : vector<16x128xf32> to vector<2x128xf32>
    %cst_85 = arith.constant dense<0.000000e+00> : vector<2x128xf32>
    %172 = tpu.matmul %127, %53, %cst_85 {dimension_numbers = #tpu.dot_dimension_numbers<[1], [0], [0], [1], [0, 0, 1, 1], [], []>} : vector<2x128xf32>, vector<128x128xf32>, vector<2x128xf32> -> vector<2x128xf32>
    %cst_86 = arith.constant dense<0.000000e+00> : vector<2x128xf32>
    %173 = tpu.matmul %127, %55, %cst_86 {dimension_numbers = #tpu.dot_dimension_numbers<[1], [0], [0], [1], [0, 0, 1, 1], [], []>} : vector<2x128xf32>, vector<128x128xf32>, vector<2x128xf32> -> vector<2x128xf32>
    %cst_87 = arith.constant dense<0.000000e+00> : vector<2x128xf32>
    %174 = tpu.matmul %127, %57, %cst_87 {dimension_numbers = #tpu.dot_dimension_numbers<[1], [0], [0], [1], [0, 0, 1, 1], [], []>} : vector<2x128xf32>, vector<128x128xf32>, vector<2x128xf32> -> vector<2x128xf32>
    %175 = vector.broadcast %59 : vector<1x128xf32> to vector<2x128xf32>
    %176 = arith.addf %174, %175 : vector<2x128xf32>
    %177 = arith.addf %169, %172 : vector<2x128xf32>
    %178 = arith.negf %177 : vector<2x128xf32>
    %179 = math.exp %178 : vector<2x128xf32>
    %cst_88 = arith.constant 1.000000e+00 : f32
    %180 = vector.broadcast %cst_88 : f32 to vector<2x128xf32>
    %181 = arith.addf %180, %179 : vector<2x128xf32>
    %182 = arith.divf %180, %181 : vector<2x128xf32>
    %183 = arith.addf %170, %173 : vector<2x128xf32>
    %184 = arith.negf %183 : vector<2x128xf32>
    %185 = math.exp %184 : vector<2x128xf32>
    %cst_89 = arith.constant 1.000000e+00 : f32
    %186 = vector.broadcast %cst_89 : f32 to vector<2x128xf32>
    %187 = arith.addf %186, %185 : vector<2x128xf32>
    %188 = arith.divf %186, %187 : vector<2x128xf32>
    %189 = arith.mulf %182, %176 : vector<2x128xf32>
    %190 = arith.addf %171, %189 : vector<2x128xf32>
    %191 = math.tanh %190 : vector<2x128xf32>
    %192 = arith.subf %127, %191 : vector<2x128xf32>
    %193 = arith.mulf %188, %192 : vector<2x128xf32>
    %194 = arith.addf %191, %193 : vector<2x128xf32>
    %195 = vector.shape_cast %135 : vector<2x1xi1> to vector<2x1xi1>
    %196 = vector.broadcast %195 : vector<2x1xi1> to vector<2x128xi1>
    %197 = arith.select %196, %194, %127 : vector<2x128xi1>, vector<2x128xf32>
    %cst_90 = arith.constant 0.000000e+00 : f32
    %198 = vector.shape_cast %135 : vector<2x1xi1> to vector<2x1xi1>
    %199 = vector.broadcast %198 : vector<2x1xi1> to vector<2x128xi1>
    %200 = vector.broadcast %cst_90 : f32 to vector<2x128xf32>
    %201 = arith.select %199, %194, %200 : vector<2x128xi1>, vector<2x128xf32>
    %c2_i32 = arith.constant 2 : i32
    %202 = vector.broadcast %c2_i32 : i32 to vector<2x1xi32>
    %203 = arith.cmpi sgt, %1, %202 : vector<2x1xi32>
    %c5_i32 = arith.constant 5 : i32
    %204 = vector.broadcast %c5_i32 : i32 to vector<2x1xi32>
    %205 = arith.cmpi sgt, %1, %204 : vector<2x1xi32>
    %206 = vector.extract_strided_slice %8 {offsets = [4, 0], sizes = [2, 128], strides = [1, 1]} : vector<16x128xf32> to vector<2x128xf32>
    %207 = vector.extract_strided_slice %15 {offsets = [4, 0], sizes = [2, 128], strides = [1, 1]} : vector<16x128xf32> to vector<2x128xf32>
    %208 = vector.extract_strided_slice %22 {offsets = [4, 0], sizes = [2, 128], strides = [1, 1]} : vector<16x128xf32> to vector<2x128xf32>
    %cst_91 = arith.constant dense<0.000000e+00> : vector<2x128xf32>
    %209 = tpu.matmul %164, %45, %cst_91 {dimension_numbers = #tpu.dot_dimension_numbers<[1], [0], [0], [1], [0, 0, 1, 1], [], []>} : vector<2x128xf32>, vector<128x128xf32>, vector<2x128xf32> -> vector<2x128xf32>
    %cst_92 = arith.constant dense<0.000000e+00> : vector<2x128xf32>
    %210 = tpu.matmul %164, %47, %cst_92 {dimension_numbers = #tpu.dot_dimension_numbers<[1], [0], [0], [1], [0, 0, 1, 1], [], []>} : vector<2x128xf32>, vector<128x128xf32>, vector<2x128xf32> -> vector<2x128xf32>
    %cst_93 = arith.constant dense<0.000000e+00> : vector<2x128xf32>
    %211 = tpu.matmul %164, %49, %cst_93 {dimension_numbers = #tpu.dot_dimension_numbers<[1], [0], [0], [1], [0, 0, 1, 1], [], []>} : vector<2x128xf32>, vector<128x128xf32>, vector<2x128xf32> -> vector<2x128xf32>
    %212 = vector.broadcast %51 : vector<1x128xf32> to vector<2x128xf32>
    %213 = arith.addf %211, %212 : vector<2x128xf32>
    %214 = arith.addf %206, %209 : vector<2x128xf32>
    %215 = arith.negf %214 : vector<2x128xf32>
    %216 = math.exp %215 : vector<2x128xf32>
    %cst_94 = arith.constant 1.000000e+00 : f32
    %217 = vector.broadcast %cst_94 : f32 to vector<2x128xf32>
    %218 = arith.addf %217, %216 : vector<2x128xf32>
    %219 = arith.divf %217, %218 : vector<2x128xf32>
    %220 = arith.addf %207, %210 : vector<2x128xf32>
    %221 = arith.negf %220 : vector<2x128xf32>
    %222 = math.exp %221 : vector<2x128xf32>
    %cst_95 = arith.constant 1.000000e+00 : f32
    %223 = vector.broadcast %cst_95 : f32 to vector<2x128xf32>
    %224 = arith.addf %223, %222 : vector<2x128xf32>
    %225 = arith.divf %223, %224 : vector<2x128xf32>
    %226 = arith.mulf %219, %213 : vector<2x128xf32>
    %227 = arith.addf %208, %226 : vector<2x128xf32>
    %228 = math.tanh %227 : vector<2x128xf32>
    %229 = arith.subf %164, %228 : vector<2x128xf32>
    %230 = arith.mulf %225, %229 : vector<2x128xf32>
    %231 = arith.addf %228, %230 : vector<2x128xf32>
    %232 = vector.shape_cast %203 : vector<2x1xi1> to vector<2x1xi1>
    %233 = vector.broadcast %232 : vector<2x1xi1> to vector<2x128xi1>
    %234 = arith.select %233, %231, %164 : vector<2x128xi1>, vector<2x128xf32>
    %cst_96 = arith.constant 0.000000e+00 : f32
    %235 = vector.shape_cast %203 : vector<2x1xi1> to vector<2x1xi1>
    %236 = vector.broadcast %235 : vector<2x1xi1> to vector<2x128xi1>
    %237 = vector.broadcast %cst_96 : f32 to vector<2x128xf32>
    %238 = arith.select %236, %231, %237 : vector<2x128xi1>, vector<2x128xf32>
    %239 = vector.extract_strided_slice %29 {offsets = [10, 0], sizes = [2, 128], strides = [1, 1]} : vector<16x128xf32> to vector<2x128xf32>
    %240 = vector.extract_strided_slice %36 {offsets = [10, 0], sizes = [2, 128], strides = [1, 1]} : vector<16x128xf32> to vector<2x128xf32>
    %241 = vector.extract_strided_slice %43 {offsets = [10, 0], sizes = [2, 128], strides = [1, 1]} : vector<16x128xf32> to vector<2x128xf32>
    %cst_97 = arith.constant dense<0.000000e+00> : vector<2x128xf32>
    %242 = tpu.matmul %197, %53, %cst_97 {dimension_numbers = #tpu.dot_dimension_numbers<[1], [0], [0], [1], [0, 0, 1, 1], [], []>} : vector<2x128xf32>, vector<128x128xf32>, vector<2x128xf32> -> vector<2x128xf32>
    %cst_98 = arith.constant dense<0.000000e+00> : vector<2x128xf32>
    %243 = tpu.matmul %197, %55, %cst_98 {dimension_numbers = #tpu.dot_dimension_numbers<[1], [0], [0], [1], [0, 0, 1, 1], [], []>} : vector<2x128xf32>, vector<128x128xf32>, vector<2x128xf32> -> vector<2x128xf32>
    %cst_99 = arith.constant dense<0.000000e+00> : vector<2x128xf32>
    %244 = tpu.matmul %197, %57, %cst_99 {dimension_numbers = #tpu.dot_dimension_numbers<[1], [0], [0], [1], [0, 0, 1, 1], [], []>} : vector<2x128xf32>, vector<128x128xf32>, vector<2x128xf32> -> vector<2x128xf32>
    %245 = vector.broadcast %59 : vector<1x128xf32> to vector<2x128xf32>
    %246 = arith.addf %244, %245 : vector<2x128xf32>
    %247 = arith.addf %239, %242 : vector<2x128xf32>
    %248 = arith.negf %247 : vector<2x128xf32>
    %249 = math.exp %248 : vector<2x128xf32>
    %cst_100 = arith.constant 1.000000e+00 : f32
    %250 = vector.broadcast %cst_100 : f32 to vector<2x128xf32>
    %251 = arith.addf %250, %249 : vector<2x128xf32>
    %252 = arith.divf %250, %251 : vector<2x128xf32>
    %253 = arith.addf %240, %243 : vector<2x128xf32>
    %254 = arith.negf %253 : vector<2x128xf32>
    %255 = math.exp %254 : vector<2x128xf32>
    %cst_101 = arith.constant 1.000000e+00 : f32
    %256 = vector.broadcast %cst_101 : f32 to vector<2x128xf32>
    %257 = arith.addf %256, %255 : vector<2x128xf32>
    %258 = arith.divf %256, %257 : vector<2x128xf32>
    %259 = arith.mulf %252, %246 : vector<2x128xf32>
    %260 = arith.addf %241, %259 : vector<2x128xf32>
    %261 = math.tanh %260 : vector<2x128xf32>
    %262 = arith.subf %197, %261 : vector<2x128xf32>
    %263 = arith.mulf %258, %262 : vector<2x128xf32>
    %264 = arith.addf %261, %263 : vector<2x128xf32>
    %265 = vector.shape_cast %205 : vector<2x1xi1> to vector<2x1xi1>
    %266 = vector.broadcast %265 : vector<2x1xi1> to vector<2x128xi1>
    %267 = arith.select %266, %264, %197 : vector<2x128xi1>, vector<2x128xf32>
    %cst_102 = arith.constant 0.000000e+00 : f32
    %268 = vector.shape_cast %205 : vector<2x1xi1> to vector<2x1xi1>
    %269 = vector.broadcast %268 : vector<2x1xi1> to vector<2x128xi1>
    %270 = vector.broadcast %cst_102 : f32 to vector<2x128xf32>
    %271 = arith.select %269, %264, %270 : vector<2x128xi1>, vector<2x128xf32>
    %c3_i32 = arith.constant 3 : i32
    %272 = vector.broadcast %c3_i32 : i32 to vector<2x1xi32>
    %273 = arith.cmpi sgt, %1, %272 : vector<2x1xi32>
    %c4_i32 = arith.constant 4 : i32
    %274 = vector.broadcast %c4_i32 : i32 to vector<2x1xi32>
    %275 = arith.cmpi sgt, %1, %274 : vector<2x1xi32>
    %276 = vector.extract_strided_slice %8 {offsets = [6, 0], sizes = [2, 128], strides = [1, 1]} : vector<16x128xf32> to vector<2x128xf32>
    %277 = vector.extract_strided_slice %15 {offsets = [6, 0], sizes = [2, 128], strides = [1, 1]} : vector<16x128xf32> to vector<2x128xf32>
    %278 = vector.extract_strided_slice %22 {offsets = [6, 0], sizes = [2, 128], strides = [1, 1]} : vector<16x128xf32> to vector<2x128xf32>
    %cst_103 = arith.constant dense<0.000000e+00> : vector<2x128xf32>
    %279 = tpu.matmul %234, %45, %cst_103 {dimension_numbers = #tpu.dot_dimension_numbers<[1], [0], [0], [1], [0, 0, 1, 1], [], []>} : vector<2x128xf32>, vector<128x128xf32>, vector<2x128xf32> -> vector<2x128xf32>
    %cst_104 = arith.constant dense<0.000000e+00> : vector<2x128xf32>
    %280 = tpu.matmul %234, %47, %cst_104 {dimension_numbers = #tpu.dot_dimension_numbers<[1], [0], [0], [1], [0, 0, 1, 1], [], []>} : vector<2x128xf32>, vector<128x128xf32>, vector<2x128xf32> -> vector<2x128xf32>
    %cst_105 = arith.constant dense<0.000000e+00> : vector<2x128xf32>
    %281 = tpu.matmul %234, %49, %cst_105 {dimension_numbers = #tpu.dot_dimension_numbers<[1], [0], [0], [1], [0, 0, 1, 1], [], []>} : vector<2x128xf32>, vector<128x128xf32>, vector<2x128xf32> -> vector<2x128xf32>
    %282 = vector.broadcast %51 : vector<1x128xf32> to vector<2x128xf32>
    %283 = arith.addf %281, %282 : vector<2x128xf32>
    %284 = arith.addf %276, %279 : vector<2x128xf32>
    %285 = arith.negf %284 : vector<2x128xf32>
    %286 = math.exp %285 : vector<2x128xf32>
    %cst_106 = arith.constant 1.000000e+00 : f32
    %287 = vector.broadcast %cst_106 : f32 to vector<2x128xf32>
    %288 = arith.addf %287, %286 : vector<2x128xf32>
    %289 = arith.divf %287, %288 : vector<2x128xf32>
    %290 = arith.addf %277, %280 : vector<2x128xf32>
    %291 = arith.negf %290 : vector<2x128xf32>
    %292 = math.exp %291 : vector<2x128xf32>
    %cst_107 = arith.constant 1.000000e+00 : f32
    %293 = vector.broadcast %cst_107 : f32 to vector<2x128xf32>
    %294 = arith.addf %293, %292 : vector<2x128xf32>
    %295 = arith.divf %293, %294 : vector<2x128xf32>
    %296 = arith.mulf %289, %283 : vector<2x128xf32>
    %297 = arith.addf %278, %296 : vector<2x128xf32>
    %298 = math.tanh %297 : vector<2x128xf32>
    %299 = arith.subf %234, %298 : vector<2x128xf32>
    %300 = arith.mulf %295, %299 : vector<2x128xf32>
    %301 = arith.addf %298, %300 : vector<2x128xf32>
    %302 = vector.shape_cast %273 : vector<2x1xi1> to vector<2x1xi1>
    %303 = vector.broadcast %302 : vector<2x1xi1> to vector<2x128xi1>
    %304 = arith.select %303, %301, %234 : vector<2x128xi1>, vector<2x128xf32>
    %cst_108 = arith.constant 0.000000e+00 : f32
    %305 = vector.shape_cast %273 : vector<2x1xi1> to vector<2x1xi1>
    %306 = vector.broadcast %305 : vector<2x1xi1> to vector<2x128xi1>
    %307 = vector.broadcast %cst_108 : f32 to vector<2x128xf32>
    %308 = arith.select %306, %301, %307 : vector<2x128xi1>, vector<2x128xf32>
    %309 = vector.extract_strided_slice %29 {offsets = [8, 0], sizes = [2, 128], strides = [1, 1]} : vector<16x128xf32> to vector<2x128xf32>
    %310 = vector.extract_strided_slice %36 {offsets = [8, 0], sizes = [2, 128], strides = [1, 1]} : vector<16x128xf32> to vector<2x128xf32>
    %311 = vector.extract_strided_slice %43 {offsets = [8, 0], sizes = [2, 128], strides = [1, 1]} : vector<16x128xf32> to vector<2x128xf32>
    %cst_109 = arith.constant dense<0.000000e+00> : vector<2x128xf32>
    %312 = tpu.matmul %267, %53, %cst_109 {dimension_numbers = #tpu.dot_dimension_numbers<[1], [0], [0], [1], [0, 0, 1, 1], [], []>} : vector<2x128xf32>, vector<128x128xf32>, vector<2x128xf32> -> vector<2x128xf32>
    %cst_110 = arith.constant dense<0.000000e+00> : vector<2x128xf32>
    %313 = tpu.matmul %267, %55, %cst_110 {dimension_numbers = #tpu.dot_dimension_numbers<[1], [0], [0], [1], [0, 0, 1, 1], [], []>} : vector<2x128xf32>, vector<128x128xf32>, vector<2x128xf32> -> vector<2x128xf32>
    %cst_111 = arith.constant dense<0.000000e+00> : vector<2x128xf32>
    %314 = tpu.matmul %267, %57, %cst_111 {dimension_numbers = #tpu.dot_dimension_numbers<[1], [0], [0], [1], [0, 0, 1, 1], [], []>} : vector<2x128xf32>, vector<128x128xf32>, vector<2x128xf32> -> vector<2x128xf32>
    %315 = vector.broadcast %59 : vector<1x128xf32> to vector<2x128xf32>
    %316 = arith.addf %314, %315 : vector<2x128xf32>
    %317 = arith.addf %309, %312 : vector<2x128xf32>
    %318 = arith.negf %317 : vector<2x128xf32>
    %319 = math.exp %318 : vector<2x128xf32>
    %cst_112 = arith.constant 1.000000e+00 : f32
    %320 = vector.broadcast %cst_112 : f32 to vector<2x128xf32>
    %321 = arith.addf %320, %319 : vector<2x128xf32>
    %322 = arith.divf %320, %321 : vector<2x128xf32>
    %323 = arith.addf %310, %313 : vector<2x128xf32>
    %324 = arith.negf %323 : vector<2x128xf32>
    %325 = math.exp %324 : vector<2x128xf32>
    %cst_113 = arith.constant 1.000000e+00 : f32
    %326 = vector.broadcast %cst_113 : f32 to vector<2x128xf32>
    %327 = arith.addf %326, %325 : vector<2x128xf32>
    %328 = arith.divf %326, %327 : vector<2x128xf32>
    %329 = arith.mulf %322, %316 : vector<2x128xf32>
    %330 = arith.addf %311, %329 : vector<2x128xf32>
    %331 = math.tanh %330 : vector<2x128xf32>
    %332 = arith.subf %267, %331 : vector<2x128xf32>
    %333 = arith.mulf %328, %332 : vector<2x128xf32>
    %334 = arith.addf %331, %333 : vector<2x128xf32>
    %335 = vector.shape_cast %275 : vector<2x1xi1> to vector<2x1xi1>
    %336 = vector.broadcast %335 : vector<2x1xi1> to vector<2x128xi1>
    %337 = arith.select %336, %334, %267 : vector<2x128xi1>, vector<2x128xf32>
    %cst_114 = arith.constant 0.000000e+00 : f32
    %338 = vector.shape_cast %275 : vector<2x1xi1> to vector<2x1xi1>
    %339 = vector.broadcast %338 : vector<2x1xi1> to vector<2x128xi1>
    %340 = vector.broadcast %cst_114 : f32 to vector<2x128xf32>
    %341 = arith.select %339, %334, %340 : vector<2x128xi1>, vector<2x128xf32>
    %c4_i32_115 = arith.constant 4 : i32
    %342 = vector.broadcast %c4_i32_115 : i32 to vector<2x1xi32>
    %343 = arith.cmpi sgt, %1, %342 : vector<2x1xi32>
    %c3_i32_116 = arith.constant 3 : i32
    %344 = vector.broadcast %c3_i32_116 : i32 to vector<2x1xi32>
    %345 = arith.cmpi sgt, %1, %344 : vector<2x1xi32>
    %346 = vector.extract_strided_slice %8 {offsets = [8, 0], sizes = [2, 128], strides = [1, 1]} : vector<16x128xf32> to vector<2x128xf32>
    %347 = vector.extract_strided_slice %15 {offsets = [8, 0], sizes = [2, 128], strides = [1, 1]} : vector<16x128xf32> to vector<2x128xf32>
    %348 = vector.extract_strided_slice %22 {offsets = [8, 0], sizes = [2, 128], strides = [1, 1]} : vector<16x128xf32> to vector<2x128xf32>
    %cst_117 = arith.constant dense<0.000000e+00> : vector<2x128xf32>
    %349 = tpu.matmul %304, %45, %cst_117 {dimension_numbers = #tpu.dot_dimension_numbers<[1], [0], [0], [1], [0, 0, 1, 1], [], []>} : vector<2x128xf32>, vector<128x128xf32>, vector<2x128xf32> -> vector<2x128xf32>
    %cst_118 = arith.constant dense<0.000000e+00> : vector<2x128xf32>
    %350 = tpu.matmul %304, %47, %cst_118 {dimension_numbers = #tpu.dot_dimension_numbers<[1], [0], [0], [1], [0, 0, 1, 1], [], []>} : vector<2x128xf32>, vector<128x128xf32>, vector<2x128xf32> -> vector<2x128xf32>
    %cst_119 = arith.constant dense<0.000000e+00> : vector<2x128xf32>
    %351 = tpu.matmul %304, %49, %cst_119 {dimension_numbers = #tpu.dot_dimension_numbers<[1], [0], [0], [1], [0, 0, 1, 1], [], []>} : vector<2x128xf32>, vector<128x128xf32>, vector<2x128xf32> -> vector<2x128xf32>
    %352 = vector.broadcast %51 : vector<1x128xf32> to vector<2x128xf32>
    %353 = arith.addf %351, %352 : vector<2x128xf32>
    %354 = arith.addf %346, %349 : vector<2x128xf32>
    %355 = arith.negf %354 : vector<2x128xf32>
    %356 = math.exp %355 : vector<2x128xf32>
    %cst_120 = arith.constant 1.000000e+00 : f32
    %357 = vector.broadcast %cst_120 : f32 to vector<2x128xf32>
    %358 = arith.addf %357, %356 : vector<2x128xf32>
    %359 = arith.divf %357, %358 : vector<2x128xf32>
    %360 = arith.addf %347, %350 : vector<2x128xf32>
    %361 = arith.negf %360 : vector<2x128xf32>
    %362 = math.exp %361 : vector<2x128xf32>
    %cst_121 = arith.constant 1.000000e+00 : f32
    %363 = vector.broadcast %cst_121 : f32 to vector<2x128xf32>
    %364 = arith.addf %363, %362 : vector<2x128xf32>
    %365 = arith.divf %363, %364 : vector<2x128xf32>
    %366 = arith.mulf %359, %353 : vector<2x128xf32>
    %367 = arith.addf %348, %366 : vector<2x128xf32>
    %368 = math.tanh %367 : vector<2x128xf32>
    %369 = arith.subf %304, %368 : vector<2x128xf32>
    %370 = arith.mulf %365, %369 : vector<2x128xf32>
    %371 = arith.addf %368, %370 : vector<2x128xf32>
    %372 = vector.shape_cast %343 : vector<2x1xi1> to vector<2x1xi1>
    %373 = vector.broadcast %372 : vector<2x1xi1> to vector<2x128xi1>
    %374 = arith.select %373, %371, %304 : vector<2x128xi1>, vector<2x128xf32>
    %cst_122 = arith.constant 0.000000e+00 : f32
    %375 = vector.shape_cast %343 : vector<2x1xi1> to vector<2x1xi1>
    %376 = vector.broadcast %375 : vector<2x1xi1> to vector<2x128xi1>
    %377 = vector.broadcast %cst_122 : f32 to vector<2x128xf32>
    %378 = arith.select %376, %371, %377 : vector<2x128xi1>, vector<2x128xf32>
    %379 = vector.extract_strided_slice %29 {offsets = [6, 0], sizes = [2, 128], strides = [1, 1]} : vector<16x128xf32> to vector<2x128xf32>
    %380 = vector.extract_strided_slice %36 {offsets = [6, 0], sizes = [2, 128], strides = [1, 1]} : vector<16x128xf32> to vector<2x128xf32>
    %381 = vector.extract_strided_slice %43 {offsets = [6, 0], sizes = [2, 128], strides = [1, 1]} : vector<16x128xf32> to vector<2x128xf32>
    %cst_123 = arith.constant dense<0.000000e+00> : vector<2x128xf32>
    %382 = tpu.matmul %337, %53, %cst_123 {dimension_numbers = #tpu.dot_dimension_numbers<[1], [0], [0], [1], [0, 0, 1, 1], [], []>} : vector<2x128xf32>, vector<128x128xf32>, vector<2x128xf32> -> vector<2x128xf32>
    %cst_124 = arith.constant dense<0.000000e+00> : vector<2x128xf32>
    %383 = tpu.matmul %337, %55, %cst_124 {dimension_numbers = #tpu.dot_dimension_numbers<[1], [0], [0], [1], [0, 0, 1, 1], [], []>} : vector<2x128xf32>, vector<128x128xf32>, vector<2x128xf32> -> vector<2x128xf32>
    %cst_125 = arith.constant dense<0.000000e+00> : vector<2x128xf32>
    %384 = tpu.matmul %337, %57, %cst_125 {dimension_numbers = #tpu.dot_dimension_numbers<[1], [0], [0], [1], [0, 0, 1, 1], [], []>} : vector<2x128xf32>, vector<128x128xf32>, vector<2x128xf32> -> vector<2x128xf32>
    %385 = vector.broadcast %59 : vector<1x128xf32> to vector<2x128xf32>
    %386 = arith.addf %384, %385 : vector<2x128xf32>
    %387 = arith.addf %379, %382 : vector<2x128xf32>
    %388 = arith.negf %387 : vector<2x128xf32>
    %389 = math.exp %388 : vector<2x128xf32>
    %cst_126 = arith.constant 1.000000e+00 : f32
    %390 = vector.broadcast %cst_126 : f32 to vector<2x128xf32>
    %391 = arith.addf %390, %389 : vector<2x128xf32>
    %392 = arith.divf %390, %391 : vector<2x128xf32>
    %393 = arith.addf %380, %383 : vector<2x128xf32>
    %394 = arith.negf %393 : vector<2x128xf32>
    %395 = math.exp %394 : vector<2x128xf32>
    %cst_127 = arith.constant 1.000000e+00 : f32
    %396 = vector.broadcast %cst_127 : f32 to vector<2x128xf32>
    %397 = arith.addf %396, %395 : vector<2x128xf32>
    %398 = arith.divf %396, %397 : vector<2x128xf32>
    %399 = arith.mulf %392, %386 : vector<2x128xf32>
    %400 = arith.addf %381, %399 : vector<2x128xf32>
    %401 = math.tanh %400 : vector<2x128xf32>
    %402 = arith.subf %337, %401 : vector<2x128xf32>
    %403 = arith.mulf %398, %402 : vector<2x128xf32>
    %404 = arith.addf %401, %403 : vector<2x128xf32>
    %405 = vector.shape_cast %345 : vector<2x1xi1> to vector<2x1xi1>
    %406 = vector.broadcast %405 : vector<2x1xi1> to vector<2x128xi1>
    %407 = arith.select %406, %404, %337 : vector<2x128xi1>, vector<2x128xf32>
    %cst_128 = arith.constant 0.000000e+00 : f32
    %408 = vector.shape_cast %345 : vector<2x1xi1> to vector<2x1xi1>
    %409 = vector.broadcast %408 : vector<2x1xi1> to vector<2x128xi1>
    %410 = vector.broadcast %cst_128 : f32 to vector<2x128xf32>
    %411 = arith.select %409, %404, %410 : vector<2x128xi1>, vector<2x128xf32>
    %c5_i32_129 = arith.constant 5 : i32
    %412 = vector.broadcast %c5_i32_129 : i32 to vector<2x1xi32>
    %413 = arith.cmpi sgt, %1, %412 : vector<2x1xi32>
    %c2_i32_130 = arith.constant 2 : i32
    %414 = vector.broadcast %c2_i32_130 : i32 to vector<2x1xi32>
    %415 = arith.cmpi sgt, %1, %414 : vector<2x1xi32>
    %416 = vector.extract_strided_slice %8 {offsets = [10, 0], sizes = [2, 128], strides = [1, 1]} : vector<16x128xf32> to vector<2x128xf32>
    %417 = vector.extract_strided_slice %15 {offsets = [10, 0], sizes = [2, 128], strides = [1, 1]} : vector<16x128xf32> to vector<2x128xf32>
    %418 = vector.extract_strided_slice %22 {offsets = [10, 0], sizes = [2, 128], strides = [1, 1]} : vector<16x128xf32> to vector<2x128xf32>
    %cst_131 = arith.constant dense<0.000000e+00> : vector<2x128xf32>
    %419 = tpu.matmul %374, %45, %cst_131 {dimension_numbers = #tpu.dot_dimension_numbers<[1], [0], [0], [1], [0, 0, 1, 1], [], []>} : vector<2x128xf32>, vector<128x128xf32>, vector<2x128xf32> -> vector<2x128xf32>
    %cst_132 = arith.constant dense<0.000000e+00> : vector<2x128xf32>
    %420 = tpu.matmul %374, %47, %cst_132 {dimension_numbers = #tpu.dot_dimension_numbers<[1], [0], [0], [1], [0, 0, 1, 1], [], []>} : vector<2x128xf32>, vector<128x128xf32>, vector<2x128xf32> -> vector<2x128xf32>
    %cst_133 = arith.constant dense<0.000000e+00> : vector<2x128xf32>
    %421 = tpu.matmul %374, %49, %cst_133 {dimension_numbers = #tpu.dot_dimension_numbers<[1], [0], [0], [1], [0, 0, 1, 1], [], []>} : vector<2x128xf32>, vector<128x128xf32>, vector<2x128xf32> -> vector<2x128xf32>
    %422 = vector.broadcast %51 : vector<1x128xf32> to vector<2x128xf32>
    %423 = arith.addf %421, %422 : vector<2x128xf32>
    %424 = arith.addf %416, %419 : vector<2x128xf32>
    %425 = arith.negf %424 : vector<2x128xf32>
    %426 = math.exp %425 : vector<2x128xf32>
    %cst_134 = arith.constant 1.000000e+00 : f32
    %427 = vector.broadcast %cst_134 : f32 to vector<2x128xf32>
    %428 = arith.addf %427, %426 : vector<2x128xf32>
    %429 = arith.divf %427, %428 : vector<2x128xf32>
    %430 = arith.addf %417, %420 : vector<2x128xf32>
    %431 = arith.negf %430 : vector<2x128xf32>
    %432 = math.exp %431 : vector<2x128xf32>
    %cst_135 = arith.constant 1.000000e+00 : f32
    %433 = vector.broadcast %cst_135 : f32 to vector<2x128xf32>
    %434 = arith.addf %433, %432 : vector<2x128xf32>
    %435 = arith.divf %433, %434 : vector<2x128xf32>
    %436 = arith.mulf %429, %423 : vector<2x128xf32>
    %437 = arith.addf %418, %436 : vector<2x128xf32>
    %438 = math.tanh %437 : vector<2x128xf32>
    %439 = arith.subf %374, %438 : vector<2x128xf32>
    %440 = arith.mulf %435, %439 : vector<2x128xf32>
    %441 = arith.addf %438, %440 : vector<2x128xf32>
    %442 = vector.shape_cast %413 : vector<2x1xi1> to vector<2x1xi1>
    %443 = vector.broadcast %442 : vector<2x1xi1> to vector<2x128xi1>
    %444 = arith.select %443, %441, %374 : vector<2x128xi1>, vector<2x128xf32>
    %cst_136 = arith.constant 0.000000e+00 : f32
    %445 = vector.shape_cast %413 : vector<2x1xi1> to vector<2x1xi1>
    %446 = vector.broadcast %445 : vector<2x1xi1> to vector<2x128xi1>
    %447 = vector.broadcast %cst_136 : f32 to vector<2x128xf32>
    %448 = arith.select %446, %441, %447 : vector<2x128xi1>, vector<2x128xf32>
    %449 = vector.extract_strided_slice %29 {offsets = [4, 0], sizes = [2, 128], strides = [1, 1]} : vector<16x128xf32> to vector<2x128xf32>
    %450 = vector.extract_strided_slice %36 {offsets = [4, 0], sizes = [2, 128], strides = [1, 1]} : vector<16x128xf32> to vector<2x128xf32>
    %451 = vector.extract_strided_slice %43 {offsets = [4, 0], sizes = [2, 128], strides = [1, 1]} : vector<16x128xf32> to vector<2x128xf32>
    %cst_137 = arith.constant dense<0.000000e+00> : vector<2x128xf32>
    %452 = tpu.matmul %407, %53, %cst_137 {dimension_numbers = #tpu.dot_dimension_numbers<[1], [0], [0], [1], [0, 0, 1, 1], [], []>} : vector<2x128xf32>, vector<128x128xf32>, vector<2x128xf32> -> vector<2x128xf32>
    %cst_138 = arith.constant dense<0.000000e+00> : vector<2x128xf32>
    %453 = tpu.matmul %407, %55, %cst_138 {dimension_numbers = #tpu.dot_dimension_numbers<[1], [0], [0], [1], [0, 0, 1, 1], [], []>} : vector<2x128xf32>, vector<128x128xf32>, vector<2x128xf32> -> vector<2x128xf32>
    %cst_139 = arith.constant dense<0.000000e+00> : vector<2x128xf32>
    %454 = tpu.matmul %407, %57, %cst_139 {dimension_numbers = #tpu.dot_dimension_numbers<[1], [0], [0], [1], [0, 0, 1, 1], [], []>} : vector<2x128xf32>, vector<128x128xf32>, vector<2x128xf32> -> vector<2x128xf32>
    %455 = vector.broadcast %59 : vector<1x128xf32> to vector<2x128xf32>
    %456 = arith.addf %454, %455 : vector<2x128xf32>
    %457 = arith.addf %449, %452 : vector<2x128xf32>
    %458 = arith.negf %457 : vector<2x128xf32>
    %459 = math.exp %458 : vector<2x128xf32>
    %cst_140 = arith.constant 1.000000e+00 : f32
    %460 = vector.broadcast %cst_140 : f32 to vector<2x128xf32>
    %461 = arith.addf %460, %459 : vector<2x128xf32>
    %462 = arith.divf %460, %461 : vector<2x128xf32>
    %463 = arith.addf %450, %453 : vector<2x128xf32>
    %464 = arith.negf %463 : vector<2x128xf32>
    %465 = math.exp %464 : vector<2x128xf32>
    %cst_141 = arith.constant 1.000000e+00 : f32
    %466 = vector.broadcast %cst_141 : f32 to vector<2x128xf32>
    %467 = arith.addf %466, %465 : vector<2x128xf32>
    %468 = arith.divf %466, %467 : vector<2x128xf32>
    %469 = arith.mulf %462, %456 : vector<2x128xf32>
    %470 = arith.addf %451, %469 : vector<2x128xf32>
    %471 = math.tanh %470 : vector<2x128xf32>
    %472 = arith.subf %407, %471 : vector<2x128xf32>
    %473 = arith.mulf %468, %472 : vector<2x128xf32>
    %474 = arith.addf %471, %473 : vector<2x128xf32>
    %475 = vector.shape_cast %415 : vector<2x1xi1> to vector<2x1xi1>
    %476 = vector.broadcast %475 : vector<2x1xi1> to vector<2x128xi1>
    %477 = arith.select %476, %474, %407 : vector<2x128xi1>, vector<2x128xf32>
    %cst_142 = arith.constant 0.000000e+00 : f32
    %478 = vector.shape_cast %415 : vector<2x1xi1> to vector<2x1xi1>
    %479 = vector.broadcast %478 : vector<2x1xi1> to vector<2x128xi1>
    %480 = vector.broadcast %cst_142 : f32 to vector<2x128xf32>
    %481 = arith.select %479, %474, %480 : vector<2x128xi1>, vector<2x128xf32>
    %c6_i32_143 = arith.constant 6 : i32
    %482 = vector.broadcast %c6_i32_143 : i32 to vector<2x1xi32>
    %483 = arith.cmpi sgt, %1, %482 : vector<2x1xi32>
    %c1_i32_144 = arith.constant 1 : i32
    %484 = vector.broadcast %c1_i32_144 : i32 to vector<2x1xi32>
    %485 = arith.cmpi sgt, %1, %484 : vector<2x1xi32>
    %486 = vector.extract_strided_slice %8 {offsets = [12, 0], sizes = [2, 128], strides = [1, 1]} : vector<16x128xf32> to vector<2x128xf32>
    %487 = vector.extract_strided_slice %15 {offsets = [12, 0], sizes = [2, 128], strides = [1, 1]} : vector<16x128xf32> to vector<2x128xf32>
    %488 = vector.extract_strided_slice %22 {offsets = [12, 0], sizes = [2, 128], strides = [1, 1]} : vector<16x128xf32> to vector<2x128xf32>
    %cst_145 = arith.constant dense<0.000000e+00> : vector<2x128xf32>
    %489 = tpu.matmul %444, %45, %cst_145 {dimension_numbers = #tpu.dot_dimension_numbers<[1], [0], [0], [1], [0, 0, 1, 1], [], []>} : vector<2x128xf32>, vector<128x128xf32>, vector<2x128xf32> -> vector<2x128xf32>
    %cst_146 = arith.constant dense<0.000000e+00> : vector<2x128xf32>
    %490 = tpu.matmul %444, %47, %cst_146 {dimension_numbers = #tpu.dot_dimension_numbers<[1], [0], [0], [1], [0, 0, 1, 1], [], []>} : vector<2x128xf32>, vector<128x128xf32>, vector<2x128xf32> -> vector<2x128xf32>
    %cst_147 = arith.constant dense<0.000000e+00> : vector<2x128xf32>
    %491 = tpu.matmul %444, %49, %cst_147 {dimension_numbers = #tpu.dot_dimension_numbers<[1], [0], [0], [1], [0, 0, 1, 1], [], []>} : vector<2x128xf32>, vector<128x128xf32>, vector<2x128xf32> -> vector<2x128xf32>
    %492 = vector.broadcast %51 : vector<1x128xf32> to vector<2x128xf32>
    %493 = arith.addf %491, %492 : vector<2x128xf32>
    %494 = arith.addf %486, %489 : vector<2x128xf32>
    %495 = arith.negf %494 : vector<2x128xf32>
    %496 = math.exp %495 : vector<2x128xf32>
    %cst_148 = arith.constant 1.000000e+00 : f32
    %497 = vector.broadcast %cst_148 : f32 to vector<2x128xf32>
    %498 = arith.addf %497, %496 : vector<2x128xf32>
    %499 = arith.divf %497, %498 : vector<2x128xf32>
    %500 = arith.addf %487, %490 : vector<2x128xf32>
    %501 = arith.negf %500 : vector<2x128xf32>
    %502 = math.exp %501 : vector<2x128xf32>
    %cst_149 = arith.constant 1.000000e+00 : f32
    %503 = vector.broadcast %cst_149 : f32 to vector<2x128xf32>
    %504 = arith.addf %503, %502 : vector<2x128xf32>
    %505 = arith.divf %503, %504 : vector<2x128xf32>
    %506 = arith.mulf %499, %493 : vector<2x128xf32>
    %507 = arith.addf %488, %506 : vector<2x128xf32>
    %508 = math.tanh %507 : vector<2x128xf32>
    %509 = arith.subf %444, %508 : vector<2x128xf32>
    %510 = arith.mulf %505, %509 : vector<2x128xf32>
    %511 = arith.addf %508, %510 : vector<2x128xf32>
    %512 = vector.shape_cast %483 : vector<2x1xi1> to vector<2x1xi1>
    %513 = vector.broadcast %512 : vector<2x1xi1> to vector<2x128xi1>
    %514 = arith.select %513, %511, %444 : vector<2x128xi1>, vector<2x128xf32>
    %cst_150 = arith.constant 0.000000e+00 : f32
    %515 = vector.shape_cast %483 : vector<2x1xi1> to vector<2x1xi1>
    %516 = vector.broadcast %515 : vector<2x1xi1> to vector<2x128xi1>
    %517 = vector.broadcast %cst_150 : f32 to vector<2x128xf32>
    %518 = arith.select %516, %511, %517 : vector<2x128xi1>, vector<2x128xf32>
    %519 = vector.extract_strided_slice %29 {offsets = [2, 0], sizes = [2, 128], strides = [1, 1]} : vector<16x128xf32> to vector<2x128xf32>
    %520 = vector.extract_strided_slice %36 {offsets = [2, 0], sizes = [2, 128], strides = [1, 1]} : vector<16x128xf32> to vector<2x128xf32>
    %521 = vector.extract_strided_slice %43 {offsets = [2, 0], sizes = [2, 128], strides = [1, 1]} : vector<16x128xf32> to vector<2x128xf32>
    %cst_151 = arith.constant dense<0.000000e+00> : vector<2x128xf32>
    %522 = tpu.matmul %477, %53, %cst_151 {dimension_numbers = #tpu.dot_dimension_numbers<[1], [0], [0], [1], [0, 0, 1, 1], [], []>} : vector<2x128xf32>, vector<128x128xf32>, vector<2x128xf32> -> vector<2x128xf32>
    %cst_152 = arith.constant dense<0.000000e+00> : vector<2x128xf32>
    %523 = tpu.matmul %477, %55, %cst_152 {dimension_numbers = #tpu.dot_dimension_numbers<[1], [0], [0], [1], [0, 0, 1, 1], [], []>} : vector<2x128xf32>, vector<128x128xf32>, vector<2x128xf32> -> vector<2x128xf32>
    %cst_153 = arith.constant dense<0.000000e+00> : vector<2x128xf32>
    %524 = tpu.matmul %477, %57, %cst_153 {dimension_numbers = #tpu.dot_dimension_numbers<[1], [0], [0], [1], [0, 0, 1, 1], [], []>} : vector<2x128xf32>, vector<128x128xf32>, vector<2x128xf32> -> vector<2x128xf32>
    %525 = vector.broadcast %59 : vector<1x128xf32> to vector<2x128xf32>
    %526 = arith.addf %524, %525 : vector<2x128xf32>
    %527 = arith.addf %519, %522 : vector<2x128xf32>
    %528 = arith.negf %527 : vector<2x128xf32>
    %529 = math.exp %528 : vector<2x128xf32>
    %cst_154 = arith.constant 1.000000e+00 : f32
    %530 = vector.broadcast %cst_154 : f32 to vector<2x128xf32>
    %531 = arith.addf %530, %529 : vector<2x128xf32>
    %532 = arith.divf %530, %531 : vector<2x128xf32>
    %533 = arith.addf %520, %523 : vector<2x128xf32>
    %534 = arith.negf %533 : vector<2x128xf32>
    %535 = math.exp %534 : vector<2x128xf32>
    %cst_155 = arith.constant 1.000000e+00 : f32
    %536 = vector.broadcast %cst_155 : f32 to vector<2x128xf32>
    %537 = arith.addf %536, %535 : vector<2x128xf32>
    %538 = arith.divf %536, %537 : vector<2x128xf32>
    %539 = arith.mulf %532, %526 : vector<2x128xf32>
    %540 = arith.addf %521, %539 : vector<2x128xf32>
    %541 = math.tanh %540 : vector<2x128xf32>
    %542 = arith.subf %477, %541 : vector<2x128xf32>
    %543 = arith.mulf %538, %542 : vector<2x128xf32>
    %544 = arith.addf %541, %543 : vector<2x128xf32>
    %545 = vector.shape_cast %485 : vector<2x1xi1> to vector<2x1xi1>
    %546 = vector.broadcast %545 : vector<2x1xi1> to vector<2x128xi1>
    %547 = arith.select %546, %544, %477 : vector<2x128xi1>, vector<2x128xf32>
    %cst_156 = arith.constant 0.000000e+00 : f32
    %548 = vector.shape_cast %485 : vector<2x1xi1> to vector<2x1xi1>
    %549 = vector.broadcast %548 : vector<2x1xi1> to vector<2x128xi1>
    %550 = vector.broadcast %cst_156 : f32 to vector<2x128xf32>
    %551 = arith.select %549, %544, %550 : vector<2x128xi1>, vector<2x128xf32>
    %c7_i32_157 = arith.constant 7 : i32
    %552 = vector.broadcast %c7_i32_157 : i32 to vector<2x1xi32>
    %553 = arith.cmpi sgt, %1, %552 : vector<2x1xi32>
    %c0_i32_158 = arith.constant 0 : i32
    %554 = vector.broadcast %c0_i32_158 : i32 to vector<2x1xi32>
    %555 = arith.cmpi sgt, %1, %554 : vector<2x1xi32>
    %556 = vector.extract_strided_slice %8 {offsets = [14, 0], sizes = [2, 128], strides = [1, 1]} : vector<16x128xf32> to vector<2x128xf32>
    %557 = vector.extract_strided_slice %15 {offsets = [14, 0], sizes = [2, 128], strides = [1, 1]} : vector<16x128xf32> to vector<2x128xf32>
    %558 = vector.extract_strided_slice %22 {offsets = [14, 0], sizes = [2, 128], strides = [1, 1]} : vector<16x128xf32> to vector<2x128xf32>
    %cst_159 = arith.constant dense<0.000000e+00> : vector<2x128xf32>
    %559 = tpu.matmul %514, %45, %cst_159 {dimension_numbers = #tpu.dot_dimension_numbers<[1], [0], [0], [1], [0, 0, 1, 1], [], []>} : vector<2x128xf32>, vector<128x128xf32>, vector<2x128xf32> -> vector<2x128xf32>
    %cst_160 = arith.constant dense<0.000000e+00> : vector<2x128xf32>
    %560 = tpu.matmul %514, %47, %cst_160 {dimension_numbers = #tpu.dot_dimension_numbers<[1], [0], [0], [1], [0, 0, 1, 1], [], []>} : vector<2x128xf32>, vector<128x128xf32>, vector<2x128xf32> -> vector<2x128xf32>
    %cst_161 = arith.constant dense<0.000000e+00> : vector<2x128xf32>
    %561 = tpu.matmul %514, %49, %cst_161 {dimension_numbers = #tpu.dot_dimension_numbers<[1], [0], [0], [1], [0, 0, 1, 1], [], []>} : vector<2x128xf32>, vector<128x128xf32>, vector<2x128xf32> -> vector<2x128xf32>
    %562 = vector.broadcast %51 : vector<1x128xf32> to vector<2x128xf32>
    %563 = arith.addf %561, %562 : vector<2x128xf32>
    %564 = arith.addf %556, %559 : vector<2x128xf32>
    %565 = arith.negf %564 : vector<2x128xf32>
    %566 = math.exp %565 : vector<2x128xf32>
    %cst_162 = arith.constant 1.000000e+00 : f32
    %567 = vector.broadcast %cst_162 : f32 to vector<2x128xf32>
    %568 = arith.addf %567, %566 : vector<2x128xf32>
    %569 = arith.divf %567, %568 : vector<2x128xf32>
    %570 = arith.addf %557, %560 : vector<2x128xf32>
    %571 = arith.negf %570 : vector<2x128xf32>
    %572 = math.exp %571 : vector<2x128xf32>
    %cst_163 = arith.constant 1.000000e+00 : f32
    %573 = vector.broadcast %cst_163 : f32 to vector<2x128xf32>
    %574 = arith.addf %573, %572 : vector<2x128xf32>
    %575 = arith.divf %573, %574 : vector<2x128xf32>
    %576 = arith.mulf %569, %563 : vector<2x128xf32>
    %577 = arith.addf %558, %576 : vector<2x128xf32>
    %578 = math.tanh %577 : vector<2x128xf32>
    %579 = arith.subf %514, %578 : vector<2x128xf32>
    %580 = arith.mulf %575, %579 : vector<2x128xf32>
    %581 = arith.addf %578, %580 : vector<2x128xf32>
    %582 = vector.shape_cast %553 : vector<2x1xi1> to vector<2x1xi1>
    %583 = vector.broadcast %582 : vector<2x1xi1> to vector<2x128xi1>
    %584 = arith.select %583, %581, %514 : vector<2x128xi1>, vector<2x128xf32>
    %cst_164 = arith.constant 0.000000e+00 : f32
    %585 = vector.shape_cast %553 : vector<2x1xi1> to vector<2x1xi1>
    %586 = vector.broadcast %585 : vector<2x1xi1> to vector<2x128xi1>
    %587 = vector.broadcast %cst_164 : f32 to vector<2x128xf32>
    %588 = arith.select %586, %581, %587 : vector<2x128xi1>, vector<2x128xf32>
    %589 = vector.extract_strided_slice %29 {offsets = [0, 0], sizes = [2, 128], strides = [1, 1]} : vector<16x128xf32> to vector<2x128xf32>
    %590 = vector.extract_strided_slice %36 {offsets = [0, 0], sizes = [2, 128], strides = [1, 1]} : vector<16x128xf32> to vector<2x128xf32>
    %591 = vector.extract_strided_slice %43 {offsets = [0, 0], sizes = [2, 128], strides = [1, 1]} : vector<16x128xf32> to vector<2x128xf32>
    %cst_165 = arith.constant dense<0.000000e+00> : vector<2x128xf32>
    %592 = tpu.matmul %547, %53, %cst_165 {dimension_numbers = #tpu.dot_dimension_numbers<[1], [0], [0], [1], [0, 0, 1, 1], [], []>} : vector<2x128xf32>, vector<128x128xf32>, vector<2x128xf32> -> vector<2x128xf32>
    %cst_166 = arith.constant dense<0.000000e+00> : vector<2x128xf32>
    %593 = tpu.matmul %547, %55, %cst_166 {dimension_numbers = #tpu.dot_dimension_numbers<[1], [0], [0], [1], [0, 0, 1, 1], [], []>} : vector<2x128xf32>, vector<128x128xf32>, vector<2x128xf32> -> vector<2x128xf32>
    %cst_167 = arith.constant dense<0.000000e+00> : vector<2x128xf32>
    %594 = tpu.matmul %547, %57, %cst_167 {dimension_numbers = #tpu.dot_dimension_numbers<[1], [0], [0], [1], [0, 0, 1, 1], [], []>} : vector<2x128xf32>, vector<128x128xf32>, vector<2x128xf32> -> vector<2x128xf32>
    %595 = vector.broadcast %59 : vector<1x128xf32> to vector<2x128xf32>
    %596 = arith.addf %594, %595 : vector<2x128xf32>
    %597 = arith.addf %589, %592 : vector<2x128xf32>
    %598 = arith.negf %597 : vector<2x128xf32>
    %599 = math.exp %598 : vector<2x128xf32>
    %cst_168 = arith.constant 1.000000e+00 : f32
    %600 = vector.broadcast %cst_168 : f32 to vector<2x128xf32>
    %601 = arith.addf %600, %599 : vector<2x128xf32>
    %602 = arith.divf %600, %601 : vector<2x128xf32>
    %603 = arith.addf %590, %593 : vector<2x128xf32>
    %604 = arith.negf %603 : vector<2x128xf32>
    %605 = math.exp %604 : vector<2x128xf32>
    %cst_169 = arith.constant 1.000000e+00 : f32
    %606 = vector.broadcast %cst_169 : f32 to vector<2x128xf32>
    %607 = arith.addf %606, %605 : vector<2x128xf32>
    %608 = arith.divf %606, %607 : vector<2x128xf32>
    %609 = arith.mulf %602, %596 : vector<2x128xf32>
    %610 = arith.addf %591, %609 : vector<2x128xf32>
    %611 = math.tanh %610 : vector<2x128xf32>
    %612 = arith.subf %547, %611 : vector<2x128xf32>
    %613 = arith.mulf %608, %612 : vector<2x128xf32>
    %614 = arith.addf %611, %613 : vector<2x128xf32>
    %615 = vector.shape_cast %555 : vector<2x1xi1> to vector<2x1xi1>
    %616 = vector.broadcast %615 : vector<2x1xi1> to vector<2x128xi1>
    %617 = arith.select %616, %614, %547 : vector<2x128xi1>, vector<2x128xf32>
    %cst_170 = arith.constant 0.000000e+00 : f32
    %618 = vector.shape_cast %555 : vector<2x1xi1> to vector<2x1xi1>
    %619 = vector.broadcast %618 : vector<2x1xi1> to vector<2x128xi1>
    %620 = vector.broadcast %cst_170 : f32 to vector<2x128xf32>
    %621 = arith.select %619, %614, %620 : vector<2x128xi1>, vector<2x128xf32>
    %622 = arith.addf %98, %621 : vector<2x128xf32>
    %c0_171 = arith.constant 0 : index
    %c0_172 = arith.constant 0 : index
    %c0_173 = arith.constant 0 : index
    %623 = vector.load %arg8[%c0_171, %c0_172, %c0_173] : memref<8x2x128xf32, #tpu.memory_space<vmem>>, vector<1x2x128xf32>
    %624 = vector.shape_cast %623 : vector<1x2x128xf32> to vector<2x128xf32>
    %625 = vector.shape_cast %622 : vector<2x128xf32> to vector<1x2x128xf32>
    tpu.vector_store %arg8[%c0_171, %c0_172, %c0_173], %625 {strides = array<i32>} : memref<8x2x128xf32, #tpu.memory_space<vmem>>, vector<1x2x128xf32>,
    %626 = arith.addf %168, %551 : vector<2x128xf32>
    %c1_174 = arith.constant 1 : index
    %c0_175 = arith.constant 0 : index
    %c0_176 = arith.constant 0 : index
    %627 = vector.load %arg8[%c1_174, %c0_175, %c0_176] : memref<8x2x128xf32, #tpu.memory_space<vmem>>, vector<1x2x128xf32>
    %628 = vector.shape_cast %627 : vector<1x2x128xf32> to vector<2x128xf32>
    %629 = vector.shape_cast %626 : vector<2x128xf32> to vector<1x2x128xf32>
    tpu.vector_store %arg8[%c1_174, %c0_175, %c0_176], %629 {strides = array<i32>} : memref<8x2x128xf32, #tpu.memory_space<vmem>>, vector<1x2x128xf32>,
    %630 = arith.addf %238, %481 : vector<2x128xf32>
    %c2_177 = arith.constant 2 : index
    %c0_178 = arith.constant 0 : index
    %c0_179 = arith.constant 0 : index
    %631 = vector.load %arg8[%c2_177, %c0_178, %c0_179] : memref<8x2x128xf32, #tpu.memory_space<vmem>>, vector<1x2x128xf32>
    %632 = vector.shape_cast %631 : vector<1x2x128xf32> to vector<2x128xf32>
    %633 = vector.shape_cast %630 : vector<2x128xf32> to vector<1x2x128xf32>
    tpu.vector_store %arg8[%c2_177, %c0_178, %c0_179], %633 {strides = array<i32>} : memref<8x2x128xf32, #tpu.memory_space<vmem>>, vector<1x2x128xf32>,
    %634 = arith.addf %308, %411 : vector<2x128xf32>
    %c3_180 = arith.constant 3 : index
    %c0_181 = arith.constant 0 : index
    %c0_182 = arith.constant 0 : index
    %635 = vector.load %arg8[%c3_180, %c0_181, %c0_182] : memref<8x2x128xf32, #tpu.memory_space<vmem>>, vector<1x2x128xf32>
    %636 = vector.shape_cast %635 : vector<1x2x128xf32> to vector<2x128xf32>
    %637 = vector.shape_cast %634 : vector<2x128xf32> to vector<1x2x128xf32>
    tpu.vector_store %arg8[%c3_180, %c0_181, %c0_182], %637 {strides = array<i32>} : memref<8x2x128xf32, #tpu.memory_space<vmem>>, vector<1x2x128xf32>,
    %638 = arith.addf %378, %341 : vector<2x128xf32>
    %c4 = arith.constant 4 : index
    %c0_183 = arith.constant 0 : index
    %c0_184 = arith.constant 0 : index
    %639 = vector.load %arg8[%c4, %c0_183, %c0_184] : memref<8x2x128xf32, #tpu.memory_space<vmem>>, vector<1x2x128xf32>
    %640 = vector.shape_cast %639 : vector<1x2x128xf32> to vector<2x128xf32>
    %641 = vector.shape_cast %638 : vector<2x128xf32> to vector<1x2x128xf32>
    tpu.vector_store %arg8[%c4, %c0_183, %c0_184], %641 {strides = array<i32>} : memref<8x2x128xf32, #tpu.memory_space<vmem>>, vector<1x2x128xf32>,
    %642 = arith.addf %448, %271 : vector<2x128xf32>
    %c5 = arith.constant 5 : index
    %c0_185 = arith.constant 0 : index
    %c0_186 = arith.constant 0 : index
    %643 = vector.load %arg8[%c5, %c0_185, %c0_186] : memref<8x2x128xf32, #tpu.memory_space<vmem>>, vector<1x2x128xf32>
    %644 = vector.shape_cast %643 : vector<1x2x128xf32> to vector<2x128xf32>
    %645 = vector.shape_cast %642 : vector<2x128xf32> to vector<1x2x128xf32>
    tpu.vector_store %arg8[%c5, %c0_185, %c0_186], %645 {strides = array<i32>} : memref<8x2x128xf32, #tpu.memory_space<vmem>>, vector<1x2x128xf32>,
    %646 = arith.addf %518, %201 : vector<2x128xf32>
    %c6 = arith.constant 6 : index
    %c0_187 = arith.constant 0 : index
    %c0_188 = arith.constant 0 : index
    %647 = vector.load %arg8[%c6, %c0_187, %c0_188] : memref<8x2x128xf32, #tpu.memory_space<vmem>>, vector<1x2x128xf32>
    %648 = vector.shape_cast %647 : vector<1x2x128xf32> to vector<2x128xf32>
    %649 = vector.shape_cast %646 : vector<2x128xf32> to vector<1x2x128xf32>
    tpu.vector_store %arg8[%c6, %c0_187, %c0_188], %649 {strides = array<i32>} : memref<8x2x128xf32, #tpu.memory_space<vmem>>, vector<1x2x128xf32>,
    %650 = arith.addf %588, %131 : vector<2x128xf32>
    %c7 = arith.constant 7 : index
    %c0_189 = arith.constant 0 : index
    %c0_190 = arith.constant 0 : index
    %651 = vector.load %arg8[%c7, %c0_189, %c0_190] : memref<8x2x128xf32, #tpu.memory_space<vmem>>, vector<1x2x128xf32>
    %652 = vector.shape_cast %651 : vector<1x2x128xf32> to vector<2x128xf32>
    %653 = vector.shape_cast %650 : vector<2x128xf32> to vector<1x2x128xf32>
    tpu.vector_store %arg8[%c7, %c0_189, %c0_190], %653 {strides = array<i32>} : memref<8x2x128xf32, #tpu.memory_space<vmem>>, vector<1x2x128xf32>,
    %c0_191 = arith.constant 0 : index
    %c0_192 = arith.constant 0 : index
    %c0_193 = arith.constant 0 : index
    %654 = vector.load %arg9[%c0_191, %c0_192, %c0_193] : memref<2x2x128xf32, #tpu.memory_space<vmem>>, vector<1x2x128xf32>
    %655 = vector.shape_cast %654 : vector<1x2x128xf32> to vector<2x128xf32>
    %656 = vector.shape_cast %584 : vector<2x128xf32> to vector<1x2x128xf32>
    tpu.vector_store %arg9[%c0_191, %c0_192, %c0_193], %656 {strides = array<i32>} : memref<2x2x128xf32, #tpu.memory_space<vmem>>, vector<1x2x128xf32>,
    %c1_194 = arith.constant 1 : index
    %c0_195 = arith.constant 0 : index
    %c0_196 = arith.constant 0 : index
    %657 = vector.load %arg9[%c1_194, %c0_195, %c0_196] : memref<2x2x128xf32, #tpu.memory_space<vmem>>, vector<1x2x128xf32>
    %658 = vector.shape_cast %657 : vector<1x2x128xf32> to vector<2x128xf32>
    %659 = vector.shape_cast %617 : vector<2x128xf32> to vector<1x2x128xf32>
    tpu.vector_store %arg9[%c1_194, %c0_195, %c0_196], %659 {strides = array<i32>} : memref<2x2x128xf32, #tpu.memory_space<vmem>>, vector<1x2x128xf32>,
    return
  }
}

</mosaic_0001>

<llo_original>
// kernel: encoder_rnn_forward.1
$region0: #{encoder_rnn_forward.1}
  #allocation0 [shape = 'u32[]', space=smem, size = 0x4, offset = 0x4, fixed_abs, tag = 'smem constant byte address 0x4 - core index']
  #allocation1 [shape = 'u32[72,128]{1,0:T(1,128)}', space=vmem, size = 0x9000, scoped, tag = 'internal scratch']
  %s0 = inlined_call_operand.vmem [shape: f32[16,128], index: 0, kind: input, shape index: {}]
  %s1 = inlined_call_operand.vmem [shape: s32[2,1], index: 1, kind: input, shape index: {}]
  %s2 = inlined_call_operand.vmem [shape: f32[3,128,128], index: 2, kind: input, shape index: {}]
  %s3 = inlined_call_operand.vmem [shape: f32[3,128,128], index: 3, kind: input, shape index: {}]
  %s4 = inlined_call_operand.vmem [shape: f32[4,1,128], index: 4, kind: input, shape index: {}]
  %s5 = inlined_call_operand.vmem [shape: f32[3,128,128], index: 5, kind: input, shape index: {}]
  %s6 = inlined_call_operand.vmem [shape: f32[3,128,128], index: 6, kind: input, shape index: {}]
  %s7 = inlined_call_operand.vmem [shape: f32[4,1,128], index: 7, kind: input, shape index: {}]
  %s8 = inlined_call_operand.hbm [shape: f32[8,2,128], index: 8, kind: output, shape index: {0}]
  %s9 = inlined_call_operand.hbm [shape: f32[2,2,128], index: 9, kind: output, shape index: {1}]
  %10 = xla_tuple %s8, %s9
  %s11 = sld [smem:[#allocation0]]
  $region50: #{encoder_rnn_forward.1} parent=0
    _
  %s13 = ssub.s32 1, %s11
  %s14 = scalar_select 0, %s13, %s11
  $region1: #{encoder_rnn_forward.1} parent=0
    #allocation2 [shape = 'u8[8192]{0}', space=vmem, size = 0x2000, scoped, tag = 'output window, operand 0, single buffered']
    #allocation3 [shape = 's32[1]{0}', space=sflag, size = 0x4, scoped, tag = 'scoped memory for encoder_rnn_forward.1']
    #allocation4 [shape = 'u8[2048]{0}', space=vmem, size = 0x800, scoped, tag = 'output window, operand 1, single buffered']
    #allocation5 [shape = 's32[1]{0}', space=sflag, size = 0x4, scoped, tag = 'scoped memory for encoder_rnn_forward.1']
    %15 = vsyncpa [#allocation3], 0
    %16 = vsyncpa [#allocation5], 0
    // Predicated region
    $region2: #{encoder_rnn_forward.1} parent=1 // pred_check
      _
    $region3: #{encoder_rnn_forward.1} parent=1 // pred_check_branch
      %18 = sbr.rel (0) target = $region5
    $region4: #{encoder_rnn_forward.1} parent=1 // pred_region
      _
    $region5: #{encoder_rnn_forward.1} parent=1 // pred_fallthru
      _
    // Predicated region
    $region6: #{encoder_rnn_forward.1} parent=1 // pred_check
      _
    $region7: #{encoder_rnn_forward.1} parent=1 // pred_check_branch
      %20 = sbr.rel (0) target = $region9
    $region8: #{encoder_rnn_forward.1} parent=1 // pred_region
      _
    $region9: #{encoder_rnn_forward.1} parent=1 // pred_fallthru
      _
    // Predicated region
    $region10: #{encoder_rnn_forward.1} parent=1 // pred_check
      _
    $region11: #{encoder_rnn_forward.1} parent=1 // pred_check_branch
      %22 = sbr.rel (0) target = $region13
    $region12: #{encoder_rnn_forward.1} parent=1 // pred_region
      _
    $region13: #{encoder_rnn_forward.1} parent=1 // pred_fallthru
      _
    // Predicated region
    $region14: #{encoder_rnn_forward.1} parent=1 // pred_check
      _
    $region15: #{encoder_rnn_forward.1} parent=1 // pred_check_branch
      %24 = sbr.rel (0) target = $region17
    $region16: #{encoder_rnn_forward.1} parent=1 // pred_region
      _
    $region17: #{encoder_rnn_forward.1} parent=1 // pred_fallthru
      _
    // Predicated region
    $region18: #{encoder_rnn_forward.1} parent=1 // pred_check
      _
    $region19: #{encoder_rnn_forward.1} parent=1 // pred_check_branch
      %26 = sbr.rel (0) target = $region21
    $region20: #{encoder_rnn_forward.1} parent=1 // pred_region
      _
    $region21: #{encoder_rnn_forward.1} parent=1 // pred_fallthru
      _
    // Predicated region
    $region22: #{encoder_rnn_forward.1} parent=1 // pred_check
      _
    $region23: #{encoder_rnn_forward.1} parent=1 // pred_check_branch
      %28 = sbr.rel (0) target = $region25
    $region24: #{encoder_rnn_forward.1} parent=1 // pred_region
      _
    $region25: #{encoder_rnn_forward.1} parent=1 // pred_fallthru
      _
    // Predicated region
    $region26: #{encoder_rnn_forward.1} parent=1 // pred_check
      _
    $region27: #{encoder_rnn_forward.1} parent=1 // pred_check_branch
      %30 = sbr.rel (0) target = $region29
    $region28: #{encoder_rnn_forward.1} parent=1 // pred_region
      _
    $region29: #{encoder_rnn_forward.1} parent=1 // pred_fallthru
      _
    // Predicated region
    $region30: #{encoder_rnn_forward.1} parent=1 // pred_check
      _
    $region31: #{encoder_rnn_forward.1} parent=1 // pred_check_branch
      %32 = sbr.rel (0) target = $region33
    $region32: #{encoder_rnn_forward.1} parent=1 // pred_region
      _
    $region33: #{encoder_rnn_forward.1} parent=1 // pred_fallthru
      _
    %v33 = vld [vmem:[%s0] sm:$0xff]
    %v34 = vld [vmem:[%s0 + $0x8] sm:$0xff]
    %v35 = vld [vmem:[%s1] sm:$0x3]
    %v36 = vld [vmem:[%s2] sm:$0xff]
    %v37 = vld [vmem:[%s2 + $0x8] sm:$0xff]
    %v38 = vld [vmem:[%s2 + $0x10] sm:$0xff]
    %v39 = vld [vmem:[%s2 + $0x18] sm:$0xff]
    %v40 = vld [vmem:[%s2 + $0x20] sm:$0xff]
    %v41 = vld [vmem:[%s2 + $0x28] sm:$0xff]
    %v42 = vld [vmem:[%s2 + $0x30] sm:$0xff]
    %v43 = vld [vmem:[%s2 + $0x38] sm:$0xff]
    %v44 = vld [vmem:[%s2 + $0x40] sm:$0xff]
    %v45 = vld [vmem:[%s2 + $0x48] sm:$0xff]
    %v46 = vld [vmem:[%s2 + $0x50] sm:$0xff]
    %v47 = vld [vmem:[%s2 + $0x58] sm:$0xff]
    %v48 = vld [vmem:[%s2 + $0x60] sm:$0xff]
    %v49 = vld [vmem:[%s2 + $0x68] sm:$0xff]
    %v50 = vld [vmem:[%s2 + $0x70] sm:$0xff]
    %v51 = vld [vmem:[%s2 + $0x78] sm:$0xff]
    %v52 = vld [vmem:[%s4] sm:$0x1]
    %v54 = vperm.slane %v52, 0
    %56 = vmatpush.msra.mxu0 %v51
    %57 = vmatpush.msra.mxu0 %v50
    %58 = vmatpush.msra.mxu0 %v49
    %59 = vmatpush.msra.mxu0 %v48
    %60 = vmatpush.msra.mxu0 %v47
    %61 = vmatpush.msra.mxu0 %v46
    %62 = vmatpush.msra.mxu0 %v45
    %63 = vmatpush.msra.mxu0 %v44
    %64 = vmatpush.msra.mxu0 %v43
    %65 = vmatpush.msra.mxu0 %v42
    %66 = vmatpush.msra.mxu0 %v41
    %67 = vmatpush.msra.mxu0 %v40
    %68 = vmatpush.msra.mxu0 %v39
    %69 = vmatpush.msra.mxu0 %v38
    %70 = vmatpush.msra.mxu0 %v37
    %71 = vmatpush.msra.mxu0 %v36
    %72 = vmatmul.f32.gmra.mxu0 %v33
    %v73 = vpop.f32.mrf.mxu0
    %v74 = vadd.f32 %v54, %v73
    %75 = vmatmul.f32.gmra.mxu0 %v34
    %v76 = vpop.f32.mrf.mxu0
    %v77 = vadd.f32 %v54, %v76
    %78 = vdwg.mxu0
    %s79 = scalar_lea.vmem %s2, 128
    %v80 = vld [vmem:[%s79] sm:$0xff]
    %v81 = vld [vmem:[%s79 + $0x8] sm:$0xff]
    %v82 = vld [vmem:[%s79 + $0x10] sm:$0xff]
    %v83 = vld [vmem:[%s79 + $0x18] sm:$0xff]
    %v84 = vld [vmem:[%s79 + $0x20] sm:$0xff]
    %v85 = vld [vmem:[%s79 + $0x28] sm:$0xff]
    %v86 = vld [vmem:[%s79 + $0x30] sm:$0xff]
    %v87 = vld [vmem:[%s79 + $0x38] sm:$0xff]
    %v88 = vld [vmem:[%s79 + $0x40] sm:$0xff]
    %v89 = vld [vmem:[%s79 + $0x48] sm:$0xff]
    %v90 = vld [vmem:[%s79 + $0x50] sm:$0xff]
    %v91 = vld [vmem:[%s79 + $0x58] sm:$0xff]
    %v92 = vld [vmem:[%s79 + $0x60] sm:$0xff]
    %v93 = vld [vmem:[%s79 + $0x68] sm:$0xff]
    %v94 = vld [vmem:[%s79 + $0x70] sm:$0xff]
    %v95 = vld [vmem:[%s79 + $0x78] sm:$0xff]
    %s96 = scalar_lea.vmem %s4, 1
    %v97 = vld [vmem:[%s96] sm:$0x1]
    %v99 = vperm.slane %v97, 0
    %101 = vmatpush.msra.mxu0 %v95
    %102 = vmatpush.msra.mxu0 %v94
    %103 = vmatpush.msra.mxu0 %v93
    %104 = vmatpush.msra.mxu0 %v92
    %105 = vmatpush.msra.mxu0 %v91
    %106 = vmatpush.msra.mxu0 %v90
    %107 = vmatpush.msra.mxu0 %v89
    %108 = vmatpush.msra.mxu0 %v88
    %109 = vmatpush.msra.mxu0 %v87
    %110 = vmatpush.msra.mxu0 %v86
    %111 = vmatpush.msra.mxu0 %v85
    %112 = vmatpush.msra.mxu0 %v84
    %113 = vmatpush.msra.mxu0 %v83
    %114 = vmatpush.msra.mxu0 %v82
    %115 = vmatpush.msra.mxu0 %v81
    %116 = vmatpush.msra.mxu0 %v80
    %117 = vmatmul.f32.gmra.mxu0 %v33
    %v118 = vpop.f32.mrf.mxu0
    %v119 = vadd.f32 %v99, %v118
    %120 = vmatmul.f32.gmra.mxu0 %v34
    %v121 = vpop.f32.mrf.mxu0
    %v122 = vadd.f32 %v99, %v121
    %123 = vdwg.mxu0
    %s124 = scalar_lea.vmem %s2, 256
    %v125 = vld [vmem:[%s124] sm:$0xff]
    %v126 = vld [vmem:[%s124 + $0x8] sm:$0xff]
    %v127 = vld [vmem:[%s124 + $0x10] sm:$0xff]
    %v128 = vld [vmem:[%s124 + $0x18] sm:$0xff]
    %v129 = vld [vmem:[%s124 + $0x20] sm:$0xff]
    %v130 = vld [vmem:[%s124 + $0x28] sm:$0xff]
    %v131 = vld [vmem:[%s124 + $0x30] sm:$0xff]
    %v132 = vld [vmem:[%s124 + $0x38] sm:$0xff]
    %v133 = vld [vmem:[%s124 + $0x40] sm:$0xff]
    %v134 = vld [vmem:[%s124 + $0x48] sm:$0xff]
    %v135 = vld [vmem:[%s124 + $0x50] sm:$0xff]
    %v136 = vld [vmem:[%s124 + $0x58] sm:$0xff]
    %v137 = vld [vmem:[%s124 + $0x60] sm:$0xff]
    %v138 = vld [vmem:[%s124 + $0x68] sm:$0xff]
    %v139 = vld [vmem:[%s124 + $0x70] sm:$0xff]
    %v140 = vld [vmem:[%s124 + $0x78] sm:$0xff]
    %s141 = scalar_lea.vmem %s4, 2
    %v142 = vld [vmem:[%s141] sm:$0x1]
    %v144 = vperm.slane %v142, 0
    %146 = vmatpush.msra.mxu0 %v140
    %147 = vmatpush.msra.mxu0 %v139
    %148 = vmatpush.msra.mxu0 %v138
    %149 = vmatpush.msra.mxu0 %v137
    %150 = vmatpush.msra.mxu0 %v136
    %151 = vmatpush.msra.mxu0 %v135
    %152 = vmatpush.msra.mxu0 %v134
    %153 = vmatpush.msra.mxu0 %v133
    %154 = vmatpush.msra.mxu0 %v132
    %155 = vmatpush.msra.mxu0 %v131
    %156 = vmatpush.msra.mxu0 %v130
    %157 = vmatpush.msra.mxu0 %v129
    %158 = vmatpush.msra.mxu0 %v128
    %159 = vmatpush.msra.mxu0 %v127
    %160 = vmatpush.msra.mxu0 %v126
    %161 = vmatpush.msra.mxu0 %v125
    %162 = vmatmul.f32.gmra.mxu0 %v33
    %v163 = vpop.f32.mrf.mxu0
    %v164 = vadd.f32 %v144, %v163
    %165 = vmatmul.f32.gmra.mxu0 %v34
    %v166 = vpop.f32.mrf.mxu0
    %v167 = vadd.f32 %v144, %v166
    %168 = vdwg.mxu0
    %v169 = vld [vmem:[%s5] sm:$0xff]
    %v170 = vld [vmem:[%s5 + $0x8] sm:$0xff]
    %v171 = vld [vmem:[%s5 + $0x10] sm:$0xff]
    %v172 = vld [vmem:[%s5 + $0x18] sm:$0xff]
    %v173 = vld [vmem:[%s5 + $0x20] sm:$0xff]
    %v174 = vld [vmem:[%s5 + $0x28] sm:$0xff]
    %v175 = vld [vmem:[%s5 + $0x30] sm:$0xff]
    %v176 = vld [vmem:[%s5 + $0x38] sm:$0xff]
    %v177 = vld [vmem:[%s5 + $0x40] sm:$0xff]
    %v178 = vld [vmem:[%s5 + $0x48] sm:$0xff]
    %v179 = vld [vmem:[%s5 + $0x50] sm:$0xff]
    %v180 = vld [vmem:[%s5 + $0x58] sm:$0xff]
    %v181 = vld [vmem:[%s5 + $0x60] sm:$0xff]
    %v182 = vld [vmem:[%s5 + $0x68] sm:$0xff]
    %v183 = vld [vmem:[%s5 + $0x70] sm:$0xff]
    %v184 = vld [vmem:[%s5 + $0x78] sm:$0xff]
    %v185 = vld [vmem:[%s7] sm:$0x1]
    %v187 = vperm.slane %v185, 0
    %189 = vmatpush.msra.mxu0 %v184
    %190 = vmatpush.msra.mxu0 %v183
    %191 = vmatpush.msra.mxu0 %v182
    %192 = vmatpush.msra.mxu0 %v181
    %193 = vmatpush.msra.mxu0 %v180
    %194 = vmatpush.msra.mxu0 %v179
    %195 = vmatpush.msra.mxu0 %v178
    %196 = vmatpush.msra.mxu0 %v177
    %197 = vmatpush.msra.mxu0 %v176
    %198 = vmatpush.msra.mxu0 %v175
    %199 = vmatpush.msra.mxu0 %v174
    %200 = vmatpush.msra.mxu0 %v173
    %201 = vmatpush.msra.mxu0 %v172
    %202 = vmatpush.msra.mxu0 %v171
    %203 = vmatpush.msra.mxu0 %v170
    %204 = vmatpush.msra.mxu0 %v169
    %205 = vmatmul.f32.gmra.mxu0 %v33
    %v206 = vpop.f32.mrf.mxu0
    %v207 = vadd.f32 %v187, %v206
    %208 = vmatmul.f32.gmra.mxu0 %v34
    %v209 = vpop.f32.mrf.mxu0
    %v210 = vadd.f32 %v187, %v209
    %211 = vdwg.mxu0
    %s212 = scalar_lea.vmem %s5, 128
    %v213 = vld [vmem:[%s212] sm:$0xff]
    %v214 = vld [vmem:[%s212 + $0x8] sm:$0xff]
    %v215 = vld [vmem:[%s212 + $0x10] sm:$0xff]
    %v216 = vld [vmem:[%s212 + $0x18] sm:$0xff]
    %v217 = vld [vmem:[%s212 + $0x20] sm:$0xff]
    %v218 = vld [vmem:[%s212 + $0x28] sm:$0xff]
    %v219 = vld [vmem:[%s212 + $0x30] sm:$0xff]
    %v220 = vld [vmem:[%s212 + $0x38] sm:$0xff]
    %v221 = vld [vmem:[%s212 + $0x40] sm:$0xff]
    %v222 = vld [vmem:[%s212 + $0x48] sm:$0xff]
    %v223 = vld [vmem:[%s212 + $0x50] sm:$0xff]
    %v224 = vld [vmem:[%s212 + $0x58] sm:$0xff]
    %v225 = vld [vmem:[%s212 + $0x60] sm:$0xff]
    %v226 = vld [vmem:[%s212 + $0x68] sm:$0xff]
    %v227 = vld [vmem:[%s212 + $0x70] sm:$0xff]
    %v228 = vld [vmem:[%s212 + $0x78] sm:$0xff]
    %s229 = scalar_lea.vmem %s7, 1
    %v230 = vld [vmem:[%s229] sm:$0x1]
    %v232 = vperm.slane %v230, 0
    %234 = vmatpush.msra.mxu0 %v228
    %235 = vmatpush.msra.mxu0 %v227
    %236 = vmatpush.msra.mxu0 %v226
    %237 = vmatpush.msra.mxu0 %v225
    %238 = vmatpush.msra.mxu0 %v224
    %239 = vmatpush.msra.mxu0 %v223
    %240 = vmatpush.msra.mxu0 %v222
    %241 = vmatpush.msra.mxu0 %v221
    %242 = vmatpush.msra.mxu0 %v220
    %243 = vmatpush.msra.mxu0 %v219
    %244 = vmatpush.msra.mxu0 %v218
    %245 = vmatpush.msra.mxu0 %v217
    %246 = vmatpush.msra.mxu0 %v216
    %247 = vmatpush.msra.mxu0 %v215
    %248 = vmatpush.msra.mxu0 %v214
    %249 = vmatpush.msra.mxu0 %v213
    %250 = vmatmul.f32.gmra.mxu0 %v33
    %v251 = vpop.f32.mrf.mxu0
    %v252 = vadd.f32 %v232, %v251
    %253 = vmatmul.f32.gmra.mxu0 %v34
    %v254 = vpop.f32.mrf.mxu0
    %v255 = vadd.f32 %v232, %v254
    %256 = vdwg.mxu0
    %s257 = scalar_lea.vmem %s5, 256
    %v258 = vld [vmem:[%s257] sm:$0xff]
    %v259 = vld [vmem:[%s257 + $0x8] sm:$0xff]
    %v260 = vld [vmem:[%s257 + $0x10] sm:$0xff]
    %v261 = vld [vmem:[%s257 + $0x18] sm:$0xff]
    %v262 = vld [vmem:[%s257 + $0x20] sm:$0xff]
    %v263 = vld [vmem:[%s257 + $0x28] sm:$0xff]
    %v264 = vld [vmem:[%s257 + $0x30] sm:$0xff]
    %v265 = vld [vmem:[%s257 + $0x38] sm:$0xff]
    %v266 = vld [vmem:[%s257 + $0x40] sm:$0xff]
    %v267 = vld [vmem:[%s257 + $0x48] sm:$0xff]
    %v268 = vld [vmem:[%s257 + $0x50] sm:$0xff]
    %v269 = vld [vmem:[%s257 + $0x58] sm:$0xff]
    %v270 = vld [vmem:[%s257 + $0x60] sm:$0xff]
    %v271 = vld [vmem:[%s257 + $0x68] sm:$0xff]
    %v272 = vld [vmem:[%s257 + $0x70] sm:$0xff]
    %v273 = vld [vmem:[%s257 + $0x78] sm:$0xff]
    %s274 = scalar_lea.vmem %s7, 2
    %v275 = vld [vmem:[%s274] sm:$0x1]
    %v277 = vperm.slane %v275, 0
    %279 = vmatpush.msra.mxu0 %v273
    %280 = vmatpush.msra.mxu0 %v272
    %281 = vmatpush.msra.mxu0 %v271
    %282 = vmatpush.msra.mxu0 %v270
    %283 = vmatpush.msra.mxu0 %v269
    %284 = vmatpush.msra.mxu0 %v268
    %285 = vmatpush.msra.mxu0 %v267
    %286 = vmatpush.msra.mxu0 %v266
    %287 = vmatpush.msra.mxu0 %v265
    %288 = vmatpush.msra.mxu0 %v264
    %289 = vmatpush.msra.mxu0 %v263
    %290 = vmatpush.msra.mxu0 %v262
    %291 = vmatpush.msra.mxu0 %v261
    %292 = vmatpush.msra.mxu0 %v260
    %293 = vmatpush.msra.mxu0 %v259
    %294 = vmatpush.msra.mxu0 %v258
    %295 = vmatmul.f32.gmra.mxu0 %v33
    %v296 = vpop.f32.mrf.mxu0
    %v297 = vadd.f32 %v277, %v296
    %298 = vmatmul.f32.gmra.mxu0 %v34
    %v299 = vpop.f32.mrf.mxu0
    %v300 = vadd.f32 %v277, %v299
    %301 = vdwg.mxu0
    %v302 = vld [vmem:[%s3] sm:$0xff]
    %v303 = vld [vmem:[%s3 + $0x8] sm:$0xff]
    %v304 = vld [vmem:[%s3 + $0x10] sm:$0xff]
    %v305 = vld [vmem:[%s3 + $0x18] sm:$0xff]
    %v306 = vld [vmem:[%s3 + $0x20] sm:$0xff]
    %v307 = vld [vmem:[%s3 + $0x28] sm:$0xff]
    %v308 = vld [vmem:[%s3 + $0x30] sm:$0xff]
    %v309 = vld [vmem:[%s3 + $0x38] sm:$0xff]
    %v310 = vld [vmem:[%s3 + $0x40] sm:$0xff]
    %v311 = vld [vmem:[%s3 + $0x48] sm:$0xff]
    %v312 = vld [vmem:[%s3 + $0x50] sm:$0xff]
    %v313 = vld [vmem:[%s3 + $0x58] sm:$0xff]
    %v314 = vld [vmem:[%s3 + $0x60] sm:$0xff]
    %v315 = vld [vmem:[%s3 + $0x68] sm:$0xff]
    %v316 = vld [vmem:[%s3 + $0x70] sm:$0xff]
    %v317 = vld [vmem:[%s3 + $0x78] sm:$0xff]
    %s318 = scalar_lea.vmem %s3, 128
    %v319 = vld [vmem:[%s318] sm:$0xff]
    %v320 = vld [vmem:[%s318 + $0x8] sm:$0xff]
    %v321 = vld [vmem:[%s318 + $0x10] sm:$0xff]
    %v322 = vld [vmem:[%s318 + $0x18] sm:$0xff]
    %v323 = vld [vmem:[%s318 + $0x20] sm:$0xff]
    %v324 = vld [vmem:[%s318 + $0x28] sm:$0xff]
    %v325 = vld [vmem:[%s318 + $0x30] sm:$0xff]
    %v326 = vld [vmem:[%s318 + $0x38] sm:$0xff]
    %v327 = vld [vmem:[%s318 + $0x40] sm:$0xff]
    %v328 = vld [vmem:[%s318 + $0x48] sm:$0xff]
    %v329 = vld [vmem:[%s318 + $0x50] sm:$0xff]
    %v330 = vld [vmem:[%s318 + $0x58] sm:$0xff]
    %v331 = vld [vmem:[%s318 + $0x60] sm:$0xff]
    %v332 = vld [vmem:[%s318 + $0x68] sm:$0xff]
    %v333 = vld [vmem:[%s318 + $0x70] sm:$0xff]
    %v334 = vld [vmem:[%s318 + $0x78] sm:$0xff]
    %s335 = scalar_lea.vmem %s3, 256
    %v336 = vld [vmem:[%s335] sm:$0xff]
    %v337 = vld [vmem:[%s335 + $0x8] sm:$0xff]
    %v338 = vld [vmem:[%s335 + $0x10] sm:$0xff]
    %v339 = vld [vmem:[%s335 + $0x18] sm:$0xff]
    %v340 = vld [vmem:[%s335 + $0x20] sm:$0xff]
    %v341 = vld [vmem:[%s335 + $0x28] sm:$0xff]
    %v342 = vld [vmem:[%s335 + $0x30] sm:$0xff]
    %v343 = vld [vmem:[%s335 + $0x38] sm:$0xff]
    %v344 = vld [vmem:[%s335 + $0x40] sm:$0xff]
    %v345 = vld [vmem:[%s335 + $0x48] sm:$0xff]
    %v346 = vld [vmem:[%s335 + $0x50] sm:$0xff]
    %v347 = vld [vmem:[%s335 + $0x58] sm:$0xff]
    %v348 = vld [vmem:[%s335 + $0x60] sm:$0xff]
    %v349 = vld [vmem:[%s335 + $0x68] sm:$0xff]
    %v350 = vld [vmem:[%s335 + $0x70] sm:$0xff]
    %v351 = vld [vmem:[%s335 + $0x78] sm:$0xff]
    %s352 = scalar_lea.vmem %s4, 3
    %v353 = vld [vmem:[%s352] sm:$0x1]
    %v354 = vld [vmem:[%s6] sm:$0xff]
    %v355 = vld [vmem:[%s6 + $0x8] sm:$0xff]
    %v356 = vld [vmem:[%s6 + $0x10] sm:$0xff]
    %v357 = vld [vmem:[%s6 + $0x18] sm:$0xff]
    %v358 = vld [vmem:[%s6 + $0x20] sm:$0xff]
    %v359 = vld [vmem:[%s6 + $0x28] sm:$0xff]
    %v360 = vld [vmem:[%s6 + $0x30] sm:$0xff]
    %v361 = vld [vmem:[%s6 + $0x38] sm:$0xff]
    %v362 = vld [vmem:[%s6 + $0x40] sm:$0xff]
    %v363 = vld [vmem:[%s6 + $0x48] sm:$0xff]
    %v364 = vld [vmem:[%s6 + $0x50] sm:$0xff]
    %v365 = vld [vmem:[%s6 + $0x58] sm:$0xff]
    %v366 = vld [vmem:[%s6 + $0x60] sm:$0xff]
    %v367 = vld [vmem:[%s6 + $0x68] sm:$0xff]
    %v368 = vld [vmem:[%s6 + $0x70] sm:$0xff]
    %v369 = vld [vmem:[%s6 + $0x78] sm:$0xff]
    %s370 = scalar_lea.vmem %s6, 128
    %v371 = vld [vmem:[%s370] sm:$0xff]
    %v372 = vld [vmem:[%s370 + $0x8] sm:$0xff]
    %v373 = vld [vmem:[%s370 + $0x10] sm:$0xff]
    %v374 = vld [vmem:[%s370 + $0x18] sm:$0xff]
    %v375 = vld [vmem:[%s370 + $0x20] sm:$0xff]
    %v376 = vld [vmem:[%s370 + $0x28] sm:$0xff]
    %v377 = vld [vmem:[%s370 + $0x30] sm:$0xff]
    %v378 = vld [vmem:[%s370 + $0x38] sm:$0xff]
    %v379 = vld [vmem:[%s370 + $0x40] sm:$0xff]
    %v380 = vld [vmem:[%s370 + $0x48] sm:$0xff]
    %v381 = vld [vmem:[%s370 + $0x50] sm:$0xff]
    %v382 = vld [vmem:[%s370 + $0x58] sm:$0xff]
    %v383 = vld [vmem:[%s370 + $0x60] sm:$0xff]
    %v384 = vld [vmem:[%s370 + $0x68] sm:$0xff]
    %v385 = vld [vmem:[%s370 + $0x70] sm:$0xff]
    %v386 = vld [vmem:[%s370 + $0x78] sm:$0xff]
    %s387 = scalar_lea.vmem %s6, 256
    %v388 = vld [vmem:[%s387] sm:$0xff]
    %v389 = vld [vmem:[%s387 + $0x8] sm:$0xff]
    %v390 = vld [vmem:[%s387 + $0x10] sm:$0xff]
    %v391 = vld [vmem:[%s387 + $0x18] sm:$0xff]
    %v392 = vld [vmem:[%s387 + $0x20] sm:$0xff]
    %v393 = vld [vmem:[%s387 + $0x28] sm:$0xff]
    %v394 = vld [vmem:[%s387 + $0x30] sm:$0xff]
    %v395 = vld [vmem:[%s387 + $0x38] sm:$0xff]
    %v396 = vld [vmem:[%s387 + $0x40] sm:$0xff]
    %v397 = vld [vmem:[%s387 + $0x48] sm:$0xff]
    %v398 = vld [vmem:[%s387 + $0x50] sm:$0xff]
    %v399 = vld [vmem:[%s387 + $0x58] sm:$0xff]
    %v400 = vld [vmem:[%s387 + $0x60] sm:$0xff]
    %v401 = vld [vmem:[%s387 + $0x68] sm:$0xff]
    %v402 = vld [vmem:[%s387 + $0x70] sm:$0xff]
    %v403 = vld [vmem:[%s387 + $0x78] sm:$0xff]
    %s404 = scalar_lea.vmem %s7, 3
    %v405 = vld [vmem:[%s404] sm:$0x1]
    %vm406 = vcmp.gt.s32.totalorder %v35, 0
    %vm407 = vcmp.gt.s32.totalorder %v35, 7
    %408 = vmatpush.msra.mxu0 %v317
    %409 = vmatpush.msra.mxu0 %v316
    %410 = vmatpush.msra.mxu0 %v315
    %411 = vmatpush.msra.mxu0 %v314
    %412 = vmatpush.msra.mxu0 %v313
    %413 = vmatpush.msra.mxu0 %v312
    %414 = vmatpush.msra.mxu0 %v311
    %415 = vmatpush.msra.mxu0 %v310
    %416 = vmatpush.msra.mxu0 %v309
    %417 = vmatpush.msra.mxu0 %v308
    %418 = vmatpush.msra.mxu0 %v307
    %419 = vmatpush.msra.mxu0 %v306
    %420 = vmatpush.msra.mxu0 %v305
    %421 = vmatpush.msra.mxu0 %v304
    %422 = vmatpush.msra.mxu0 %v303
    %423 = vmatpush.msra.mxu0 %v302
    %424 = vmatmul.f32.gmra.mxu0 0.0
    %v425 = vpop.f32.mrf.mxu0
    %v426 = vadd.f32 0.0, %v425
    %427 = vdwg.mxu0
    %428 = vmatpush.msra.mxu0 %v334
    %429 = vmatpush.msra.mxu0 %v333
    %430 = vmatpush.msra.mxu0 %v332
    %431 = vmatpush.msra.mxu0 %v331
    %432 = vmatpush.msra.mxu0 %v330
    %433 = vmatpush.msra.mxu0 %v329
    %434 = vmatpush.msra.mxu0 %v328
    %435 = vmatpush.msra.mxu0 %v327
    %436 = vmatpush.msra.mxu0 %v326
    %437 = vmatpush.msra.mxu0 %v325
    %438 = vmatpush.msra.mxu0 %v324
    %439 = vmatpush.msra.mxu0 %v323
    %440 = vmatpush.msra.mxu0 %v322
    %441 = vmatpush.msra.mxu0 %v321
    %442 = vmatpush.msra.mxu0 %v320
    %443 = vmatpush.msra.mxu0 %v319
    %444 = vmatmul.f32.gmra.mxu0 0.0
    %v445 = vpop.f32.mrf.mxu0
    %v446 = vadd.f32 0.0, %v445
    %447 = vdwg.mxu0
    %v449 = vperm.slane %v353, 0
    %451 = vmatpush.msra.mxu0 %v351
    %452 = vmatpush.msra.mxu0 %v350
    %453 = vmatpush.msra.mxu0 %v349
    %454 = vmatpush.msra.mxu0 %v348
    %455 = vmatpush.msra.mxu0 %v347
    %456 = vmatpush.msra.mxu0 %v346
    %457 = vmatpush.msra.mxu0 %v345
    %458 = vmatpush.msra.mxu0 %v344
    %459 = vmatpush.msra.mxu0 %v343
    %460 = vmatpush.msra.mxu0 %v342
    %461 = vmatpush.msra.mxu0 %v341
    %462 = vmatpush.msra.mxu0 %v340
    %463 = vmatpush.msra.mxu0 %v339
    %464 = vmatpush.msra.mxu0 %v338
    %465 = vmatpush.msra.mxu0 %v337
    %466 = vmatpush.msra.mxu0 %v336
    %467 = vmatmul.f32.gmra.mxu0 0.0
    %v468 = vpop.f32.mrf.mxu0
    %v469 = vadd.f32 %v449, %v468
    %470 = vdwg.mxu0
    %v471 = vadd.f32 %v74, %v426
    %v472 = vxor.u32 %v471, 2147483648
    %v473 = vmul.f32 %v472, 1.442695
    %v474 = vpow.pop %v473
    %v475 = vadd.f32 %v474, 1.0
    %v476 = vrcp.pop %v475
    %v477 = vmul.f32 %v475, %v476
    %v478 = vsub.f32 1.0, %v477
    %v479 = vmul.f32 %v476, %v478
    %v480 = vadd.f32 %v476, %v479
    %vm481 = vweird.f32 %v475
    %vm482 = vweird.f32 %v476
    %vm483 = vmor %vm481, %vm482
    %v484 = vsel %vm483, %v476, %v480
    %v485 = vand.u32 2147483647, %v475
    %vm486 = vcmp.eq.f32.partialorder %v485, 8.507059e+37
    %v487 = vand.u32 %v475, 2147483648
    %v488 = vor.u32 1.1754944e-38, %v487
    %v489 = vsel %vm486, %v488, %v484
    %v490 = vmul.f32 1.0, %v489
    %v491 = vadd.f32 %v119, %v446
    %v492 = vxor.u32 %v491, 2147483648
    %v493 = vmul.f32 %v492, 1.442695
    %v494 = vpow.pop %v493
    %v495 = vadd.f32 %v494, 1.0
    %v496 = vrcp.pop %v495
    %v497 = vmul.f32 %v495, %v496
    %v498 = vsub.f32 1.0, %v497
    %v499 = vmul.f32 %v496, %v498
    %v500 = vadd.f32 %v496, %v499
    %vm501 = vweird.f32 %v495
    %vm502 = vweird.f32 %v496
    %vm503 = vmor %vm501, %vm502
    %v504 = vsel %vm503, %v496, %v500
    %v505 = vand.u32 2147483647, %v495
    %vm506 = vcmp.eq.f32.partialorder %v505, 8.507059e+37
    %v507 = vand.u32 %v495, 2147483648
    %v508 = vor.u32 1.1754944e-38, %v507
    %v509 = vsel %vm506, %v508, %v504
    %v510 = vmul.f32 1.0, %v509
    %v511 = vmul.f32 %v490, %v469
    %v512 = vadd.f32 %v164, %v511
    %v513 = vtanh.pop %v512
    %v514 = vsub.f32 0.0, %v513
    %v515 = vmul.f32 %v510, %v514
    %v516 = vadd.f32 %v513, %v515
    %v517 = vsel %vm406, 1, 0
    %518 = vset.pattern.permute.xlu0 0
    %519 = vperm.xlu0 %518, %v517
    %v520 = vpop.permute.xlu0 %519
    %vm521 = vcmp.eq.s32.totalorder %v520, 1
    %v522 = vsel %vm521, %v516, 0.0
    %523 = vmatpush.msra.mxu0 %v369
    %524 = vmatpush.msra.mxu0 %v368
    %525 = vmatpush.msra.mxu0 %v367
    %526 = vmatpush.msra.mxu0 %v366
    %527 = vmatpush.msra.mxu0 %v365
    %528 = vmatpush.msra.mxu0 %v364
    %529 = vmatpush.msra.mxu0 %v363
    %530 = vmatpush.msra.mxu0 %v362
    %531 = vmatpush.msra.mxu0 %v361
    %532 = vmatpush.msra.mxu0 %v360
    %533 = vmatpush.msra.mxu0 %v359
    %534 = vmatpush.msra.mxu0 %v358
    %535 = vmatpush.msra.mxu0 %v357
    %536 = vmatpush.msra.mxu0 %v356
    %537 = vmatpush.msra.mxu0 %v355
    %538 = vmatpush.msra.mxu0 %v354
    %539 = vmatmul.f32.gmra.mxu0 0.0
    %v540 = vpop.f32.mrf.mxu0
    %v541 = vadd.f32 0.0, %v540
    %542 = vdwg.mxu0
    %543 = vmatpush.msra.mxu0 %v386
    %544 = vmatpush.msra.mxu0 %v385
    %545 = vmatpush.msra.mxu0 %v384
    %546 = vmatpush.msra.mxu0 %v383
    %547 = vmatpush.msra.mxu0 %v382
    %548 = vmatpush.msra.mxu0 %v381
    %549 = vmatpush.msra.mxu0 %v380
    %550 = vmatpush.msra.mxu0 %v379
    %551 = vmatpush.msra.mxu0 %v378
    %552 = vmatpush.msra.mxu0 %v377
    %553 = vmatpush.msra.mxu0 %v376
    %554 = vmatpush.msra.mxu0 %v375
    %555 = vmatpush.msra.mxu0 %v374
    %556 = vmatpush.msra.mxu0 %v373
    %557 = vmatpush.msra.mxu0 %v372
    %558 = vmatpush.msra.mxu0 %v371
    %559 = vmatmul.f32.gmra.mxu0 0.0
    %v560 = vpop.f32.mrf.mxu0
    %v561 = vadd.f32 0.0, %v560
    %562 = vdwg.mxu0
    %v564 = vperm.slane %v405, 0
    %566 = vmatpush.msra.mxu0 %v403
    %567 = vmatpush.msra.mxu0 %v402
    %568 = vmatpush.msra.mxu0 %v401
    %569 = vmatpush.msra.mxu0 %v400
    %570 = vmatpush.msra.mxu0 %v399
    %571 = vmatpush.msra.mxu0 %v398
    %572 = vmatpush.msra.mxu0 %v397
    %573 = vmatpush.msra.mxu0 %v396
    %574 = vmatpush.msra.mxu0 %v395
    %575 = vmatpush.msra.mxu0 %v394
    %576 = vmatpush.msra.mxu0 %v393
    %577 = vmatpush.msra.mxu0 %v392
    %578 = vmatpush.msra.mxu0 %v391
    %579 = vmatpush.msra.mxu0 %v390
    %580 = vmatpush.msra.mxu0 %v389
    %581 = vmatpush.msra.mxu0 %v388
    %582 = vmatmul.f32.gmra.mxu0 0.0
    %v583 = vpop.f32.mrf.mxu0
    %v584 = vadd.f32 %v564, %v583
    %585 = vdwg.mxu0
    %v587 = vrot.slane %v541, 2
    %v589 = vadd.f32 %v210, %v587
    %v590 = vxor.u32 %v589, 2147483648
    %v591 = vmul.f32 %v590, 1.442695
    %v592 = vpow.pop %v591
    %v593 = vadd.f32 %v592, 1.0
    %v594 = vrcp.pop %v593
    %v595 = vmul.f32 %v593, %v594
    %v596 = vsub.f32 1.0, %v595
    %v597 = vmul.f32 %v594, %v596
    %v598 = vadd.f32 %v594, %v597
    %vm599 = vweird.f32 %v593
    %vm600 = vweird.f32 %v594
    %vm601 = vmor %vm599, %vm600
    %v602 = vsel %vm601, %v594, %v598
    %v603 = vand.u32 2147483647, %v593
    %vm604 = vcmp.eq.f32.partialorder %v603, 8.507059e+37
    %v605 = vand.u32 %v593, 2147483648
    %v606 = vor.u32 1.1754944e-38, %v605
    %v607 = vsel %vm604, %v606, %v602
    %v608 = vmul.f32 1.0, %v607
    %v610 = vrot.slane %v561, 2
    %v612 = vadd.f32 %v255, %v610
    %v613 = vxor.u32 %v612, 2147483648
    %v614 = vmul.f32 %v613, 1.442695
    %v615 = vpow.pop %v614
    %v616 = vadd.f32 %v615, 1.0
    %v617 = vrcp.pop %v616
    %v618 = vmul.f32 %v616, %v617
    %v619 = vsub.f32 1.0, %v618
    %v620 = vmul.f32 %v617, %v619
    %v621 = vadd.f32 %v617, %v620
    %vm622 = vweird.f32 %v616
    %vm623 = vweird.f32 %v617
    %vm624 = vmor %vm622, %vm623
    %v625 = vsel %vm624, %v617, %v621
    %v626 = vand.u32 2147483647, %v616
    %vm627 = vcmp.eq.f32.partialorder %v626, 8.507059e+37
    %v628 = vand.u32 %v616, 2147483648
    %v629 = vor.u32 1.1754944e-38, %v628
    %v630 = vsel %vm627, %v629, %v625
    %v631 = vmul.f32 1.0, %v630
    %v633 = vrot.slane %v584, 2
    %v635 = vmul.f32 %v608, %v633
    %v636 = vadd.f32 %v300, %v635
    %v637 = vtanh.pop %v636
    %v638 = vsub.f32 0.0, %v637
    %v639 = vmul.f32 %v631, %v638
    %v640 = vadd.f32 %v637, %v639
    %v641 = vsel %vm407, 1, 0
    %642 = vset.pattern.permute.xlu0 0
    %643 = vperm.xlu0 %642, %v641
    %v644 = vpop.permute.xlu0 %643
    %vm645 = vcmp.eq.s32.totalorder %v644, 1
    %v647 = vrot.slane %v640, 6
    %v649 = vsel %vm645, %v647, 0.0
    %vm650 = vcmp.gt.s32.totalorder %v35, 1
    %vm651 = vcmp.gt.s32.totalorder %v35, 6
    %652 = vmatpush.msra.mxu0 %v317
    %653 = vmatpush.msra.mxu0 %v316
    %654 = vmatpush.msra.mxu0 %v315
    %655 = vmatpush.msra.mxu0 %v314
    %656 = vmatpush.msra.mxu0 %v313
    %657 = vmatpush.msra.mxu0 %v312
    %658 = vmatpush.msra.mxu0 %v311
    %659 = vmatpush.msra.mxu0 %v310
    %660 = vmatpush.msra.mxu0 %v309
    %661 = vmatpush.msra.mxu0 %v308
    %662 = vmatpush.msra.mxu0 %v307
    %663 = vmatpush.msra.mxu0 %v306
    %664 = vmatpush.msra.mxu0 %v305
    %665 = vmatpush.msra.mxu0 %v304
    %666 = vmatpush.msra.mxu0 %v303
    %667 = vmatpush.msra.mxu0 %v302
    %668 = vmatmul.f32.gmra.mxu0 %v522
    %v669 = vpop.f32.mrf.mxu0
    %v670 = vadd.f32 0.0, %v669
    %671 = vdwg.mxu0
    %672 = vmatpush.msra.mxu0 %v334
    %673 = vmatpush.msra.mxu0 %v333
    %674 = vmatpush.msra.mxu0 %v332
    %675 = vmatpush.msra.mxu0 %v331
    %676 = vmatpush.msra.mxu0 %v330
    %677 = vmatpush.msra.mxu0 %v329
    %678 = vmatpush.msra.mxu0 %v328
    %679 = vmatpush.msra.mxu0 %v327
    %680 = vmatpush.msra.mxu0 %v326
    %681 = vmatpush.msra.mxu0 %v325
    %682 = vmatpush.msra.mxu0 %v324
    %683 = vmatpush.msra.mxu0 %v323
    %684 = vmatpush.msra.mxu0 %v322
    %685 = vmatpush.msra.mxu0 %v321
    %686 = vmatpush.msra.mxu0 %v320
    %687 = vmatpush.msra.mxu0 %v319
    %688 = vmatmul.f32.gmra.mxu0 %v522
    %v689 = vpop.f32.mrf.mxu0
    %v690 = vadd.f32 0.0, %v689
    %691 = vdwg.mxu0
    %692 = vmatpush.msra.mxu0 %v351
    %693 = vmatpush.msra.mxu0 %v350
    %694 = vmatpush.msra.mxu0 %v349
    %695 = vmatpush.msra.mxu0 %v348
    %696 = vmatpush.msra.mxu0 %v347
    %697 = vmatpush.msra.mxu0 %v346
    %698 = vmatpush.msra.mxu0 %v345
    %699 = vmatpush.msra.mxu0 %v344
    %700 = vmatpush.msra.mxu0 %v343
    %701 = vmatpush.msra.mxu0 %v342
    %702 = vmatpush.msra.mxu0 %v341
    %703 = vmatpush.msra.mxu0 %v340
    %704 = vmatpush.msra.mxu0 %v339
    %705 = vmatpush.msra.mxu0 %v338
    %706 = vmatpush.msra.mxu0 %v337
    %707 = vmatpush.msra.mxu0 %v336
    %708 = vmatmul.f32.gmra.mxu0 %v522
    %v709 = vpop.f32.mrf.mxu0
    %v710 = vadd.f32 %v449, %v709
    %711 = vdwg.mxu0
    %v713 = vrot.slane %v670, 6
    %v715 = vadd.f32 %v74, %v713
    %v716 = vxor.u32 %v715, 2147483648
    %v717 = vmul.f32 %v716, 1.442695
    %v718 = vpow.pop %v717
    %v719 = vadd.f32 %v718, 1.0
    %v720 = vrcp.pop %v719
    %v721 = vmul.f32 %v719, %v720
    %v722 = vsub.f32 1.0, %v721
    %v723 = vmul.f32 %v720, %v722
    %v724 = vadd.f32 %v720, %v723
    %vm725 = vweird.f32 %v719
    %vm726 = vweird.f32 %v720
    %vm727 = vmor %vm725, %vm726
    %v728 = vsel %vm727, %v720, %v724
    %v729 = vand.u32 2147483647, %v719
    %vm730 = vcmp.eq.f32.partialorder %v729, 8.507059e+37
    %v731 = vand.u32 %v719, 2147483648
    %v732 = vor.u32 1.1754944e-38, %v731
    %v733 = vsel %vm730, %v732, %v728
    %v734 = vmul.f32 1.0, %v733
    %v736 = vrot.slane %v690, 6
    %v738 = vadd.f32 %v119, %v736
    %v739 = vxor.u32 %v738, 2147483648
    %v740 = vmul.f32 %v739, 1.442695
    %v741 = vpow.pop %v740
    %v742 = vadd.f32 %v741, 1.0
    %v743 = vrcp.pop %v742
    %v744 = vmul.f32 %v742, %v743
    %v745 = vsub.f32 1.0, %v744
    %v746 = vmul.f32 %v743, %v745
    %v747 = vadd.f32 %v743, %v746
    %vm748 = vweird.f32 %v742
    %vm749 = vweird.f32 %v743
    %vm750 = vmor %vm748, %vm749
    %v751 = vsel %vm750, %v743, %v747
    %v752 = vand.u32 2147483647, %v742
    %vm753 = vcmp.eq.f32.partialorder %v752, 8.507059e+37
    %v754 = vand.u32 %v742, 2147483648
    %v755 = vor.u32 1.1754944e-38, %v754
    %v756 = vsel %vm753, %v755, %v751
    %v757 = vmul.f32 1.0, %v756
    %v759 = vrot.slane %v710, 6
    %v761 = vmul.f32 %v734, %v759
    %v762 = vadd.f32 %v164, %v761
    %v763 = vtanh.pop %v762
    %v765 = vrot.slane %v763, 2
    %v767 = vsub.f32 %v522, %v765
    %v769 = vrot.slane %v767, 6
    %v771 = vmul.f32 %v757, %v769
    %v772 = vadd.f32 %v763, %v771
    %v773 = vsel %vm650, 1, 0
    %774 = vset.pattern.permute.xlu0 0
    %775 = vperm.xlu0 %774, %v773
    %v776 = vpop.permute.xlu0 %775
    %vm777 = vcmp.eq.s32.totalorder %v776, 1
    %v779 = vrot.slane %v772, 2
    %v781 = vsel %vm777, %v779, %v522
    %v782 = vsel %vm777, %v779, 0.0
    %783 = vmatpush.msra.mxu0 %v369
    %784 = vmatpush.msra.mxu0 %v368
    %785 = vmatpush.msra.mxu0 %v367
    %786 = vmatpush.msra.mxu0 %v366
    %787 = vmatpush.msra.mxu0 %v365
    %788 = vmatpush.msra.mxu0 %v364
    %789 = vmatpush.msra.mxu0 %v363
    %790 = vmatpush.msra.mxu0 %v362
    %791 = vmatpush.msra.mxu0 %v361
    %792 = vmatpush.msra.mxu0 %v360
    %793 = vmatpush.msra.mxu0 %v359
    %794 = vmatpush.msra.mxu0 %v358
    %795 = vmatpush.msra.mxu0 %v357
    %796 = vmatpush.msra.mxu0 %v356
    %797 = vmatpush.msra.mxu0 %v355
    %798 = vmatpush.msra.mxu0 %v354
    %799 = vmatmul.f32.gmra.mxu0 %v649
    %v800 = vpop.f32.mrf.mxu0
    %v801 = vadd.f32 0.0, %v800
    %802 = vdwg.mxu0
    %803 = vmatpush.msra.mxu0 %v386
    %804 = vmatpush.msra.mxu0 %v385
    %805 = vmatpush.msra.mxu0 %v384
    %806 = vmatpush.msra.mxu0 %v383
    %807 = vmatpush.msra.mxu0 %v382
    %808 = vmatpush.msra.mxu0 %v381
    %809 = vmatpush.msra.mxu0 %v380
    %810 = vmatpush.msra.mxu0 %v379
    %811 = vmatpush.msra.mxu0 %v378
    %812 = vmatpush.msra.mxu0 %v377
    %813 = vmatpush.msra.mxu0 %v376
    %814 = vmatpush.msra.mxu0 %v375
    %815 = vmatpush.msra.mxu0 %v374
    %816 = vmatpush.msra.mxu0 %v373
    %817 = vmatpush.msra.mxu0 %v372
    %818 = vmatpush.msra.mxu0 %v371
    %819 = vmatmul.f32.gmra.mxu0 %v649
    %v820 = vpop.f32.mrf.mxu0
    %v821 = vadd.f32 0.0, %v820
    %822 = vdwg.mxu0
    %823 = vmatpush.msra.mxu0 %v403
    %824 = vmatpush.msra.mxu0 %v402
    %825 = vmatpush.msra.mxu0 %v401
    %826 = vmatpush.msra.mxu0 %v400
    %827 = vmatpush.msra.mxu0 %v399
    %828 = vmatpush.msra.mxu0 %v398
    %829 = vmatpush.msra.mxu0 %v397
    %830 = vmatpush.msra.mxu0 %v396
    %831 = vmatpush.msra.mxu0 %v395
    %832 = vmatpush.msra.mxu0 %v394
    %833 = vmatpush.msra.mxu0 %v393
    %834 = vmatpush.msra.mxu0 %v392
    %835 = vmatpush.msra.mxu0 %v391
    %836 = vmatpush.msra.mxu0 %v390
    %837 = vmatpush.msra.mxu0 %v389
    %838 = vmatpush.msra.mxu0 %v388
    %839 = vmatmul.f32.gmra.mxu0 %v649
    %v840 = vpop.f32.mrf.mxu0
    %v841 = vadd.f32 %v564, %v840
    %842 = vdwg.mxu0
    %v844 = vrot.slane %v801, 4
    %v846 = vadd.f32 %v210, %v844
    %v847 = vxor.u32 %v846, 2147483648
    %v848 = vmul.f32 %v847, 1.442695
    %v849 = vpow.pop %v848
    %v850 = vadd.f32 %v849, 1.0
    %v851 = vrcp.pop %v850
    %v852 = vmul.f32 %v850, %v851
    %v853 = vsub.f32 1.0, %v852
    %v854 = vmul.f32 %v851, %v853
    %v855 = vadd.f32 %v851, %v854
    %vm856 = vweird.f32 %v850
    %vm857 = vweird.f32 %v851
    %vm858 = vmor %vm856, %vm857
    %v859 = vsel %vm858, %v851, %v855
    %v860 = vand.u32 2147483647, %v850
    %vm861 = vcmp.eq.f32.partialorder %v860, 8.507059e+37
    %v862 = vand.u32 %v850, 2147483648
    %v863 = vor.u32 1.1754944e-38, %v862
    %v864 = vsel %vm861, %v863, %v859
    %v865 = vmul.f32 1.0, %v864
    %v867 = vrot.slane %v821, 4
    %v869 = vadd.f32 %v255, %v867
    %v870 = vxor.u32 %v869, 2147483648
    %v871 = vmul.f32 %v870, 1.442695
    %v872 = vpow.pop %v871
    %v873 = vadd.f32 %v872, 1.0
    %v874 = vrcp.pop %v873
    %v875 = vmul.f32 %v873, %v874
    %v876 = vsub.f32 1.0, %v875
    %v877 = vmul.f32 %v874, %v876
    %v878 = vadd.f32 %v874, %v877
    %vm879 = vweird.f32 %v873
    %vm880 = vweird.f32 %v874
    %vm881 = vmor %vm879, %vm880
    %v882 = vsel %vm881, %v874, %v878
    %v883 = vand.u32 2147483647, %v873
    %vm884 = vcmp.eq.f32.partialorder %v883, 8.507059e+37
    %v885 = vand.u32 %v873, 2147483648
    %v886 = vor.u32 1.1754944e-38, %v885
    %v887 = vsel %vm884, %v886, %v882
    %v888 = vmul.f32 1.0, %v887
    %v890 = vrot.slane %v841, 4
    %v892 = vmul.f32 %v865, %v890
    %v893 = vadd.f32 %v300, %v892
    %v894 = vtanh.pop %v893
    %v896 = vrot.slane %v894, 4
    %v898 = vsub.f32 %v649, %v896
    %v900 = vrot.slane %v898, 4
    %v902 = vmul.f32 %v888, %v900
    %v903 = vadd.f32 %v894, %v902
    %v904 = vsel %vm651, 1, 0
    %905 = vset.pattern.permute.xlu0 0
    %906 = vperm.xlu0 %905, %v904
    %v907 = vpop.permute.xlu0 %906
    %vm908 = vcmp.eq.s32.totalorder %v907, 1
    %v910 = vrot.slane %v903, 4
    %v912 = vsel %vm908, %v910, %v649
    %v913 = vsel %vm908, %v910, 0.0
    %vm914 = vcmp.gt.s32.totalorder %v35, 2
    %vm915 = vcmp.gt.s32.totalorder %v35, 5
    %916 = vmatpush.msra.mxu0 %v317
    %917 = vmatpush.msra.mxu0 %v316
    %918 = vmatpush.msra.mxu0 %v315
    %919 = vmatpush.msra.mxu0 %v314
    %920 = vmatpush.msra.mxu0 %v313
    %921 = vmatpush.msra.mxu0 %v312
    %922 = vmatpush.msra.mxu0 %v311
    %923 = vmatpush.msra.mxu0 %v310
    %924 = vmatpush.msra.mxu0 %v309
    %925 = vmatpush.msra.mxu0 %v308
    %926 = vmatpush.msra.mxu0 %v307
    %927 = vmatpush.msra.mxu0 %v306
    %928 = vmatpush.msra.mxu0 %v305
    %929 = vmatpush.msra.mxu0 %v304
    %930 = vmatpush.msra.mxu0 %v303
    %931 = vmatpush.msra.mxu0 %v302
    %932 = vmatmul.f32.gmra.mxu0 %v781
    %v933 = vpop.f32.mrf.mxu0
    %v934 = vadd.f32 0.0, %v933
    %935 = vdwg.mxu0
    %936 = vmatpush.msra.mxu0 %v334
    %937 = vmatpush.msra.mxu0 %v333
    %938 = vmatpush.msra.mxu0 %v332
    %939 = vmatpush.msra.mxu0 %v331
    %940 = vmatpush.msra.mxu0 %v330
    %941 = vmatpush.msra.mxu0 %v329
    %942 = vmatpush.msra.mxu0 %v328
    %943 = vmatpush.msra.mxu0 %v327
    %944 = vmatpush.msra.mxu0 %v326
    %945 = vmatpush.msra.mxu0 %v325
    %946 = vmatpush.msra.mxu0 %v324
    %947 = vmatpush.msra.mxu0 %v323
    %948 = vmatpush.msra.mxu0 %v322
    %949 = vmatpush.msra.mxu0 %v321
    %950 = vmatpush.msra.mxu0 %v320
    %951 = vmatpush.msra.mxu0 %v319
    %952 = vmatmul.f32.gmra.mxu0 %v781
    %v953 = vpop.f32.mrf.mxu0
    %v954 = vadd.f32 0.0, %v953
    %955 = vdwg.mxu0
    %956 = vmatpush.msra.mxu0 %v351
    %957 = vmatpush.msra.mxu0 %v350
    %958 = vmatpush.msra.mxu0 %v349
    %959 = vmatpush.msra.mxu0 %v348
    %960 = vmatpush.msra.mxu0 %v347
    %961 = vmatpush.msra.mxu0 %v346
    %962 = vmatpush.msra.mxu0 %v345
    %963 = vmatpush.msra.mxu0 %v344
    %964 = vmatpush.msra.mxu0 %v343
    %965 = vmatpush.msra.mxu0 %v342
    %966 = vmatpush.msra.mxu0 %v341
    %967 = vmatpush.msra.mxu0 %v340
    %968 = vmatpush.msra.mxu0 %v339
    %969 = vmatpush.msra.mxu0 %v338
    %970 = vmatpush.msra.mxu0 %v337
    %971 = vmatpush.msra.mxu0 %v336
    %972 = vmatmul.f32.gmra.mxu0 %v781
    %v973 = vpop.f32.mrf.mxu0
    %v974 = vadd.f32 %v449, %v973
    %975 = vdwg.mxu0
    %v977 = vrot.slane %v934, 4
    %v979 = vadd.f32 %v74, %v977
    %v980 = vxor.u32 %v979, 2147483648
    %v981 = vmul.f32 %v980, 1.442695
    %v982 = vpow.pop %v981
    %v983 = vadd.f32 %v982, 1.0
    %v984 = vrcp.pop %v983
    %v985 = vmul.f32 %v983, %v984
    %v986 = vsub.f32 1.0, %v985
    %v987 = vmul.f32 %v984, %v986
    %v988 = vadd.f32 %v984, %v987
    %vm989 = vweird.f32 %v983
    %vm990 = vweird.f32 %v984
    %vm991 = vmor %vm989, %vm990
    %v992 = vsel %vm991, %v984, %v988
    %v993 = vand.u32 2147483647, %v983
    %vm994 = vcmp.eq.f32.partialorder %v993, 8.507059e+37
    %v995 = vand.u32 %v983, 2147483648
    %v996 = vor.u32 1.1754944e-38, %v995
    %v997 = vsel %vm994, %v996, %v992
    %v998 = vmul.f32 1.0, %v997
    %v1000 = vrot.slane %v954, 4
    %v1002 = vadd.f32 %v119, %v1000
    %v1003 = vxor.u32 %v1002, 2147483648
    %v1004 = vmul.f32 %v1003, 1.442695
    %v1005 = vpow.pop %v1004
    %v1006 = vadd.f32 %v1005, 1.0
    %v1007 = vrcp.pop %v1006
    %v1008 = vmul.f32 %v1006, %v1007
    %v1009 = vsub.f32 1.0, %v1008
    %v1010 = vmul.f32 %v1007, %v1009
    %v1011 = vadd.f32 %v1007, %v1010
    %vm1012 = vweird.f32 %v1006
    %vm1013 = vweird.f32 %v1007
    %vm1014 = vmor %vm1012, %vm1013
    %v1015 = vsel %vm1014, %v1007, %v1011
    %v1016 = vand.u32 2147483647, %v1006
    %vm1017 = vcmp.eq.f32.partialorder %v1016, 8.507059e+37
    %v1018 = vand.u32 %v1006, 2147483648
    %v1019 = vor.u32 1.1754944e-38, %v1018
    %v1020 = vsel %vm1017, %v1019, %v1015
    %v1021 = vmul.f32 1.0, %v1020
    %v1023 = vrot.slane %v974, 4
    %v1025 = vmul.f32 %v998, %v1023
    %v1026 = vadd.f32 %v164, %v1025
    %v1027 = vtanh.pop %v1026
    %v1029 = vrot.slane %v1027, 4
    %v1031 = vsub.f32 %v781, %v1029
    %v1033 = vrot.slane %v1031, 4
    %v1035 = vmul.f32 %v1021, %v1033
    %v1036 = vadd.f32 %v1027, %v1035
    %v1037 = vsel %vm914, 1, 0
    %1038 = vset.pattern.permute.xlu0 0
    %1039 = vperm.xlu0 %1038, %v1037
    %v1040 = vpop.permute.xlu0 %1039
    %vm1041 = vcmp.eq.s32.totalorder %v1040, 1
    %v1043 = vrot.slane %v1036, 4
    %v1045 = vsel %vm1041, %v1043, %v781
    %v1046 = vsel %vm1041, %v1043, 0.0
    %1047 = vmatpush.msra.mxu0 %v369
    %1048 = vmatpush.msra.mxu0 %v368
    %1049 = vmatpush.msra.mxu0 %v367
    %1050 = vmatpush.msra.mxu0 %v366
    %1051 = vmatpush.msra.mxu0 %v365
    %1052 = vmatpush.msra.mxu0 %v364
    %1053 = vmatpush.msra.mxu0 %v363
    %1054 = vmatpush.msra.mxu0 %v362
    %1055 = vmatpush.msra.mxu0 %v361
    %1056 = vmatpush.msra.mxu0 %v360
    %1057 = vmatpush.msra.mxu0 %v359
    %1058 = vmatpush.msra.mxu0 %v358
    %1059 = vmatpush.msra.mxu0 %v357
    %1060 = vmatpush.msra.mxu0 %v356
    %1061 = vmatpush.msra.mxu0 %v355
    %1062 = vmatpush.msra.mxu0 %v354
    %1063 = vmatmul.f32.gmra.mxu0 %v912
    %v1064 = vpop.f32.mrf.mxu0
    %v1065 = vadd.f32 0.0, %v1064
    %1066 = vdwg.mxu0
    %1067 = vmatpush.msra.mxu0 %v386
    %1068 = vmatpush.msra.mxu0 %v385
    %1069 = vmatpush.msra.mxu0 %v384
    %1070 = vmatpush.msra.mxu0 %v383
    %1071 = vmatpush.msra.mxu0 %v382
    %1072 = vmatpush.msra.mxu0 %v381
    %1073 = vmatpush.msra.mxu0 %v380
    %1074 = vmatpush.msra.mxu0 %v379
    %1075 = vmatpush.msra.mxu0 %v378
    %1076 = vmatpush.msra.mxu0 %v377
    %1077 = vmatpush.msra.mxu0 %v376
    %1078 = vmatpush.msra.mxu0 %v375
    %1079 = vmatpush.msra.mxu0 %v374
    %1080 = vmatpush.msra.mxu0 %v373
    %1081 = vmatpush.msra.mxu0 %v372
    %1082 = vmatpush.msra.mxu0 %v371
    %1083 = vmatmul.f32.gmra.mxu0 %v912
    %v1084 = vpop.f32.mrf.mxu0
    %v1085 = vadd.f32 0.0, %v1084
    %1086 = vdwg.mxu0
    %1087 = vmatpush.msra.mxu0 %v403
    %1088 = vmatpush.msra.mxu0 %v402
    %1089 = vmatpush.msra.mxu0 %v401
    %1090 = vmatpush.msra.mxu0 %v400
    %1091 = vmatpush.msra.mxu0 %v399
    %1092 = vmatpush.msra.mxu0 %v398
    %1093 = vmatpush.msra.mxu0 %v397
    %1094 = vmatpush.msra.mxu0 %v396
    %1095 = vmatpush.msra.mxu0 %v395
    %1096 = vmatpush.msra.mxu0 %v394
    %1097 = vmatpush.msra.mxu0 %v393
    %1098 = vmatpush.msra.mxu0 %v392
    %1099 = vmatpush.msra.mxu0 %v391
    %1100 = vmatpush.msra.mxu0 %v390
    %1101 = vmatpush.msra.mxu0 %v389
    %1102 = vmatpush.msra.mxu0 %v388
    %1103 = vmatmul.f32.gmra.mxu0 %v912
    %v1104 = vpop.f32.mrf.mxu0
    %v1105 = vadd.f32 %v564, %v1104
    %1106 = vdwg.mxu0
    %v1108 = vrot.slane %v1065, 6
    %v1110 = vadd.f32 %v210, %v1108
    %v1111 = vxor.u32 %v1110, 2147483648
    %v1112 = vmul.f32 %v1111, 1.442695
    %v1113 = vpow.pop %v1112
    %v1114 = vadd.f32 %v1113, 1.0
    %v1115 = vrcp.pop %v1114
    %v1116 = vmul.f32 %v1114, %v1115
    %v1117 = vsub.f32 1.0, %v1116
    %v1118 = vmul.f32 %v1115, %v1117
    %v1119 = vadd.f32 %v1115, %v1118
    %vm1120 = vweird.f32 %v1114
    %vm1121 = vweird.f32 %v1115
    %vm1122 = vmor %vm1120, %vm1121
    %v1123 = vsel %vm1122, %v1115, %v1119
    %v1124 = vand.u32 2147483647, %v1114
    %vm1125 = vcmp.eq.f32.partialorder %v1124, 8.507059e+37
    %v1126 = vand.u32 %v1114, 2147483648
    %v1127 = vor.u32 1.1754944e-38, %v1126
    %v1128 = vsel %vm1125, %v1127, %v1123
    %v1129 = vmul.f32 1.0, %v1128
    %v1131 = vrot.slane %v1085, 6
    %v1133 = vadd.f32 %v255, %v1131
    %v1134 = vxor.u32 %v1133, 2147483648
    %v1135 = vmul.f32 %v1134, 1.442695
    %v1136 = vpow.pop %v1135
    %v1137 = vadd.f32 %v1136, 1.0
    %v1138 = vrcp.pop %v1137
    %v1139 = vmul.f32 %v1137, %v1138
    %v1140 = vsub.f32 1.0, %v1139
    %v1141 = vmul.f32 %v1138, %v1140
    %v1142 = vadd.f32 %v1138, %v1141
    %vm1143 = vweird.f32 %v1137
    %vm1144 = vweird.f32 %v1138
    %vm1145 = vmor %vm1143, %vm1144
    %v1146 = vsel %vm1145, %v1138, %v1142
    %v1147 = vand.u32 2147483647, %v1137
    %vm1148 = vcmp.eq.f32.partialorder %v1147, 8.507059e+37
    %v1149 = vand.u32 %v1137, 2147483648
    %v1150 = vor.u32 1.1754944e-38, %v1149
    %v1151 = vsel %vm1148, %v1150, %v1146
    %v1152 = vmul.f32 1.0, %v1151
    %v1154 = vrot.slane %v1105, 6
    %v1156 = vmul.f32 %v1129, %v1154
    %v1157 = vadd.f32 %v300, %v1156
    %v1158 = vtanh.pop %v1157
    %v1160 = vrot.slane %v1158, 2
    %v1162 = vsub.f32 %v912, %v1160
    %v1164 = vrot.slane %v1162, 6
    %v1166 = vmul.f32 %v1152, %v1164
    %v1167 = vadd.f32 %v1158, %v1166
    %v1168 = vsel %vm915, 1, 0
    %1169 = vset.pattern.permute.xlu0 0
    %1170 = vperm.xlu0 %1169, %v1168
    %v1171 = vpop.permute.xlu0 %1170
    %vm1172 = vcmp.eq.s32.totalorder %v1171, 1
    %v1174 = vrot.slane %v1167, 2
    %v1176 = vsel %vm1172, %v1174, %v912
    %v1177 = vsel %vm1172, %v1174, 0.0
    %vm1178 = vcmp.gt.s32.totalorder %v35, 3
    %vm1179 = vcmp.gt.s32.totalorder %v35, 4
    %1180 = vmatpush.msra.mxu0 %v317
    %1181 = vmatpush.msra.mxu0 %v316
    %1182 = vmatpush.msra.mxu0 %v315
    %1183 = vmatpush.msra.mxu0 %v314
    %1184 = vmatpush.msra.mxu0 %v313
    %1185 = vmatpush.msra.mxu0 %v312
    %1186 = vmatpush.msra.mxu0 %v311
    %1187 = vmatpush.msra.mxu0 %v310
    %1188 = vmatpush.msra.mxu0 %v309
    %1189 = vmatpush.msra.mxu0 %v308
    %1190 = vmatpush.msra.mxu0 %v307
    %1191 = vmatpush.msra.mxu0 %v306
    %1192 = vmatpush.msra.mxu0 %v305
    %1193 = vmatpush.msra.mxu0 %v304
    %1194 = vmatpush.msra.mxu0 %v303
    %1195 = vmatpush.msra.mxu0 %v302
    %1196 = vmatmul.f32.gmra.mxu0 %v1045
    %v1197 = vpop.f32.mrf.mxu0
    %v1198 = vadd.f32 0.0, %v1197
    %1199 = vdwg.mxu0
    %1200 = vmatpush.msra.mxu0 %v334
    %1201 = vmatpush.msra.mxu0 %v333
    %1202 = vmatpush.msra.mxu0 %v332
    %1203 = vmatpush.msra.mxu0 %v331
    %1204 = vmatpush.msra.mxu0 %v330
    %1205 = vmatpush.msra.mxu0 %v329
    %1206 = vmatpush.msra.mxu0 %v328
    %1207 = vmatpush.msra.mxu0 %v327
    %1208 = vmatpush.msra.mxu0 %v326
    %1209 = vmatpush.msra.mxu0 %v325
    %1210 = vmatpush.msra.mxu0 %v324
    %1211 = vmatpush.msra.mxu0 %v323
    %1212 = vmatpush.msra.mxu0 %v322
    %1213 = vmatpush.msra.mxu0 %v321
    %1214 = vmatpush.msra.mxu0 %v320
    %1215 = vmatpush.msra.mxu0 %v319
    %1216 = vmatmul.f32.gmra.mxu0 %v1045
    %v1217 = vpop.f32.mrf.mxu0
    %v1218 = vadd.f32 0.0, %v1217
    %1219 = vdwg.mxu0
    %1220 = vmatpush.msra.mxu0 %v351
    %1221 = vmatpush.msra.mxu0 %v350
    %1222 = vmatpush.msra.mxu0 %v349
    %1223 = vmatpush.msra.mxu0 %v348
    %1224 = vmatpush.msra.mxu0 %v347
    %1225 = vmatpush.msra.mxu0 %v346
    %1226 = vmatpush.msra.mxu0 %v345
    %1227 = vmatpush.msra.mxu0 %v344
    %1228 = vmatpush.msra.mxu0 %v343
    %1229 = vmatpush.msra.mxu0 %v342
    %1230 = vmatpush.msra.mxu0 %v341
    %1231 = vmatpush.msra.mxu0 %v340
    %1232 = vmatpush.msra.mxu0 %v339
    %1233 = vmatpush.msra.mxu0 %v338
    %1234 = vmatpush.msra.mxu0 %v337
    %1235 = vmatpush.msra.mxu0 %v336
    %1236 = vmatmul.f32.gmra.mxu0 %v1045
    %v1237 = vpop.f32.mrf.mxu0
    %v1238 = vadd.f32 %v449, %v1237
    %1239 = vdwg.mxu0
    %v1241 = vrot.slane %v1198, 2
    %v1243 = vadd.f32 %v74, %v1241
    %v1244 = vxor.u32 %v1243, 2147483648
    %v1245 = vmul.f32 %v1244, 1.442695
    %v1246 = vpow.pop %v1245
    %v1247 = vadd.f32 %v1246, 1.0
    %v1248 = vrcp.pop %v1247
    %v1249 = vmul.f32 %v1247, %v1248
    %v1250 = vsub.f32 1.0, %v1249
    %v1251 = vmul.f32 %v1248, %v1250
    %v1252 = vadd.f32 %v1248, %v1251
    %vm1253 = vweird.f32 %v1247
    %vm1254 = vweird.f32 %v1248
    %vm1255 = vmor %vm1253, %vm1254
    %v1256 = vsel %vm1255, %v1248, %v1252
    %v1257 = vand.u32 2147483647, %v1247
    %vm1258 = vcmp.eq.f32.partialorder %v1257, 8.507059e+37
    %v1259 = vand.u32 %v1247, 2147483648
    %v1260 = vor.u32 1.1754944e-38, %v1259
    %v1261 = vsel %vm1258, %v1260, %v1256
    %v1262 = vmul.f32 1.0, %v1261
    %v1264 = vrot.slane %v1218, 2
    %v1266 = vadd.f32 %v119, %v1264
    %v1267 = vxor.u32 %v1266, 2147483648
    %v1268 = vmul.f32 %v1267, 1.442695
    %v1269 = vpow.pop %v1268
    %v1270 = vadd.f32 %v1269, 1.0
    %v1271 = vrcp.pop %v1270
    %v1272 = vmul.f32 %v1270, %v1271
    %v1273 = vsub.f32 1.0, %v1272
    %v1274 = vmul.f32 %v1271, %v1273
    %v1275 = vadd.f32 %v1271, %v1274
    %vm1276 = vweird.f32 %v1270
    %vm1277 = vweird.f32 %v1271
    %vm1278 = vmor %vm1276, %vm1277
    %v1279 = vsel %vm1278, %v1271, %v1275
    %v1280 = vand.u32 2147483647, %v1270
    %vm1281 = vcmp.eq.f32.partialorder %v1280, 8.507059e+37
    %v1282 = vand.u32 %v1270, 2147483648
    %v1283 = vor.u32 1.1754944e-38, %v1282
    %v1284 = vsel %vm1281, %v1283, %v1279
    %v1285 = vmul.f32 1.0, %v1284
    %v1287 = vrot.slane %v1238, 2
    %v1289 = vmul.f32 %v1262, %v1287
    %v1290 = vadd.f32 %v164, %v1289
    %v1291 = vtanh.pop %v1290
    %v1293 = vrot.slane %v1291, 6
    %v1295 = vsub.f32 %v1045, %v1293
    %v1297 = vrot.slane %v1295, 2
    %v1299 = vmul.f32 %v1285, %v1297
    %v1300 = vadd.f32 %v1291, %v1299
    %v1301 = vsel %vm1178, 1, 0
    %1302 = vset.pattern.permute.xlu0 0
    %1303 = vperm.xlu0 %1302, %v1301
    %v1304 = vpop.permute.xlu0 %1303
    %vm1305 = vcmp.eq.s32.totalorder %v1304, 1
    %v1307 = vrot.slane %v1300, 6
    %v1309 = vsel %vm1305, %v1307, %v1045
    %v1310 = vsel %vm1305, %v1307, 0.0
    %1311 = vmatpush.msra.mxu0 %v369
    %1312 = vmatpush.msra.mxu0 %v368
    %1313 = vmatpush.msra.mxu0 %v367
    %1314 = vmatpush.msra.mxu0 %v366
    %1315 = vmatpush.msra.mxu0 %v365
    %1316 = vmatpush.msra.mxu0 %v364
    %1317 = vmatpush.msra.mxu0 %v363
    %1318 = vmatpush.msra.mxu0 %v362
    %1319 = vmatpush.msra.mxu0 %v361
    %1320 = vmatpush.msra.mxu0 %v360
    %1321 = vmatpush.msra.mxu0 %v359
    %1322 = vmatpush.msra.mxu0 %v358
    %1323 = vmatpush.msra.mxu0 %v357
    %1324 = vmatpush.msra.mxu0 %v356
    %1325 = vmatpush.msra.mxu0 %v355
    %1326 = vmatpush.msra.mxu0 %v354
    %1327 = vmatmul.f32.gmra.mxu0 %v1176
    %v1328 = vpop.f32.mrf.mxu0
    %v1329 = vadd.f32 0.0, %v1328
    %1330 = vdwg.mxu0
    %1331 = vmatpush.msra.mxu0 %v386
    %1332 = vmatpush.msra.mxu0 %v385
    %1333 = vmatpush.msra.mxu0 %v384
    %1334 = vmatpush.msra.mxu0 %v383
    %1335 = vmatpush.msra.mxu0 %v382
    %1336 = vmatpush.msra.mxu0 %v381
    %1337 = vmatpush.msra.mxu0 %v380
    %1338 = vmatpush.msra.mxu0 %v379
    %1339 = vmatpush.msra.mxu0 %v378
    %1340 = vmatpush.msra.mxu0 %v377
    %1341 = vmatpush.msra.mxu0 %v376
    %1342 = vmatpush.msra.mxu0 %v375
    %1343 = vmatpush.msra.mxu0 %v374
    %1344 = vmatpush.msra.mxu0 %v373
    %1345 = vmatpush.msra.mxu0 %v372
    %1346 = vmatpush.msra.mxu0 %v371
    %1347 = vmatmul.f32.gmra.mxu0 %v1176
    %v1348 = vpop.f32.mrf.mxu0
    %v1349 = vadd.f32 0.0, %v1348
    %1350 = vdwg.mxu0
    %1351 = vmatpush.msra.mxu0 %v403
    %1352 = vmatpush.msra.mxu0 %v402
    %1353 = vmatpush.msra.mxu0 %v401
    %1354 = vmatpush.msra.mxu0 %v400
    %1355 = vmatpush.msra.mxu0 %v399
    %1356 = vmatpush.msra.mxu0 %v398
    %1357 = vmatpush.msra.mxu0 %v397
    %1358 = vmatpush.msra.mxu0 %v396
    %1359 = vmatpush.msra.mxu0 %v395
    %1360 = vmatpush.msra.mxu0 %v394
    %1361 = vmatpush.msra.mxu0 %v393
    %1362 = vmatpush.msra.mxu0 %v392
    %1363 = vmatpush.msra.mxu0 %v391
    %1364 = vmatpush.msra.mxu0 %v390
    %1365 = vmatpush.msra.mxu0 %v389
    %1366 = vmatpush.msra.mxu0 %v388
    %1367 = vmatmul.f32.gmra.mxu0 %v1176
    %v1368 = vpop.f32.mrf.mxu0
    %v1369 = vadd.f32 %v564, %v1368
    %1370 = vdwg.mxu0
    %v1371 = vadd.f32 %v210, %v1329
    %v1372 = vxor.u32 %v1371, 2147483648
    %v1373 = vmul.f32 %v1372, 1.442695
    %v1374 = vpow.pop %v1373
    %v1375 = vadd.f32 %v1374, 1.0
    %v1376 = vrcp.pop %v1375
    %v1377 = vmul.f32 %v1375, %v1376
    %v1378 = vsub.f32 1.0, %v1377
    %v1379 = vmul.f32 %v1376, %v1378
    %v1380 = vadd.f32 %v1376, %v1379
    %vm1381 = vweird.f32 %v1375
    %vm1382 = vweird.f32 %v1376
    %vm1383 = vmor %vm1381, %vm1382
    %v1384 = vsel %vm1383, %v1376, %v1380
    %v1385 = vand.u32 2147483647, %v1375
    %vm1386 = vcmp.eq.f32.partialorder %v1385, 8.507059e+37
    %v1387 = vand.u32 %v1375, 2147483648
    %v1388 = vor.u32 1.1754944e-38, %v1387
    %v1389 = vsel %vm1386, %v1388, %v1384
    %v1390 = vmul.f32 1.0, %v1389
    %v1391 = vadd.f32 %v255, %v1349
    %v1392 = vxor.u32 %v1391, 2147483648
    %v1393 = vmul.f32 %v1392, 1.442695
    %v1394 = vpow.pop %v1393
    %v1395 = vadd.f32 %v1394, 1.0
    %v1396 = vrcp.pop %v1395
    %v1397 = vmul.f32 %v1395, %v1396
    %v1398 = vsub.f32 1.0, %v1397
    %v1399 = vmul.f32 %v1396, %v1398
    %v1400 = vadd.f32 %v1396, %v1399
    %vm1401 = vweird.f32 %v1395
    %vm1402 = vweird.f32 %v1396
    %vm1403 = vmor %vm1401, %vm1402
    %v1404 = vsel %vm1403, %v1396, %v1400
    %v1405 = vand.u32 2147483647, %v1395
    %vm1406 = vcmp.eq.f32.partialorder %v1405, 8.507059e+37
    %v1407 = vand.u32 %v1395, 2147483648
    %v1408 = vor.u32 1.1754944e-38, %v1407
    %v1409 = vsel %vm1406, %v1408, %v1404
    %v1410 = vmul.f32 1.0, %v1409
    %v1411 = vmul.f32 %v1390, %v1369
    %v1412 = vadd.f32 %v300, %v1411
    %v1413 = vtanh.pop %v1412
    %v1414 = vsub.f32 %v1176, %v1413
    %v1415 = vmul.f32 %v1410, %v1414
    %v1416 = vadd.f32 %v1413, %v1415
    %v1417 = vsel %vm1179, 1, 0
    %1418 = vset.pattern.permute.xlu0 0
    %1419 = vperm.xlu0 %1418, %v1417
    %v1420 = vpop.permute.xlu0 %1419
    %vm1421 = vcmp.eq.s32.totalorder %v1420, 1
    %v1422 = vsel %vm1421, %v1416, %v1176
    %v1423 = vsel %vm1421, %v1416, 0.0
    %1424 = vmatpush.msra.mxu0 %v317
    %1425 = vmatpush.msra.mxu0 %v316
    %1426 = vmatpush.msra.mxu0 %v315
    %1427 = vmatpush.msra.mxu0 %v314
    %1428 = vmatpush.msra.mxu0 %v313
    %1429 = vmatpush.msra.mxu0 %v312
    %1430 = vmatpush.msra.mxu0 %v311
    %1431 = vmatpush.msra.mxu0 %v310
    %1432 = vmatpush.msra.mxu0 %v309
    %1433 = vmatpush.msra.mxu0 %v308
    %1434 = vmatpush.msra.mxu0 %v307
    %1435 = vmatpush.msra.mxu0 %v306
    %1436 = vmatpush.msra.mxu0 %v305
    %1437 = vmatpush.msra.mxu0 %v304
    %1438 = vmatpush.msra.mxu0 %v303
    %1439 = vmatpush.msra.mxu0 %v302
    %1440 = vmatmul.f32.gmra.mxu0 %v1309
    %v1441 = vpop.f32.mrf.mxu0
    %v1442 = vadd.f32 0.0, %v1441
    %1443 = vdwg.mxu0
    %1444 = vmatpush.msra.mxu0 %v334
    %1445 = vmatpush.msra.mxu0 %v333
    %1446 = vmatpush.msra.mxu0 %v332
    %1447 = vmatpush.msra.mxu0 %v331
    %1448 = vmatpush.msra.mxu0 %v330
    %1449 = vmatpush.msra.mxu0 %v329
    %1450 = vmatpush.msra.mxu0 %v328
    %1451 = vmatpush.msra.mxu0 %v327
    %1452 = vmatpush.msra.mxu0 %v326
    %1453 = vmatpush.msra.mxu0 %v325
    %1454 = vmatpush.msra.mxu0 %v324
    %1455 = vmatpush.msra.mxu0 %v323
    %1456 = vmatpush.msra.mxu0 %v322
    %1457 = vmatpush.msra.mxu0 %v321
    %1458 = vmatpush.msra.mxu0 %v320
    %1459 = vmatpush.msra.mxu0 %v319
    %1460 = vmatmul.f32.gmra.mxu0 %v1309
    %v1461 = vpop.f32.mrf.mxu0
    %v1462 = vadd.f32 0.0, %v1461
    %1463 = vdwg.mxu0
    %1464 = vmatpush.msra.mxu0 %v351
    %1465 = vmatpush.msra.mxu0 %v350
    %1466 = vmatpush.msra.mxu0 %v349
    %1467 = vmatpush.msra.mxu0 %v348
    %1468 = vmatpush.msra.mxu0 %v347
    %1469 = vmatpush.msra.mxu0 %v346
    %1470 = vmatpush.msra.mxu0 %v345
    %1471 = vmatpush.msra.mxu0 %v344
    %1472 = vmatpush.msra.mxu0 %v343
    %1473 = vmatpush.msra.mxu0 %v342
    %1474 = vmatpush.msra.mxu0 %v341
    %1475 = vmatpush.msra.mxu0 %v340
    %1476 = vmatpush.msra.mxu0 %v339
    %1477 = vmatpush.msra.mxu0 %v338
    %1478 = vmatpush.msra.mxu0 %v337
    %1479 = vmatpush.msra.mxu0 %v336
    %1480 = vmatmul.f32.gmra.mxu0 %v1309
    %v1481 = vpop.f32.mrf.mxu0
    %v1482 = vadd.f32 %v449, %v1481
    %1483 = vdwg.mxu0
    %v1484 = vadd.f32 %v77, %v1442
    %v1485 = vxor.u32 %v1484, 2147483648
    %v1486 = vmul.f32 %v1485, 1.442695
    %v1487 = vpow.pop %v1486
    %v1488 = vadd.f32 %v1487, 1.0
    %v1489 = vrcp.pop %v1488
    %v1490 = vmul.f32 %v1488, %v1489
    %v1491 = vsub.f32 1.0, %v1490
    %v1492 = vmul.f32 %v1489, %v1491
    %v1493 = vadd.f32 %v1489, %v1492
    %vm1494 = vweird.f32 %v1488
    %vm1495 = vweird.f32 %v1489
    %vm1496 = vmor %vm1494, %vm1495
    %v1497 = vsel %vm1496, %v1489, %v1493
    %v1498 = vand.u32 2147483647, %v1488
    %vm1499 = vcmp.eq.f32.partialorder %v1498, 8.507059e+37
    %v1500 = vand.u32 %v1488, 2147483648
    %v1501 = vor.u32 1.1754944e-38, %v1500
    %v1502 = vsel %vm1499, %v1501, %v1497
    %v1503 = vmul.f32 1.0, %v1502
    %v1504 = vadd.f32 %v122, %v1462
    %v1505 = vxor.u32 %v1504, 2147483648
    %v1506 = vmul.f32 %v1505, 1.442695
    %v1507 = vpow.pop %v1506
    %v1508 = vadd.f32 %v1507, 1.0
    %v1509 = vrcp.pop %v1508
    %v1510 = vmul.f32 %v1508, %v1509
    %v1511 = vsub.f32 1.0, %v1510
    %v1512 = vmul.f32 %v1509, %v1511
    %v1513 = vadd.f32 %v1509, %v1512
    %vm1514 = vweird.f32 %v1508
    %vm1515 = vweird.f32 %v1509
    %vm1516 = vmor %vm1514, %vm1515
    %v1517 = vsel %vm1516, %v1509, %v1513
    %v1518 = vand.u32 2147483647, %v1508
    %vm1519 = vcmp.eq.f32.partialorder %v1518, 8.507059e+37
    %v1520 = vand.u32 %v1508, 2147483648
    %v1521 = vor.u32 1.1754944e-38, %v1520
    %v1522 = vsel %vm1519, %v1521, %v1517
    %v1523 = vmul.f32 1.0, %v1522
    %v1524 = vmul.f32 %v1503, %v1482
    %v1525 = vadd.f32 %v167, %v1524
    %v1526 = vtanh.pop %v1525
    %v1527 = vsub.f32 %v1309, %v1526
    %v1528 = vmul.f32 %v1523, %v1527
    %v1529 = vadd.f32 %v1526, %v1528
    %v1530 = vsel %vm1421, %v1529, %v1309
    %v1531 = vsel %vm1421, %v1529, 0.0
    %1532 = vmatpush.msra.mxu0 %v369
    %1533 = vmatpush.msra.mxu0 %v368
    %1534 = vmatpush.msra.mxu0 %v367
    %1535 = vmatpush.msra.mxu0 %v366
    %1536 = vmatpush.msra.mxu0 %v365
    %1537 = vmatpush.msra.mxu0 %v364
    %1538 = vmatpush.msra.mxu0 %v363
    %1539 = vmatpush.msra.mxu0 %v362
    %1540 = vmatpush.msra.mxu0 %v361
    %1541 = vmatpush.msra.mxu0 %v360
    %1542 = vmatpush.msra.mxu0 %v359
    %1543 = vmatpush.msra.mxu0 %v358
    %1544 = vmatpush.msra.mxu0 %v357
    %1545 = vmatpush.msra.mxu0 %v356
    %1546 = vmatpush.msra.mxu0 %v355
    %1547 = vmatpush.msra.mxu0 %v354
    %1548 = vmatmul.f32.gmra.mxu0 %v1422
    %v1549 = vpop.f32.mrf.mxu0
    %v1550 = vadd.f32 0.0, %v1549
    %1551 = vdwg.mxu0
    %1552 = vmatpush.msra.mxu0 %v386
    %1553 = vmatpush.msra.mxu0 %v385
    %1554 = vmatpush.msra.mxu0 %v384
    %1555 = vmatpush.msra.mxu0 %v383
    %1556 = vmatpush.msra.mxu0 %v382
    %1557 = vmatpush.msra.mxu0 %v381
    %1558 = vmatpush.msra.mxu0 %v380
    %1559 = vmatpush.msra.mxu0 %v379
    %1560 = vmatpush.msra.mxu0 %v378
    %1561 = vmatpush.msra.mxu0 %v377
    %1562 = vmatpush.msra.mxu0 %v376
    %1563 = vmatpush.msra.mxu0 %v375
    %1564 = vmatpush.msra.mxu0 %v374
    %1565 = vmatpush.msra.mxu0 %v373
    %1566 = vmatpush.msra.mxu0 %v372
    %1567 = vmatpush.msra.mxu0 %v371
    %1568 = vmatmul.f32.gmra.mxu0 %v1422
    %v1569 = vpop.f32.mrf.mxu0
    %v1570 = vadd.f32 0.0, %v1569
    %1571 = vdwg.mxu0
    %1572 = vmatpush.msra.mxu0 %v403
    %1573 = vmatpush.msra.mxu0 %v402
    %1574 = vmatpush.msra.mxu0 %v401
    %1575 = vmatpush.msra.mxu0 %v400
    %1576 = vmatpush.msra.mxu0 %v399
    %1577 = vmatpush.msra.mxu0 %v398
    %1578 = vmatpush.msra.mxu0 %v397
    %1579 = vmatpush.msra.mxu0 %v396
    %1580 = vmatpush.msra.mxu0 %v395
    %1581 = vmatpush.msra.mxu0 %v394
    %1582 = vmatpush.msra.mxu0 %v393
    %1583 = vmatpush.msra.mxu0 %v392
    %1584 = vmatpush.msra.mxu0 %v391
    %1585 = vmatpush.msra.mxu0 %v390
    %1586 = vmatpush.msra.mxu0 %v389
    %1587 = vmatpush.msra.mxu0 %v388
    %1588 = vmatmul.f32.gmra.mxu0 %v1422
    %v1589 = vpop.f32.mrf.mxu0
    %v1590 = vadd.f32 %v564, %v1589
    %1591 = vdwg.mxu0
    %v1593 = vrot.slane %v1550, 2
    %v1595 = vadd.f32 %v207, %v1593
    %v1596 = vxor.u32 %v1595, 2147483648
    %v1597 = vmul.f32 %v1596, 1.442695
    %v1598 = vpow.pop %v1597
    %v1599 = vadd.f32 %v1598, 1.0
    %v1600 = vrcp.pop %v1599
    %v1601 = vmul.f32 %v1599, %v1600
    %v1602 = vsub.f32 1.0, %v1601
    %v1603 = vmul.f32 %v1600, %v1602
    %v1604 = vadd.f32 %v1600, %v1603
    %vm1605 = vweird.f32 %v1599
    %vm1606 = vweird.f32 %v1600
    %vm1607 = vmor %vm1605, %vm1606
    %v1608 = vsel %vm1607, %v1600, %v1604
    %v1609 = vand.u32 2147483647, %v1599
    %vm1610 = vcmp.eq.f32.partialorder %v1609, 8.507059e+37
    %v1611 = vand.u32 %v1599, 2147483648
    %v1612 = vor.u32 1.1754944e-38, %v1611
    %v1613 = vsel %vm1610, %v1612, %v1608
    %v1614 = vmul.f32 1.0, %v1613
    %v1616 = vrot.slane %v1570, 2
    %v1618 = vadd.f32 %v252, %v1616
    %v1619 = vxor.u32 %v1618, 2147483648
    %v1620 = vmul.f32 %v1619, 1.442695
    %v1621 = vpow.pop %v1620
    %v1622 = vadd.f32 %v1621, 1.0
    %v1623 = vrcp.pop %v1622
    %v1624 = vmul.f32 %v1622, %v1623
    %v1625 = vsub.f32 1.0, %v1624
    %v1626 = vmul.f32 %v1623, %v1625
    %v1627 = vadd.f32 %v1623, %v1626
    %vm1628 = vweird.f32 %v1622
    %vm1629 = vweird.f32 %v1623
    %vm1630 = vmor %vm1628, %vm1629
    %v1631 = vsel %vm1630, %v1623, %v1627
    %v1632 = vand.u32 2147483647, %v1622
    %vm1633 = vcmp.eq.f32.partialorder %v1632, 8.507059e+37
    %v1634 = vand.u32 %v1622, 2147483648
    %v1635 = vor.u32 1.1754944e-38, %v1634
    %v1636 = vsel %vm1633, %v1635, %v1631
    %v1637 = vmul.f32 1.0, %v1636
    %v1639 = vrot.slane %v1590, 2
    %v1641 = vmul.f32 %v1614, %v1639
    %v1642 = vadd.f32 %v297, %v1641
    %v1643 = vtanh.pop %v1642
    %v1645 = vrot.slane %v1643, 6
    %v1647 = vsub.f32 %v1422, %v1645
    %v1649 = vrot.slane %v1647, 2
    %v1651 = vmul.f32 %v1637, %v1649
    %v1652 = vadd.f32 %v1643, %v1651
    %v1654 = vrot.slane %v1652, 6
    %v1656 = vsel %vm1305, %v1654, %v1422
    %v1657 = vsel %vm1305, %v1654, 0.0
    %1658 = vmatpush.msra.mxu0 %v317
    %1659 = vmatpush.msra.mxu0 %v316
    %1660 = vmatpush.msra.mxu0 %v315
    %1661 = vmatpush.msra.mxu0 %v314
    %1662 = vmatpush.msra.mxu0 %v313
    %1663 = vmatpush.msra.mxu0 %v312
    %1664 = vmatpush.msra.mxu0 %v311
    %1665 = vmatpush.msra.mxu0 %v310
    %1666 = vmatpush.msra.mxu0 %v309
    %1667 = vmatpush.msra.mxu0 %v308
    %1668 = vmatpush.msra.mxu0 %v307
    %1669 = vmatpush.msra.mxu0 %v306
    %1670 = vmatpush.msra.mxu0 %v305
    %1671 = vmatpush.msra.mxu0 %v304
    %1672 = vmatpush.msra.mxu0 %v303
    %1673 = vmatpush.msra.mxu0 %v302
    %1674 = vmatmul.f32.gmra.mxu0 %v1530
    %v1675 = vpop.f32.mrf.mxu0
    %v1676 = vadd.f32 0.0, %v1675
    %1677 = vdwg.mxu0
    %1678 = vmatpush.msra.mxu0 %v334
    %1679 = vmatpush.msra.mxu0 %v333
    %1680 = vmatpush.msra.mxu0 %v332
    %1681 = vmatpush.msra.mxu0 %v331
    %1682 = vmatpush.msra.mxu0 %v330
    %1683 = vmatpush.msra.mxu0 %v329
    %1684 = vmatpush.msra.mxu0 %v328
    %1685 = vmatpush.msra.mxu0 %v327
    %1686 = vmatpush.msra.mxu0 %v326
    %1687 = vmatpush.msra.mxu0 %v325
    %1688 = vmatpush.msra.mxu0 %v324
    %1689 = vmatpush.msra.mxu0 %v323
    %1690 = vmatpush.msra.mxu0 %v322
    %1691 = vmatpush.msra.mxu0 %v321
    %1692 = vmatpush.msra.mxu0 %v320
    %1693 = vmatpush.msra.mxu0 %v319
    %1694 = vmatmul.f32.gmra.mxu0 %v1530
    %v1695 = vpop.f32.mrf.mxu0
    %v1696 = vadd.f32 0.0, %v1695
    %1697 = vdwg.mxu0
    %1698 = vmatpush.msra.mxu0 %v351
    %1699 = vmatpush.msra.mxu0 %v350
    %1700 = vmatpush.msra.mxu0 %v349
    %1701 = vmatpush.msra.mxu0 %v348
    %1702 = vmatpush.msra.mxu0 %v347
    %1703 = vmatpush.msra.mxu0 %v346
    %1704 = vmatpush.msra.mxu0 %v345
    %1705 = vmatpush.msra.mxu0 %v344
    %1706 = vmatpush.msra.mxu0 %v343
    %1707 = vmatpush.msra.mxu0 %v342
    %1708 = vmatpush.msra.mxu0 %v341
    %1709 = vmatpush.msra.mxu0 %v340
    %1710 = vmatpush.msra.mxu0 %v339
    %1711 = vmatpush.msra.mxu0 %v338
    %1712 = vmatpush.msra.mxu0 %v337
    %1713 = vmatpush.msra.mxu0 %v336
    %1714 = vmatmul.f32.gmra.mxu0 %v1530
    %v1715 = vpop.f32.mrf.mxu0
    %v1716 = vadd.f32 %v449, %v1715
    %1717 = vdwg.mxu0
    %v1719 = vrot.slane %v1676, 6
    %v1721 = vadd.f32 %v77, %v1719
    %v1722 = vxor.u32 %v1721, 2147483648
    %v1723 = vmul.f32 %v1722, 1.442695
    %v1724 = vpow.pop %v1723
    %v1725 = vadd.f32 %v1724, 1.0
    %v1726 = vrcp.pop %v1725
    %v1727 = vmul.f32 %v1725, %v1726
    %v1728 = vsub.f32 1.0, %v1727
    %v1729 = vmul.f32 %v1726, %v1728
    %v1730 = vadd.f32 %v1726, %v1729
    %vm1731 = vweird.f32 %v1725
    %vm1732 = vweird.f32 %v1726
    %vm1733 = vmor %vm1731, %vm1732
    %v1734 = vsel %vm1733, %v1726, %v1730
    %v1735 = vand.u32 2147483647, %v1725
    %vm1736 = vcmp.eq.f32.partialorder %v1735, 8.507059e+37
    %v1737 = vand.u32 %v1725, 2147483648
    %v1738 = vor.u32 1.1754944e-38, %v1737
    %v1739 = vsel %vm1736, %v1738, %v1734
    %v1740 = vmul.f32 1.0, %v1739
    %v1742 = vrot.slane %v1696, 6
    %v1744 = vadd.f32 %v122, %v1742
    %v1745 = vxor.u32 %v1744, 2147483648
    %v1746 = vmul.f32 %v1745, 1.442695
    %v1747 = vpow.pop %v1746
    %v1748 = vadd.f32 %v1747, 1.0
    %v1749 = vrcp.pop %v1748
    %v1750 = vmul.f32 %v1748, %v1749
    %v1751 = vsub.f32 1.0, %v1750
    %v1752 = vmul.f32 %v1749, %v1751
    %v1753 = vadd.f32 %v1749, %v1752
    %vm1754 = vweird.f32 %v1748
    %vm1755 = vweird.f32 %v1749
    %vm1756 = vmor %vm1754, %vm1755
    %v1757 = vsel %vm1756, %v1749, %v1753
    %v1758 = vand.u32 2147483647, %v1748
    %vm1759 = vcmp.eq.f32.partialorder %v1758, 8.507059e+37
    %v1760 = vand.u32 %v1748, 2147483648
    %v1761 = vor.u32 1.1754944e-38, %v1760
    %v1762 = vsel %vm1759, %v1761, %v1757
    %v1763 = vmul.f32 1.0, %v1762
    %v1765 = vrot.slane %v1716, 6
    %v1767 = vmul.f32 %v1740, %v1765
    %v1768 = vadd.f32 %v167, %v1767
    %v1769 = vtanh.pop %v1768
    %v1771 = vrot.slane %v1769, 2
    %v1773 = vsub.f32 %v1530, %v1771
    %v1775 = vrot.slane %v1773, 6
    %v1777 = vmul.f32 %v1763, %v1775
    %v1778 = vadd.f32 %v1769, %v1777
    %v1780 = vrot.slane %v1778, 2
    %v1782 = vsel %vm1172, %v1780, %v1530
    %v1783 = vsel %vm1172, %v1780, 0.0
    %1784 = vmatpush.msra.mxu0 %v369
    %1785 = vmatpush.msra.mxu0 %v368
    %1786 = vmatpush.msra.mxu0 %v367
    %1787 = vmatpush.msra.mxu0 %v366
    %1788 = vmatpush.msra.mxu0 %v365
    %1789 = vmatpush.msra.mxu0 %v364
    %1790 = vmatpush.msra.mxu0 %v363
    %1791 = vmatpush.msra.mxu0 %v362
    %1792 = vmatpush.msra.mxu0 %v361
    %1793 = vmatpush.msra.mxu0 %v360
    %1794 = vmatpush.msra.mxu0 %v359
    %1795 = vmatpush.msra.mxu0 %v358
    %1796 = vmatpush.msra.mxu0 %v357
    %1797 = vmatpush.msra.mxu0 %v356
    %1798 = vmatpush.msra.mxu0 %v355
    %1799 = vmatpush.msra.mxu0 %v354
    %1800 = vmatmul.f32.gmra.mxu0 %v1656
    %v1801 = vpop.f32.mrf.mxu0
    %v1802 = vadd.f32 0.0, %v1801
    %1803 = vdwg.mxu0
    %1804 = vmatpush.msra.mxu0 %v386
    %1805 = vmatpush.msra.mxu0 %v385
    %1806 = vmatpush.msra.mxu0 %v384
    %1807 = vmatpush.msra.mxu0 %v383
    %1808 = vmatpush.msra.mxu0 %v382
    %1809 = vmatpush.msra.mxu0 %v381
    %1810 = vmatpush.msra.mxu0 %v380
    %1811 = vmatpush.msra.mxu0 %v379
    %1812 = vmatpush.msra.mxu0 %v378
    %1813 = vmatpush.msra.mxu0 %v377
    %1814 = vmatpush.msra.mxu0 %v376
    %1815 = vmatpush.msra.mxu0 %v375
    %1816 = vmatpush.msra.mxu0 %v374
    %1817 = vmatpush.msra.mxu0 %v373
    %1818 = vmatpush.msra.mxu0 %v372
    %1819 = vmatpush.msra.mxu0 %v371
    %1820 = vmatmul.f32.gmra.mxu0 %v1656
    %v1821 = vpop.f32.mrf.mxu0
    %v1822 = vadd.f32 0.0, %v1821
    %1823 = vdwg.mxu0
    %1824 = vmatpush.msra.mxu0 %v403
    %1825 = vmatpush.msra.mxu0 %v402
    %1826 = vmatpush.msra.mxu0 %v401
    %1827 = vmatpush.msra.mxu0 %v400
    %1828 = vmatpush.msra.mxu0 %v399
    %1829 = vmatpush.msra.mxu0 %v398
    %1830 = vmatpush.msra.mxu0 %v397
    %1831 = vmatpush.msra.mxu0 %v396
    %1832 = vmatpush.msra.mxu0 %v395
    %1833 = vmatpush.msra.mxu0 %v394
    %1834 = vmatpush.msra.mxu0 %v393
    %1835 = vmatpush.msra.mxu0 %v392
    %1836 = vmatpush.msra.mxu0 %v391
    %1837 = vmatpush.msra.mxu0 %v390
    %1838 = vmatpush.msra.mxu0 %v389
    %1839 = vmatpush.msra.mxu0 %v388
    %1840 = vmatmul.f32.gmra.mxu0 %v1656
    %v1841 = vpop.f32.mrf.mxu0
    %v1842 = vadd.f32 %v564, %v1841
    %1843 = vdwg.mxu0
    %v1845 = vrot.slane %v1802, 4
    %v1847 = vadd.f32 %v207, %v1845
    %v1848 = vxor.u32 %v1847, 2147483648
    %v1849 = vmul.f32 %v1848, 1.442695
    %v1850 = vpow.pop %v1849
    %v1851 = vadd.f32 %v1850, 1.0
    %v1852 = vrcp.pop %v1851
    %v1853 = vmul.f32 %v1851, %v1852
    %v1854 = vsub.f32 1.0, %v1853
    %v1855 = vmul.f32 %v1852, %v1854
    %v1856 = vadd.f32 %v1852, %v1855
    %vm1857 = vweird.f32 %v1851
    %vm1858 = vweird.f32 %v1852
    %vm1859 = vmor %vm1857, %vm1858
    %v1860 = vsel %vm1859, %v1852, %v1856
    %v1861 = vand.u32 2147483647, %v1851
    %vm1862 = vcmp.eq.f32.partialorder %v1861, 8.507059e+37
    %v1863 = vand.u32 %v1851, 2147483648
    %v1864 = vor.u32 1.1754944e-38, %v1863
    %v1865 = vsel %vm1862, %v1864, %v1860
    %v1866 = vmul.f32 1.0, %v1865
    %v1868 = vrot.slane %v1822, 4
    %v1870 = vadd.f32 %v252, %v1868
    %v1871 = vxor.u32 %v1870, 2147483648
    %v1872 = vmul.f32 %v1871, 1.442695
    %v1873 = vpow.pop %v1872
    %v1874 = vadd.f32 %v1873, 1.0
    %v1875 = vrcp.pop %v1874
    %v1876 = vmul.f32 %v1874, %v1875
    %v1877 = vsub.f32 1.0, %v1876
    %v1878 = vmul.f32 %v1875, %v1877
    %v1879 = vadd.f32 %v1875, %v1878
    %vm1880 = vweird.f32 %v1874
    %vm1881 = vweird.f32 %v1875
    %vm1882 = vmor %vm1880, %vm1881
    %v1883 = vsel %vm1882, %v1875, %v1879
    %v1884 = vand.u32 2147483647, %v1874
    %vm1885 = vcmp.eq.f32.partialorder %v1884, 8.507059e+37
    %v1886 = vand.u32 %v1874, 2147483648
    %v1887 = vor.u32 1.1754944e-38, %v1886
    %v1888 = vsel %vm1885, %v1887, %v1883
    %v1889 = vmul.f32 1.0, %v1888
    %v1891 = vrot.slane %v1842, 4
    %v1893 = vmul.f32 %v1866, %v1891
    %v1894 = vadd.f32 %v297, %v1893
    %v1895 = vtanh.pop %v1894
    %v1897 = vrot.slane %v1895, 4
    %v1899 = vsub.f32 %v1656, %v1897
    %v1901 = vrot.slane %v1899, 4
    %v1903 = vmul.f32 %v1889, %v1901
    %v1904 = vadd.f32 %v1895, %v1903
    %v1906 = vrot.slane %v1904, 4
    %v1908 = vsel %vm1041, %v1906, %v1656
    %v1909 = vsel %vm1041, %v1906, 0.0
    %1910 = vmatpush.msra.mxu0 %v317
    %1911 = vmatpush.msra.mxu0 %v316
    %1912 = vmatpush.msra.mxu0 %v315
    %1913 = vmatpush.msra.mxu0 %v314
    %1914 = vmatpush.msra.mxu0 %v313
    %1915 = vmatpush.msra.mxu0 %v312
    %1916 = vmatpush.msra.mxu0 %v311
    %1917 = vmatpush.msra.mxu0 %v310
    %1918 = vmatpush.msra.mxu0 %v309
    %1919 = vmatpush.msra.mxu0 %v308
    %1920 = vmatpush.msra.mxu0 %v307
    %1921 = vmatpush.msra.mxu0 %v306
    %1922 = vmatpush.msra.mxu0 %v305
    %1923 = vmatpush.msra.mxu0 %v304
    %1924 = vmatpush.msra.mxu0 %v303
    %1925 = vmatpush.msra.mxu0 %v302
    %1926 = vmatmul.f32.gmra.mxu0 %v1782
    %v1927 = vpop.f32.mrf.mxu0
    %v1928 = vadd.f32 0.0, %v1927
    %1929 = vdwg.mxu0
    %1930 = vmatpush.msra.mxu0 %v334
    %1931 = vmatpush.msra.mxu0 %v333
    %1932 = vmatpush.msra.mxu0 %v332
    %1933 = vmatpush.msra.mxu0 %v331
    %1934 = vmatpush.msra.mxu0 %v330
    %1935 = vmatpush.msra.mxu0 %v329
    %1936 = vmatpush.msra.mxu0 %v328
    %1937 = vmatpush.msra.mxu0 %v327
    %1938 = vmatpush.msra.mxu0 %v326
    %1939 = vmatpush.msra.mxu0 %v325
    %1940 = vmatpush.msra.mxu0 %v324
    %1941 = vmatpush.msra.mxu0 %v323
    %1942 = vmatpush.msra.mxu0 %v322
    %1943 = vmatpush.msra.mxu0 %v321
    %1944 = vmatpush.msra.mxu0 %v320
    %1945 = vmatpush.msra.mxu0 %v319
    %1946 = vmatmul.f32.gmra.mxu0 %v1782
    %v1947 = vpop.f32.mrf.mxu0
    %v1948 = vadd.f32 0.0, %v1947
    %1949 = vdwg.mxu0
    %1950 = vmatpush.msra.mxu0 %v351
    %1951 = vmatpush.msra.mxu0 %v350
    %1952 = vmatpush.msra.mxu0 %v349
    %1953 = vmatpush.msra.mxu0 %v348
    %1954 = vmatpush.msra.mxu0 %v347
    %1955 = vmatpush.msra.mxu0 %v346
    %1956 = vmatpush.msra.mxu0 %v345
    %1957 = vmatpush.msra.mxu0 %v344
    %1958 = vmatpush.msra.mxu0 %v343
    %1959 = vmatpush.msra.mxu0 %v342
    %1960 = vmatpush.msra.mxu0 %v341
    %1961 = vmatpush.msra.mxu0 %v340
    %1962 = vmatpush.msra.mxu0 %v339
    %1963 = vmatpush.msra.mxu0 %v338
    %1964 = vmatpush.msra.mxu0 %v337
    %1965 = vmatpush.msra.mxu0 %v336
    %1966 = vmatmul.f32.gmra.mxu0 %v1782
    %v1967 = vpop.f32.mrf.mxu0
    %v1968 = vadd.f32 %v449, %v1967
    %1969 = vdwg.mxu0
    %v1971 = vrot.slane %v1928, 4
    %v1973 = vadd.f32 %v77, %v1971
    %v1974 = vxor.u32 %v1973, 2147483648
    %v1975 = vmul.f32 %v1974, 1.442695
    %v1976 = vpow.pop %v1975
    %v1977 = vadd.f32 %v1976, 1.0
    %v1978 = vrcp.pop %v1977
    %v1979 = vmul.f32 %v1977, %v1978
    %v1980 = vsub.f32 1.0, %v1979
    %v1981 = vmul.f32 %v1978, %v1980
    %v1982 = vadd.f32 %v1978, %v1981
    %vm1983 = vweird.f32 %v1977
    %vm1984 = vweird.f32 %v1978
    %vm1985 = vmor %vm1983, %vm1984
    %v1986 = vsel %vm1985, %v1978, %v1982
    %v1987 = vand.u32 2147483647, %v1977
    %vm1988 = vcmp.eq.f32.partialorder %v1987, 8.507059e+37
    %v1989 = vand.u32 %v1977, 2147483648
    %v1990 = vor.u32 1.1754944e-38, %v1989
    %v1991 = vsel %vm1988, %v1990, %v1986
    %v1992 = vmul.f32 1.0, %v1991
    %v1994 = vrot.slane %v1948, 4
    %v1996 = vadd.f32 %v122, %v1994
    %v1997 = vxor.u32 %v1996, 2147483648
    %v1998 = vmul.f32 %v1997, 1.442695
    %v1999 = vpow.pop %v1998
    %v2000 = vadd.f32 %v1999, 1.0
    %v2001 = vrcp.pop %v2000
    %v2002 = vmul.f32 %v2000, %v2001
    %v2003 = vsub.f32 1.0, %v2002
    %v2004 = vmul.f32 %v2001, %v2003
    %v2005 = vadd.f32 %v2001, %v2004
    %vm2006 = vweird.f32 %v2000
    %vm2007 = vweird.f32 %v2001
    %vm2008 = vmor %vm2006, %vm2007
    %v2009 = vsel %vm2008, %v2001, %v2005
    %v2010 = vand.u32 2147483647, %v2000
    %vm2011 = vcmp.eq.f32.partialorder %v2010, 8.507059e+37
    %v2012 = vand.u32 %v2000, 2147483648
    %v2013 = vor.u32 1.1754944e-38, %v2012
    %v2014 = vsel %vm2011, %v2013, %v2009
    %v2015 = vmul.f32 1.0, %v2014
    %v2017 = vrot.slane %v1968, 4
    %v2019 = vmul.f32 %v1992, %v2017
    %v2020 = vadd.f32 %v167, %v2019
    %v2021 = vtanh.pop %v2020
    %v2023 = vrot.slane %v2021, 4
    %v2025 = vsub.f32 %v1782, %v2023
    %v2027 = vrot.slane %v2025, 4
    %v2029 = vmul.f32 %v2015, %v2027
    %v2030 = vadd.f32 %v2021, %v2029
    %v2032 = vrot.slane %v2030, 4
    %v2034 = vsel %vm908, %v2032, %v1782
    %v2035 = vsel %vm908, %v2032, 0.0
    %2036 = vmatpush.msra.mxu0 %v369
    %2037 = vmatpush.msra.mxu0 %v368
    %2038 = vmatpush.msra.mxu0 %v367
    %2039 = vmatpush.msra.mxu0 %v366
    %2040 = vmatpush.msra.mxu0 %v365
    %2041 = vmatpush.msra.mxu0 %v364
    %2042 = vmatpush.msra.mxu0 %v363
    %2043 = vmatpush.msra.mxu0 %v362
    %2044 = vmatpush.msra.mxu0 %v361
    %2045 = vmatpush.msra.mxu0 %v360
    %2046 = vmatpush.msra.mxu0 %v359
    %2047 = vmatpush.msra.mxu0 %v358
    %2048 = vmatpush.msra.mxu0 %v357
    %2049 = vmatpush.msra.mxu0 %v356
    %2050 = vmatpush.msra.mxu0 %v355
    %2051 = vmatpush.msra.mxu0 %v354
    %2052 = vmatmul.f32.gmra.mxu0 %v1908
    %v2053 = vpop.f32.mrf.mxu0
    %v2054 = vadd.f32 0.0, %v2053
    %2055 = vdwg.mxu0
    %2056 = vmatpush.msra.mxu0 %v386
    %2057 = vmatpush.msra.mxu0 %v385
    %2058 = vmatpush.msra.mxu0 %v384
    %2059 = vmatpush.msra.mxu0 %v383
    %2060 = vmatpush.msra.mxu0 %v382
    %2061 = vmatpush.msra.mxu0 %v381
    %2062 = vmatpush.msra.mxu0 %v380
    %2063 = vmatpush.msra.mxu0 %v379
    %2064 = vmatpush.msra.mxu0 %v378
    %2065 = vmatpush.msra.mxu0 %v377
    %2066 = vmatpush.msra.mxu0 %v376
    %2067 = vmatpush.msra.mxu0 %v375
    %2068 = vmatpush.msra.mxu0 %v374
    %2069 = vmatpush.msra.mxu0 %v373
    %2070 = vmatpush.msra.mxu0 %v372
    %2071 = vmatpush.msra.mxu0 %v371
    %2072 = vmatmul.f32.gmra.mxu0 %v1908
    %v2073 = vpop.f32.mrf.mxu0
    %v2074 = vadd.f32 0.0, %v2073
    %2075 = vdwg.mxu0
    %2076 = vmatpush.msra.mxu0 %v403
    %2077 = vmatpush.msra.mxu0 %v402
    %2078 = vmatpush.msra.mxu0 %v401
    %2079 = vmatpush.msra.mxu0 %v400
    %2080 = vmatpush.msra.mxu0 %v399
    %2081 = vmatpush.msra.mxu0 %v398
    %2082 = vmatpush.msra.mxu0 %v397
    %2083 = vmatpush.msra.mxu0 %v396
    %2084 = vmatpush.msra.mxu0 %v395
    %2085 = vmatpush.msra.mxu0 %v394
    %2086 = vmatpush.msra.mxu0 %v393
    %2087 = vmatpush.msra.mxu0 %v392
    %2088 = vmatpush.msra.mxu0 %v391
    %2089 = vmatpush.msra.mxu0 %v390
    %2090 = vmatpush.msra.mxu0 %v389
    %2091 = vmatpush.msra.mxu0 %v388
    %2092 = vmatmul.f32.gmra.mxu0 %v1908
    %v2093 = vpop.f32.mrf.mxu0
    %v2094 = vadd.f32 %v564, %v2093
    %2095 = vdwg.mxu0
    %v2097 = vrot.slane %v2054, 6
    %v2099 = vadd.f32 %v207, %v2097
    %v2100 = vxor.u32 %v2099, 2147483648
    %v2101 = vmul.f32 %v2100, 1.442695
    %v2102 = vpow.pop %v2101
    %v2103 = vadd.f32 %v2102, 1.0
    %v2104 = vrcp.pop %v2103
    %v2105 = vmul.f32 %v2103, %v2104
    %v2106 = vsub.f32 1.0, %v2105
    %v2107 = vmul.f32 %v2104, %v2106
    %v2108 = vadd.f32 %v2104, %v2107
    %vm2109 = vweird.f32 %v2103
    %vm2110 = vweird.f32 %v2104
    %vm2111 = vmor %vm2109, %vm2110
    %v2112 = vsel %vm2111, %v2104, %v2108
    %v2113 = vand.u32 2147483647, %v2103
    %vm2114 = vcmp.eq.f32.partialorder %v2113, 8.507059e+37
    %v2115 = vand.u32 %v2103, 2147483648
    %v2116 = vor.u32 1.1754944e-38, %v2115
    %v2117 = vsel %vm2114, %v2116, %v2112
    %v2118 = vmul.f32 1.0, %v2117
    %v2120 = vrot.slane %v2074, 6
    %v2122 = vadd.f32 %v252, %v2120
    %v2123 = vxor.u32 %v2122, 2147483648
    %v2124 = vmul.f32 %v2123, 1.442695
    %v2125 = vpow.pop %v2124
    %v2126 = vadd.f32 %v2125, 1.0
    %v2127 = vrcp.pop %v2126
    %v2128 = vmul.f32 %v2126, %v2127
    %v2129 = vsub.f32 1.0, %v2128
    %v2130 = vmul.f32 %v2127, %v2129
    %v2131 = vadd.f32 %v2127, %v2130
    %vm2132 = vweird.f32 %v2126
    %vm2133 = vweird.f32 %v2127
    %vm2134 = vmor %vm2132, %vm2133
    %v2135 = vsel %vm2134, %v2127, %v2131
    %v2136 = vand.u32 2147483647, %v2126
    %vm2137 = vcmp.eq.f32.partialorder %v2136, 8.507059e+37
    %v2138 = vand.u32 %v2126, 2147483648
    %v2139 = vor.u32 1.1754944e-38, %v2138
    %v2140 = vsel %vm2137, %v2139, %v2135
    %v2141 = vmul.f32 1.0, %v2140
    %v2143 = vrot.slane %v2094, 6
    %v2145 = vmul.f32 %v2118, %v2143
    %v2146 = vadd.f32 %v297, %v2145
    %v2147 = vtanh.pop %v2146
    %v2149 = vrot.slane %v2147, 2
    %v2151 = vsub.f32 %v1908, %v2149
    %v2153 = vrot.slane %v2151, 6
    %v2155 = vmul.f32 %v2141, %v2153
    %v2156 = vadd.f32 %v2147, %v2155
    %v2158 = vrot.slane %v2156, 2
    %v2160 = vsel %vm777, %v2158, %v1908
    %v2161 = vsel %vm777, %v2158, 0.0
    %2162 = vmatpush.msra.mxu0 %v317
    %2163 = vmatpush.msra.mxu0 %v316
    %2164 = vmatpush.msra.mxu0 %v315
    %2165 = vmatpush.msra.mxu0 %v314
    %2166 = vmatpush.msra.mxu0 %v313
    %2167 = vmatpush.msra.mxu0 %v312
    %2168 = vmatpush.msra.mxu0 %v311
    %2169 = vmatpush.msra.mxu0 %v310
    %2170 = vmatpush.msra.mxu0 %v309
    %2171 = vmatpush.msra.mxu0 %v308
    %2172 = vmatpush.msra.mxu0 %v307
    %2173 = vmatpush.msra.mxu0 %v306
    %2174 = vmatpush.msra.mxu0 %v305
    %2175 = vmatpush.msra.mxu0 %v304
    %2176 = vmatpush.msra.mxu0 %v303
    %2177 = vmatpush.msra.mxu0 %v302
    %2178 = vmatmul.f32.gmra.mxu0 %v2034
    %v2179 = vpop.f32.mrf.mxu0
    %v2180 = vadd.f32 0.0, %v2179
    %2181 = vdwg.mxu0
    %2182 = vmatpush.msra.mxu0 %v334
    %2183 = vmatpush.msra.mxu0 %v333
    %2184 = vmatpush.msra.mxu0 %v332
    %2185 = vmatpush.msra.mxu0 %v331
    %2186 = vmatpush.msra.mxu0 %v330
    %2187 = vmatpush.msra.mxu0 %v329
    %2188 = vmatpush.msra.mxu0 %v328
    %2189 = vmatpush.msra.mxu0 %v327
    %2190 = vmatpush.msra.mxu0 %v326
    %2191 = vmatpush.msra.mxu0 %v325
    %2192 = vmatpush.msra.mxu0 %v324
    %2193 = vmatpush.msra.mxu0 %v323
    %2194 = vmatpush.msra.mxu0 %v322
    %2195 = vmatpush.msra.mxu0 %v321
    %2196 = vmatpush.msra.mxu0 %v320
    %2197 = vmatpush.msra.mxu0 %v319
    %2198 = vmatmul.f32.gmra.mxu0 %v2034
    %v2199 = vpop.f32.mrf.mxu0
    %v2200 = vadd.f32 0.0, %v2199
    %2201 = vdwg.mxu0
    %2202 = vmatpush.msra.mxu0 %v351
    %2203 = vmatpush.msra.mxu0 %v350
    %2204 = vmatpush.msra.mxu0 %v349
    %2205 = vmatpush.msra.mxu0 %v348
    %2206 = vmatpush.msra.mxu0 %v347
    %2207 = vmatpush.msra.mxu0 %v346
    %2208 = vmatpush.msra.mxu0 %v345
    %2209 = vmatpush.msra.mxu0 %v344
    %2210 = vmatpush.msra.mxu0 %v343
    %2211 = vmatpush.msra.mxu0 %v342
    %2212 = vmatpush.msra.mxu0 %v341
    %2213 = vmatpush.msra.mxu0 %v340
    %2214 = vmatpush.msra.mxu0 %v339
    %2215 = vmatpush.msra.mxu0 %v338
    %2216 = vmatpush.msra.mxu0 %v337
    %2217 = vmatpush.msra.mxu0 %v336
    %2218 = vmatmul.f32.gmra.mxu0 %v2034
    %v2219 = vpop.f32.mrf.mxu0
    %v2220 = vadd.f32 %v449, %v2219
    %2221 = vdwg.mxu0
    %v2223 = vrot.slane %v2180, 2
    %v2225 = vadd.f32 %v77, %v2223
    %v2226 = vxor.u32 %v2225, 2147483648
    %v2227 = vmul.f32 %v2226, 1.442695
    %v2228 = vpow.pop %v2227
    %v2229 = vadd.f32 %v2228, 1.0
    %v2230 = vrcp.pop %v2229
    %v2231 = vmul.f32 %v2229, %v2230
    %v2232 = vsub.f32 1.0, %v2231
    %v2233 = vmul.f32 %v2230, %v2232
    %v2234 = vadd.f32 %v2230, %v2233
    %vm2235 = vweird.f32 %v2229
    %vm2236 = vweird.f32 %v2230
    %vm2237 = vmor %vm2235, %vm2236
    %v2238 = vsel %vm2237, %v2230, %v2234
    %v2239 = vand.u32 2147483647, %v2229
    %vm2240 = vcmp.eq.f32.partialorder %v2239, 8.507059e+37
    %v2241 = vand.u32 %v2229, 2147483648
    %v2242 = vor.u32 1.1754944e-38, %v2241
    %v2243 = vsel %vm2240, %v2242, %v2238
    %v2244 = vmul.f32 1.0, %v2243
    %v2246 = vrot.slane %v2200, 2
    %v2248 = vadd.f32 %v122, %v2246
    %v2249 = vxor.u32 %v2248, 2147483648
    %v2250 = vmul.f32 %v2249, 1.442695
    %v2251 = vpow.pop %v2250
    %v2252 = vadd.f32 %v2251, 1.0
    %v2253 = vrcp.pop %v2252
    %v2254 = vmul.f32 %v2252, %v2253
    %v2255 = vsub.f32 1.0, %v2254
    %v2256 = vmul.f32 %v2253, %v2255
    %v2257 = vadd.f32 %v2253, %v2256
    %vm2258 = vweird.f32 %v2252
    %vm2259 = vweird.f32 %v2253
    %vm2260 = vmor %vm2258, %vm2259
    %v2261 = vsel %vm2260, %v2253, %v2257
    %v2262 = vand.u32 2147483647, %v2252
    %vm2263 = vcmp.eq.f32.partialorder %v2262, 8.507059e+37
    %v2264 = vand.u32 %v2252, 2147483648
    %v2265 = vor.u32 1.1754944e-38, %v2264
    %v2266 = vsel %vm2263, %v2265, %v2261
    %v2267 = vmul.f32 1.0, %v2266
    %v2269 = vrot.slane %v2220, 2
    %v2271 = vmul.f32 %v2244, %v2269
    %v2272 = vadd.f32 %v167, %v2271
    %v2273 = vtanh.pop %v2272
    %v2275 = vrot.slane %v2273, 6
    %v2277 = vsub.f32 %v2034, %v2275
    %v2279 = vrot.slane %v2277, 2
    %v2281 = vmul.f32 %v2267, %v2279
    %v2282 = vadd.f32 %v2273, %v2281
    %v2284 = vrot.slane %v2282, 6
    %v2286 = vsel %vm645, %v2284, %v2034
    %v2287 = vsel %vm645, %v2284, 0.0
    %2288 = vmatpush.msra.mxu0 %v369
    %2289 = vmatpush.msra.mxu0 %v368
    %2290 = vmatpush.msra.mxu0 %v367
    %2291 = vmatpush.msra.mxu0 %v366
    %2292 = vmatpush.msra.mxu0 %v365
    %2293 = vmatpush.msra.mxu0 %v364
    %2294 = vmatpush.msra.mxu0 %v363
    %2295 = vmatpush.msra.mxu0 %v362
    %2296 = vmatpush.msra.mxu0 %v361
    %2297 = vmatpush.msra.mxu0 %v360
    %2298 = vmatpush.msra.mxu0 %v359
    %2299 = vmatpush.msra.mxu0 %v358
    %2300 = vmatpush.msra.mxu0 %v357
    %2301 = vmatpush.msra.mxu0 %v356
    %2302 = vmatpush.msra.mxu0 %v355
    %2303 = vmatpush.msra.mxu0 %v354
    %2304 = vmatmul.f32.gmra.mxu0 %v2160
    %v2305 = vpop.f32.mrf.mxu0
    %v2306 = vadd.f32 0.0, %v2305
    %2307 = vdwg.mxu0
    %2308 = vmatpush.msra.mxu0 %v386
    %2309 = vmatpush.msra.mxu0 %v385
    %2310 = vmatpush.msra.mxu0 %v384
    %2311 = vmatpush.msra.mxu0 %v383
    %2312 = vmatpush.msra.mxu0 %v382
    %2313 = vmatpush.msra.mxu0 %v381
    %2314 = vmatpush.msra.mxu0 %v380
    %2315 = vmatpush.msra.mxu0 %v379
    %2316 = vmatpush.msra.mxu0 %v378
    %2317 = vmatpush.msra.mxu0 %v377
    %2318 = vmatpush.msra.mxu0 %v376
    %2319 = vmatpush.msra.mxu0 %v375
    %2320 = vmatpush.msra.mxu0 %v374
    %2321 = vmatpush.msra.mxu0 %v373
    %2322 = vmatpush.msra.mxu0 %v372
    %2323 = vmatpush.msra.mxu0 %v371
    %2324 = vmatmul.f32.gmra.mxu0 %v2160
    %v2325 = vpop.f32.mrf.mxu0
    %v2326 = vadd.f32 0.0, %v2325
    %2327 = vdwg.mxu0
    %2328 = vmatpush.msra.mxu0 %v403
    %2329 = vmatpush.msra.mxu0 %v402
    %2330 = vmatpush.msra.mxu0 %v401
    %2331 = vmatpush.msra.mxu0 %v400
    %2332 = vmatpush.msra.mxu0 %v399
    %2333 = vmatpush.msra.mxu0 %v398
    %2334 = vmatpush.msra.mxu0 %v397
    %2335 = vmatpush.msra.mxu0 %v396
    %2336 = vmatpush.msra.mxu0 %v395
    %2337 = vmatpush.msra.mxu0 %v394
    %2338 = vmatpush.msra.mxu0 %v393
    %2339 = vmatpush.msra.mxu0 %v392
    %2340 = vmatpush.msra.mxu0 %v391
    %2341 = vmatpush.msra.mxu0 %v390
    %2342 = vmatpush.msra.mxu0 %v389
    %2343 = vmatpush.msra.mxu0 %v388
    %2344 = vmatmul.f32.gmra.mxu0 %v2160
    %v2345 = vpop.f32.mrf.mxu0
    %v2346 = vadd.f32 %v564, %v2345
    %2347 = vdwg.mxu0
    %v2348 = vadd.f32 %v207, %v2306
    %v2349 = vxor.u32 %v2348, 2147483648
    %v2350 = vmul.f32 %v2349, 1.442695
    %v2351 = vpow.pop %v2350
    %v2352 = vadd.f32 %v2351, 1.0
    %v2353 = vrcp.pop %v2352
    %v2354 = vmul.f32 %v2352, %v2353
    %v2355 = vsub.f32 1.0, %v2354
    %v2356 = vmul.f32 %v2353, %v2355
    %v2357 = vadd.f32 %v2353, %v2356
    %vm2358 = vweird.f32 %v2352
    %vm2359 = vweird.f32 %v2353
    %vm2360 = vmor %vm2358, %vm2359
    %v2361 = vsel %vm2360, %v2353, %v2357
    %v2362 = vand.u32 2147483647, %v2352
    %vm2363 = vcmp.eq.f32.partialorder %v2362, 8.507059e+37
    %v2364 = vand.u32 %v2352, 2147483648
    %v2365 = vor.u32 1.1754944e-38, %v2364
    %v2366 = vsel %vm2363, %v2365, %v2361
    %v2367 = vmul.f32 1.0, %v2366
    %v2368 = vadd.f32 %v252, %v2326
    %v2369 = vxor.u32 %v2368, 2147483648
    %v2370 = vmul.f32 %v2369, 1.442695
    %v2371 = vpow.pop %v2370
    %v2372 = vadd.f32 %v2371, 1.0
    %v2373 = vrcp.pop %v2372
    %v2374 = vmul.f32 %v2372, %v2373
    %v2375 = vsub.f32 1.0, %v2374
    %v2376 = vmul.f32 %v2373, %v2375
    %v2377 = vadd.f32 %v2373, %v2376
    %vm2378 = vweird.f32 %v2372
    %vm2379 = vweird.f32 %v2373
    %vm2380 = vmor %vm2378, %vm2379
    %v2381 = vsel %vm2380, %v2373, %v2377
    %v2382 = vand.u32 2147483647, %v2372
    %vm2383 = vcmp.eq.f32.partialorder %v2382, 8.507059e+37
    %v2384 = vand.u32 %v2372, 2147483648
    %v2385 = vor.u32 1.1754944e-38, %v2384
    %v2386 = vsel %vm2383, %v2385, %v2381
    %v2387 = vmul.f32 1.0, %v2386
    %v2388 = vmul.f32 %v2367, %v2346
    %v2389 = vadd.f32 %v297, %v2388
    %v2390 = vtanh.pop %v2389
    %v2391 = vsub.f32 %v2160, %v2390
    %v2392 = vmul.f32 %v2387, %v2391
    %v2393 = vadd.f32 %v2390, %v2392
    %v2394 = vsel %vm521, %v2393, %v2160
    %v2395 = vsel %vm521, %v2393, 0.0
    %v2396 = vadd.f32 %v522, %v2395
    %2397 = vst [vmem:[#allocation2] sm:$0x3] %v2396
    %v2398 = vadd.f32 %v782, %v2161
    %s2399 = scalar_lea.vmem [#allocation2], 2
    %2400 = vst [vmem:[%s2399] sm:$0x3] %v2398
    %v2401 = vadd.f32 %v1046, %v1909
    %s2402 = scalar_lea.vmem [#allocation2], 4
    %2403 = vst [vmem:[%s2402] sm:$0x3] %v2401
    %v2404 = vadd.f32 %v1310, %v1657
    %s2405 = scalar_lea.vmem [#allocation2], 6
    %2406 = vst [vmem:[%s2405] sm:$0x3] %v2404
    %v2407 = vadd.f32 %v1531, %v1423
    %s2408 = scalar_lea.vmem [#allocation2], 8
    %2409 = vst [vmem:[%s2408] sm:$0x3] %v2407
    %v2410 = vadd.f32 %v1783, %v1177
    %s2411 = scalar_lea.vmem [#allocation2], 10
    %2412 = vst [vmem:[%s2411] sm:$0x3] %v2410
    %v2413 = vadd.f32 %v2035, %v913
    %s2414 = scalar_lea.vmem [#allocation2], 12
    %2415 = vst [vmem:[%s2414] sm:$0x3] %v2413
    %v2416 = vadd.f32 %v2287, %v649
    %s2417 = scalar_lea.vmem [#allocation2], 14
    %2418 = vst [vmem:[%s2417] sm:$0x3] %v2416
    %2419 = vst [vmem:[#allocation4] sm:$0x3] %v2286
    %s2420 = scalar_lea.vmem [#allocation4], 2
    %2421 = vst [vmem:[%s2420] sm:$0x3] %v2394
    // Predicated region
    $region34: #{encoder_rnn_forward.1} parent=1 // pred_check
      _
    $region35: #{encoder_rnn_forward.1} parent=1 // pred_check_branch
      %2423 = sbr.rel (0) target = $region37
    $region36: #{encoder_rnn_forward.1} parent=1 // pred_region
      %2425 = vsyncadd [#allocation3], 0
      %s2426 = sshll.u32 [#allocation2], 4
      %s2427 = int_to_ptr.vmem [resolvable:$true] %s2426
      %s2428 = sshll.u32 %s8, 4
      %s2429 = int_to_ptr.hbm [resolvable:$true] %s2428
      %2434 = dma.vmem_to_hbm [thread:$0]  %s2427, 256, %s2429, [#allocation3], 32, 32, 2
    $region37: #{encoder_rnn_forward.1} parent=1 // pred_fallthru
      _
    // Predicated region
    $region38: #{encoder_rnn_forward.1} parent=1 // pred_check
      _
    $region39: #{encoder_rnn_forward.1} parent=1 // pred_check_branch
      %2436 = sbr.rel (0) target = $region41
    $region40: #{encoder_rnn_forward.1} parent=1 // pred_region
      %2438 = vsyncadd [#allocation5], 0
      %s2439 = sshll.u32 [#allocation4], 4
      %s2440 = int_to_ptr.vmem [resolvable:$true] %s2439
      %s2441 = sshll.u32 %s9, 4
      %s2442 = int_to_ptr.hbm [resolvable:$true] %s2441
      %2447 = dma.vmem_to_hbm [thread:$0]  %s2440, 64, %s2442, [#allocation5], 32, 32, 2
    $region41: #{encoder_rnn_forward.1} parent=1 // pred_fallthru
      _
    // Predicated region
    $region42: #{encoder_rnn_forward.1} parent=1 // pred_check
      _
    $region43: #{encoder_rnn_forward.1} parent=1 // pred_check_branch
      %2449 = sbr.rel (0) target = $region45
    $region44: #{encoder_rnn_forward.1} parent=1 // pred_region
      %2451 = dma.done [#allocation3], 256
    $region45: #{encoder_rnn_forward.1} parent=1 // pred_fallthru
      _
    // Predicated region
    $region46: #{encoder_rnn_forward.1} parent=1 // pred_check
      _
    $region47: #{encoder_rnn_forward.1} parent=1 // pred_check_branch
      %2453 = sbr.rel (0) target = $region49
    $region48: #{encoder_rnn_forward.1} parent=1 // pred_region
      %2455 = dma.done [#allocation5], 64
    $region49: #{encoder_rnn_forward.1} parent=1 // pred_fallthru
      _
    %2456 = vsyncpa [#allocation3], 1
    %2457 = vsyncpa [#allocation5], 1

</llo_original>
